<compile_context>
chip_gen: v7x
topology: tpu7x:2x2x1
jax: 0.10.0
libtpu: 0.0.40
codegen_flags: <defaults>
</compile_context>

<pallas_src>
import math

import jax
import jax.numpy as jnp
from jax import lax
from jax.experimental import pallas as pl
from jax.experimental.pallas import tpu as pltpu

KS = (3, 5, 7, 9)            # per-branch conv kernel sizes (as in the PyTorch module)
KMAX = max(KS)               # 9
PMAX = (KMAX - 1) // 2       # 4


def make_psa_kernel(B, H, W, Cg, Ch):
    BH = B * H
    WC = W * Cg

    def kernel(x_ref, w1_ref, bgc_ref, bw_ref, bcv_ref, wfc1t_ref, wfc2_ref,
               o_ref, padh_ref):
        # ---- 1) grouped 1x1 conv: one lane-dense block-diagonal matmul (MXU) -------
        # x_ref: (B*H, W*Cg) bf16; w1_ref: (W*Cg, W*Cg) bf16 = kron(I_W, w_gc)
        y1 = jnp.dot(x_ref[...], w1_ref[...],
                     preferred_element_type=jnp.float32) + bgc_ref[...]   # (BH, WC) f32

        # ---- 2) kxk 'same' conv as KMAX banded (Toeplitz) matmuls -------------------
        # Zero only the H-halo rows (re-done every grid step: correct even when the
        # "parallel" group axis is sharded across cores), then place y1 in the middle.
        padh_ref[:, :PMAX, :] = jnp.zeros((B, PMAX, WC), jnp.float32)
        padh_ref[:, PMAX + H:, :] = jnp.zeros((B, PMAX, WC), jnp.float32)
        padh_ref[:, PMAX:PMAX + H, :] = y1.reshape(B, H, WC)

        # W padding / tap structure is folded into bw_ref[dy] (W*Cg x W*Cg), so each
        # tap is a lane-dense K=N=W*Cg matmul; accumulator is only 8 vregs.
        acc = jnp.zeros((BH, WC), jnp.float32)
        for dy in range(KMAX):                      # static unroll: 9 MXU matmuls
            lhs = padh_ref[:, dy:dy + H, :].reshape(BH, WC).astype(jnp.bfloat16)
            acc = acc + jnp.dot(lhs, bw_ref[dy], preferred_element_type=jnp.float32)
        conv = acc + bcv_ref[...]                   # (BH, WC) f32

        # ---- 3) SE block: global average pool + tiny FCs on the VPU ----------------
        sums_h = jnp.sum(conv.reshape(B, H, WC), axis=1)          # (B, W*Cg)
        s = jnp.zeros((B, Cg), jnp.float32)
        for w in range(W):                                        # fold lane w*Cg+c -> c
            s = s + sums_h[:, w * Cg:(w + 1) * Cg]
        s = s * (1.0 / (H * W))                                   # (B, Cg) pooled mean

        # FC1 (Cg -> Ch) + ReLU, FC2 (Ch -> Cg) + sigmoid; no degenerate MXU matmuls.
        h_cols = [jnp.sum(s * wfc1t_ref[j:j + 1, :], axis=1, keepdims=True)
                  for j in range(Ch)]
        hfc = jnp.maximum(jnp.concatenate(h_cols, axis=1), 0.0)   # (B, Ch)
        logits = jnp.zeros((B, Cg), jnp.float32)
        for j in range(Ch):
            logits = logits + hfc[:, j:j + 1] * wfc2_ref[j:j + 1, :]
        a = jax.nn.sigmoid(logits)                                # (B, Cg)

        # ---- 4) branch output: x_i * (conv * a), all in the lane-dense layout ------
        a_wide = jnp.concatenate([a] * W, axis=1)                 # (B, W*Cg)
        out3 = y1.reshape(B, H, WC) * (conv.reshape(B, H, WC) * a_wide[:, None, :])
        o_ref[...] = out3.reshape(BH, WC)

    return kernel


def _prep_group_params(pg, k, W, Cg):
    """Pre-lower one branch's weights into lane-dense matmul operands (host side)."""
    p = (k - 1) // 2
    off = PMAX - p
    # 1x1 group conv as a block-diagonal matrix acting on the (W*Cg) lane axis.
    w1x1 = jnp.kron(jnp.eye(W, dtype=jnp.float32), pg["w_gc"])          # (W*Cg, W*Cg)
    bgc_w = jnp.tile(pg["b_gc"].reshape(1, Cg), (1, W))                 # (1, W*Cg)
    bcv_w = jnp.tile(pg["b_cv"].reshape(1, Cg), (1, W))                 # (1, W*Cg)
    # Embed the k x k kernel (zero padded, centered) in a KMAX x KMAX tap grid.
    wcv9 = jnp.zeros((KMAX, KMAX, Cg, Cg), jnp.float32)
    wcv9 = wcv9.at[off:off + k, off:off + k].set(pg["w_cv"])
    # Banded (Toeplitz) weights over W:
    #   BW[dy, w_in*Cg+ci, w_out*Cg+co] = wcv9[dy, w_in - w_out + PMAX, ci, co]
    # (zero outside the band) -- this folds the W zero-padding into the matmul.
    w_in = jnp.arange(W)[:, None]
    w_out = jnp.arange(W)[None, :]
    dx = w_in - w_out + PMAX                                            # (W, W)
    valid = ((dx >= 0) & (dx < KMAX)).astype(jnp.float32)
    dxc = jnp.clip(dx, 0, KMAX - 1)
    bw = wcv9[:, dxc] * valid[None, :, :, None, None]                   # (KMAX,W,W,Cg,Cg)
    bw = jnp.transpose(bw, (0, 1, 3, 2, 4)).reshape(KMAX, W * Cg, W * Cg)
    return dict(
        w1x1=w1x1.astype(jnp.bfloat16),
        bgc=bgc_w.astype(jnp.float32),
        bw=bw.astype(jnp.bfloat16),
        bcv=bcv_w.astype(jnp.float32),
        wfc1t=jnp.transpose(pg["w_fc1"]).astype(jnp.float32),           # (Ch, Cg)
        wfc2=pg["w_fc2"].astype(jnp.float32),                           # (Ch, Cg)
    )


def psa_block(x_nchw, params):
    """Full PSABlock forward.  x_nchw: (B, C, H, W) float32 -> (B, C, H, W)."""
    B, C, H, W = x_nchw.shape
    G = 4
    Cg = C // G
    Ch = params[0]["w_fc1"].shape[1]
    BH, WC = B * H, W * Cg
    assert WC % 128 == 0 and BH % 8 == 0, "need W*Cg % 128 == 0 and B*H % 8 == 0"

    # Single NCHW -> per-group lane-dense (G, B*H, W*Cg) relayout (one XLA transpose).
    x_wide = jnp.transpose(x_nchw.reshape(B, G, Cg, H, W), (1, 0, 3, 4, 2))
    x_wide = x_wide.reshape(G, BH, WC).astype(jnp.bfloat16)

    prepped = [_prep_group_params(params[g], KS[g], W, Cg) for g in range(G)]
    w1x1 = jnp.stack([p["w1x1"] for p in prepped])       # (G, WC, WC)       bf16
    bgc = jnp.stack([p["bgc"] for p in prepped])         # (G, 1, WC)        f32
    bw = jnp.stack([p["bw"] for p in prepped])           # (G, KMAX, WC, WC) bf16
    bcv = jnp.stack([p["bcv"] for p in prepped])         # (G, 1, WC)        f32
    wfc1t = jnp.stack([p["wfc1t"] for p in prepped])     # (G, Ch, Cg)       f32
    wfc2 = jnp.stack([p["wfc2"] for p in prepped])       # (G, Ch, Cg)       f32

    kernel = make_psa_kernel(B, H, W, Cg, Ch)

    flops = 2 * G * BH * WC * WC * (1 + KMAX) + 4 * G * B * Cg * Ch
    bytes_accessed = (x_wide.size * 2 + G * BH * WC * 4 + w1x1.size * 2 + bw.size * 2
                      + (bgc.size + bcv.size + wfc1t.size + wfc2.size) * 4)

    out_wide = pl.pallas_call(
        kernel,
        out_shape=jax.ShapeDtypeStruct((G, BH, WC), jnp.float32),
        grid_spec=pltpu.PrefetchScalarGridSpec(
            num_scalar_prefetch=0,
            grid=(G,),
            in_specs=[
                pl.BlockSpec((None, BH, WC), lambda g: (g, 0, 0)),          # x
                pl.BlockSpec((None, WC, WC), lambda g: (g, 0, 0)),          # 1x1 weights
                pl.BlockSpec((None, 1, WC), lambda g: (g, 0, 0)),           # 1x1 bias
                pl.BlockSpec((None, KMAX, WC, WC), lambda g: (g, 0, 0, 0)), # banded conv
                pl.BlockSpec((None, 1, WC), lambda g: (g, 0, 0)),           # conv bias
                pl.BlockSpec((None, Ch, Cg), lambda g: (g, 0, 0)),          # SE fc1^T
                pl.BlockSpec((None, Ch, Cg), lambda g: (g, 0, 0)),          # SE fc2
            ],
            out_specs=pl.BlockSpec((None, BH, WC), lambda g: (g, 0, 0)),
            scratch_shapes=[pltpu.VMEM((B, H + 2 * PMAX, WC), jnp.float32)],
        ),
        compiler_params=pltpu.CompilerParams(
            dimension_semantics=("parallel",),    # groups shard across v7x's 2 TCs
            vmem_limit_bytes=32 * 1024 * 1024,
        ),
        cost_estimate=pl.CostEstimate(
            flops=int(flops),
            transcendentals=int(G * B * Cg),
            bytes_accessed=int(bytes_accessed)),
    )(x_wide, w1x1, bgc, bw, bcv, wfc1t, wfc2)

    # (G, B*H, W*Cg) -> NCHW: single XLA transpose + reshape (replaces 8 transposes
    # + concat of the previous per-group version).
    out = jnp.transpose(out_wide.reshape(G, B, H, W, Cg), (1, 0, 4, 2, 3))
    return out.reshape(B, C, H, W)


def init_params(key, C, reduction=16):
    """Deterministic synthetic params, PyTorch-default-like uniform init."""
    Cg = C // 4
    Ch = Cg // reduction
    assert Ch >= 1, "need in_channels//4 >= reduction for the SE hidden layer"
    params = []
    for k in KS:
        key, k0, k1, k2, k3, k4, k5 = jax.random.split(key, 7)
        bnd_gc = 1.0 / math.sqrt(Cg)
        bnd_cv = 1.0 / math.sqrt(Cg * k * k)
        params.append(dict(
            w_gc=jax.random.uniform(k0, (Cg, Cg), jnp.float32, -bnd_gc, bnd_gc),
            b_gc=jax.random.uniform(k1, (1, Cg), jnp.float32, -bnd_gc, bnd_gc),
            w_cv=jax.random.uniform(k2, (k, k, Cg, Cg), jnp.float32, -bnd_cv, bnd_cv),
            b_cv=jax.random.uniform(k3, (1, Cg), jnp.float32, -bnd_cv, bnd_cv),
            w_fc1=jax.random.uniform(k4, (Cg, Ch), jnp.float32,
                                     -1.0 / math.sqrt(Cg), 1.0 / math.sqrt(Cg)),
            w_fc2=jax.random.uniform(k5, (Ch, Cg), jnp.float32,
                                     -1.0 / math.sqrt(Ch), 1.0 / math.sqrt(Ch)),
        ))
    return params


def psa_block_ref(x_nchw, params):
    """Pure-JAX reference (same math, HIGHEST precision) for validation."""
    B, C, H, W = x_nchw.shape
    Cg = C // 4
    outs = []
    for g, k in enumerate(KS):
        p = (k - 1) // 2
        pg = params[g]
        x_g = jnp.transpose(x_nchw[:, g * Cg:(g + 1) * Cg], (0, 2, 3, 1))
        y1 = jnp.einsum("bhwc,cd->bhwd", x_g, pg["w_gc"],
                        precision=lax.Precision.HIGHEST) + pg["b_gc"].reshape(1, 1, 1, Cg)
        yp = jnp.pad(y1, ((0, 0), (p, p), (p, p), (0, 0)))
        conv = jnp.zeros_like(y1)
        for dy in range(k):
            for dx in range(k):
                conv = conv + jnp.einsum(
                    "bhwc,cd->bhwd", yp[:, dy:dy + H, dx:dx + W, :],
                    pg["w_cv"][dy, dx], precision=lax.Precision.HIGHEST)
        conv = conv + pg["b_cv"].reshape(1, 1, 1, Cg)
        s = conv.mean(axis=(1, 2))
        a = jax.nn.sigmoid(
            jnp.dot(jnp.maximum(jnp.dot(s, pg["w_fc1"],
                                        precision=lax.Precision.HIGHEST), 0.0),
                    pg["w_fc2"], precision=lax.Precision.HIGHEST))
        o = y1 * (conv * a[:, None, None, :])
        outs.append(jnp.transpose(o, (0, 3, 1, 2)))
    return jnp.concatenate(outs, axis=1)


if __name__ == "__main__":
    key = jax.random.PRNGKey(0)
    kx, kp = jax.random.split(key)
    # PSABlock needs in_channels divisible by 4 and in_channels//4 >= 16 (SE reduction).
    B, C, H, W = 2, 64, 16, 16
    x = jax.random.normal(kx, (B, C, H, W), jnp.float32)
    params = init_params(kp, C)

    psa = jax.jit(psa_block)
    out = jax.block_until_ready(psa(x, params))
    assert out.shape == (B, C, H, W)

    ref = psa_block_ref(x, params)
    if not jnp.allclose(out, ref, atol=2e-2, rtol=2e-2):
        err = float(jnp.max(jnp.abs(out - ref)))
        raise AssertionError(f"Pallas PSABlock mismatch vs JAX reference (max err {err})")

    print("KERNEL_OK")
</pallas_src>

<mosaic_0001>
module attributes {stable_mosaic.version = 11 : i64} {
  func.func @kernel(%arg0: i32, %arg1: memref<1x32x256xbf16, #tpu.memory_space<vmem>>, %arg2: memref<1x256x256xbf16, #tpu.memory_space<vmem>>, %arg3: memref<1x1x256xf32, #tpu.memory_space<vmem>>, %arg4: memref<1x9x256x256xbf16, #tpu.memory_space<vmem>>, %arg5: memref<1x1x256xf32, #tpu.memory_space<vmem>>, %arg6: memref<1x1x16xf32, #tpu.memory_space<vmem>>, %arg7: memref<1x1x16xf32, #tpu.memory_space<vmem>>, %arg8: memref<1x32x256xf32, #tpu.memory_space<vmem>>, %arg9: memref<2x24x256xf32, #tpu.memory_space<vmem>>) attributes {dimension_semantics = [#tpu.dimension_semantics<parallel>], iteration_bounds = array<i64: 4>, scalar_prefetch = 0 : i64, scratch_operands = 1 : i64, tpu.core_type = #tpu.core_type<tc>, window_params = [{transform_indices = @transform_0, window_bounds = array<i64: 1, 32, 256>}, {transform_indices = @transform_1, window_bounds = array<i64: 1, 256, 256>}, {transform_indices = @transform_2, window_bounds = array<i64: 1, 1, 256>}, {transform_indices = @transform_3, window_bounds = array<i64: 1, 9, 256, 256>}, {transform_indices = @transform_4, window_bounds = array<i64: 1, 1, 256>}, {transform_indices = @transform_5, window_bounds = array<i64: 1, 1, 16>}, {transform_indices = @transform_6, window_bounds = array<i64: 1, 1, 16>}, {transform_indices = @transform_7, window_bounds = array<i64: 1, 32, 256>}]} {
    %c0 = arith.constant 0 : index
    %c0_0 = arith.constant 0 : index
    %c0_1 = arith.constant 0 : index
    %0 = vector.load %arg1[%c0, %c0_0, %c0_1] : memref<1x32x256xbf16, #tpu.memory_space<vmem>>, vector<1x32x256xbf16>
    %1 = vector.shape_cast %0 : vector<1x32x256xbf16> to vector<32x256xbf16>
    %c0_2 = arith.constant 0 : index
    %c0_3 = arith.constant 0 : index
    %c0_4 = arith.constant 0 : index
    %2 = vector.load %arg2[%c0_2, %c0_3, %c0_4] : memref<1x256x256xbf16, #tpu.memory_space<vmem>>, vector<1x256x256xbf16>
    %3 = vector.shape_cast %2 : vector<1x256x256xbf16> to vector<256x256xbf16>
    %cst = arith.constant dense<0.000000e+00> : vector<32x256xf32>
    %4 = tpu.matmul %1, %3, %cst {dimension_numbers = #tpu.dot_dimension_numbers<[1], [0], [0], [1], [0, 0, 1, 1], [], []>} : vector<32x256xbf16>, vector<256x256xbf16>, vector<32x256xf32> -> vector<32x256xf32>
    %c0_5 = arith.constant 0 : index
    %c0_6 = arith.constant 0 : index
    %c0_7 = arith.constant 0 : index
    %5 = vector.load %arg3[%c0_5, %c0_6, %c0_7] : memref<1x1x256xf32, #tpu.memory_space<vmem>>, vector<1x1x256xf32>
    %6 = vector.shape_cast %5 : vector<1x1x256xf32> to vector<1x256xf32>
    %7 = vector.broadcast %6 : vector<1x256xf32> to vector<32x256xf32>
    %8 = arith.addf %4, %7 : vector<32x256xf32>
    %cst_8 = arith.constant 0.000000e+00 : f32
    %9 = vector.broadcast %cst_8 : f32 to vector<2x4x256xf32>
    %c0_9 = arith.constant 0 : index
    %c0_10 = arith.constant 0 : index
    %c0_11 = arith.constant 0 : index
    %10 = vector.load %arg9[%c0_9, %c0_10, %c0_11] : memref<2x24x256xf32, #tpu.memory_space<vmem>>, vector<2x4x256xf32>
    tpu.vector_store %arg9[%c0_9, %c0_10, %c0_11], %9 {strides = array<i32>} : memref<2x24x256xf32, #tpu.memory_space<vmem>>, vector<2x4x256xf32>,
    %cst_12 = arith.constant 0.000000e+00 : f32
    %11 = vector.broadcast %cst_12 : f32 to vector<2x4x256xf32>
    %c0_13 = arith.constant 0 : index
    %c20 = arith.constant 20 : index
    %c0_14 = arith.constant 0 : index
    %12 = vector.load %arg9[%c0_13, %c20, %c0_14] : memref<2x24x256xf32, #tpu.memory_space<vmem>>, vector<2x4x256xf32>
    tpu.vector_store %arg9[%c0_13, %c20, %c0_14], %11 {strides = array<i32>} : memref<2x24x256xf32, #tpu.memory_space<vmem>>, vector<2x4x256xf32>,
    %13 = vector.shape_cast %8 : vector<32x256xf32> to vector<2x16x256xf32>
    %c0_15 = arith.constant 0 : index
    %c4 = arith.constant 4 : index
    %c0_16 = arith.constant 0 : index
    %14 = vector.load %arg9[%c0_15, %c4, %c0_16] : memref<2x24x256xf32, #tpu.memory_space<vmem>>, vector<2x16x256xf32>
    tpu.vector_store %arg9[%c0_15, %c4, %c0_16], %13 {strides = array<i32>} : memref<2x24x256xf32, #tpu.memory_space<vmem>>, vector<2x16x256xf32>,
    %cst_17 = arith.constant 0.000000e+00 : f32
    %15 = vector.broadcast %cst_17 : f32 to vector<32x256xf32>
    %c0_18 = arith.constant 0 : index
    %c0_19 = arith.constant 0 : index
    %c0_20 = arith.constant 0 : index
    %16 = vector.load %arg9[%c0_18, %c0_19, %c0_20] : memref<2x24x256xf32, #tpu.memory_space<vmem>>, vector<2x16x256xf32>
    %17 = vector.shape_cast %16 : vector<2x16x256xf32> to vector<32x256xf32>
    %18 = arith.truncf %17 : vector<32x256xf32> to vector<32x256xbf16>
    %c0_21 = arith.constant 0 : index
    %c0_22 = arith.constant 0 : index
    %c0_23 = arith.constant 0 : index
    %c0_24 = arith.constant 0 : index
    %19 = vector.load %arg4[%c0_21, %c0_22, %c0_23, %c0_24] : memref<1x9x256x256xbf16, #tpu.memory_space<vmem>>, vector<1x1x256x256xbf16>
    %20 = vector.shape_cast %19 : vector<1x1x256x256xbf16> to vector<256x256xbf16>
    %cst_25 = arith.constant dense<0.000000e+00> : vector<32x256xf32>
    %21 = tpu.matmul %18, %20, %cst_25 {dimension_numbers = #tpu.dot_dimension_numbers<[1], [0], [0], [1], [0, 0, 1, 1], [], []>} : vector<32x256xbf16>, vector<256x256xbf16>, vector<32x256xf32> -> vector<32x256xf32>
    %22 = arith.addf %15, %21 : vector<32x256xf32>
    %c0_26 = arith.constant 0 : index
    %c1 = arith.constant 1 : index
    %c0_27 = arith.constant 0 : index
    %23 = vector.load %arg9[%c0_26, %c1, %c0_27] : memref<2x24x256xf32, #tpu.memory_space<vmem>>, vector<2x16x256xf32>
    %24 = vector.shape_cast %23 : vector<2x16x256xf32> to vector<32x256xf32>
    %25 = arith.truncf %24 : vector<32x256xf32> to vector<32x256xbf16>
    %c0_28 = arith.constant 0 : index
    %c1_29 = arith.constant 1 : index
    %c0_30 = arith.constant 0 : index
    %c0_31 = arith.constant 0 : index
    %26 = vector.load %arg4[%c0_28, %c1_29, %c0_30, %c0_31] : memref<1x9x256x256xbf16, #tpu.memory_space<vmem>>, vector<1x1x256x256xbf16>
    %27 = vector.shape_cast %26 : vector<1x1x256x256xbf16> to vector<256x256xbf16>
    %cst_32 = arith.constant dense<0.000000e+00> : vector<32x256xf32>
    %28 = tpu.matmul %25, %27, %cst_32 {dimension_numbers = #tpu.dot_dimension_numbers<[1], [0], [0], [1], [0, 0, 1, 1], [], []>} : vector<32x256xbf16>, vector<256x256xbf16>, vector<32x256xf32> -> vector<32x256xf32>
    %29 = arith.addf %22, %28 : vector<32x256xf32>
    %c0_33 = arith.constant 0 : index
    %c2 = arith.constant 2 : index
    %c0_34 = arith.constant 0 : index
    %30 = vector.load %arg9[%c0_33, %c2, %c0_34] : memref<2x24x256xf32, #tpu.memory_space<vmem>>, vector<2x16x256xf32>
    %31 = vector.shape_cast %30 : vector<2x16x256xf32> to vector<32x256xf32>
    %32 = arith.truncf %31 : vector<32x256xf32> to vector<32x256xbf16>
    %c0_35 = arith.constant 0 : index
    %c2_36 = arith.constant 2 : index
    %c0_37 = arith.constant 0 : index
    %c0_38 = arith.constant 0 : index
    %33 = vector.load %arg4[%c0_35, %c2_36, %c0_37, %c0_38] : memref<1x9x256x256xbf16, #tpu.memory_space<vmem>>, vector<1x1x256x256xbf16>
    %34 = vector.shape_cast %33 : vector<1x1x256x256xbf16> to vector<256x256xbf16>
    %cst_39 = arith.constant dense<0.000000e+00> : vector<32x256xf32>
    %35 = tpu.matmul %32, %34, %cst_39 {dimension_numbers = #tpu.dot_dimension_numbers<[1], [0], [0], [1], [0, 0, 1, 1], [], []>} : vector<32x256xbf16>, vector<256x256xbf16>, vector<32x256xf32> -> vector<32x256xf32>
    %36 = arith.addf %29, %35 : vector<32x256xf32>
    %c0_40 = arith.constant 0 : index
    %c3 = arith.constant 3 : index
    %c0_41 = arith.constant 0 : index
    %37 = vector.load %arg9[%c0_40, %c3, %c0_41] : memref<2x24x256xf32, #tpu.memory_space<vmem>>, vector<2x16x256xf32>
    %38 = vector.shape_cast %37 : vector<2x16x256xf32> to vector<32x256xf32>
    %39 = arith.truncf %38 : vector<32x256xf32> to vector<32x256xbf16>
    %c0_42 = arith.constant 0 : index
    %c3_43 = arith.constant 3 : index
    %c0_44 = arith.constant 0 : index
    %c0_45 = arith.constant 0 : index
    %40 = vector.load %arg4[%c0_42, %c3_43, %c0_44, %c0_45] : memref<1x9x256x256xbf16, #tpu.memory_space<vmem>>, vector<1x1x256x256xbf16>
    %41 = vector.shape_cast %40 : vector<1x1x256x256xbf16> to vector<256x256xbf16>
    %cst_46 = arith.constant dense<0.000000e+00> : vector<32x256xf32>
    %42 = tpu.matmul %39, %41, %cst_46 {dimension_numbers = #tpu.dot_dimension_numbers<[1], [0], [0], [1], [0, 0, 1, 1], [], []>} : vector<32x256xbf16>, vector<256x256xbf16>, vector<32x256xf32> -> vector<32x256xf32>
    %43 = arith.addf %36, %42 : vector<32x256xf32>
    %c0_47 = arith.constant 0 : index
    %c4_48 = arith.constant 4 : index
    %c0_49 = arith.constant 0 : index
    %44 = vector.load %arg9[%c0_47, %c4_48, %c0_49] : memref<2x24x256xf32, #tpu.memory_space<vmem>>, vector<2x16x256xf32>
    %45 = vector.shape_cast %44 : vector<2x16x256xf32> to vector<32x256xf32>
    %46 = arith.truncf %45 : vector<32x256xf32> to vector<32x256xbf16>
    %c0_50 = arith.constant 0 : index
    %c4_51 = arith.constant 4 : index
    %c0_52 = arith.constant 0 : index
    %c0_53 = arith.constant 0 : index
    %47 = vector.load %arg4[%c0_50, %c4_51, %c0_52, %c0_53] : memref<1x9x256x256xbf16, #tpu.memory_space<vmem>>, vector<1x1x256x256xbf16>
    %48 = vector.shape_cast %47 : vector<1x1x256x256xbf16> to vector<256x256xbf16>
    %cst_54 = arith.constant dense<0.000000e+00> : vector<32x256xf32>
    %49 = tpu.matmul %46, %48, %cst_54 {dimension_numbers = #tpu.dot_dimension_numbers<[1], [0], [0], [1], [0, 0, 1, 1], [], []>} : vector<32x256xbf16>, vector<256x256xbf16>, vector<32x256xf32> -> vector<32x256xf32>
    %50 = arith.addf %43, %49 : vector<32x256xf32>
    %c0_55 = arith.constant 0 : index
    %c5 = arith.constant 5 : index
    %c0_56 = arith.constant 0 : index
    %51 = vector.load %arg9[%c0_55, %c5, %c0_56] : memref<2x24x256xf32, #tpu.memory_space<vmem>>, vector<2x16x256xf32>
    %52 = vector.shape_cast %51 : vector<2x16x256xf32> to vector<32x256xf32>
    %53 = arith.truncf %52 : vector<32x256xf32> to vector<32x256xbf16>
    %c0_57 = arith.constant 0 : index
    %c5_58 = arith.constant 5 : index
    %c0_59 = arith.constant 0 : index
    %c0_60 = arith.constant 0 : index
    %54 = vector.load %arg4[%c0_57, %c5_58, %c0_59, %c0_60] : memref<1x9x256x256xbf16, #tpu.memory_space<vmem>>, vector<1x1x256x256xbf16>
    %55 = vector.shape_cast %54 : vector<1x1x256x256xbf16> to vector<256x256xbf16>
    %cst_61 = arith.constant dense<0.000000e+00> : vector<32x256xf32>
    %56 = tpu.matmul %53, %55, %cst_61 {dimension_numbers = #tpu.dot_dimension_numbers<[1], [0], [0], [1], [0, 0, 1, 1], [], []>} : vector<32x256xbf16>, vector<256x256xbf16>, vector<32x256xf32> -> vector<32x256xf32>
    %57 = arith.addf %50, %56 : vector<32x256xf32>
    %c0_62 = arith.constant 0 : index
    %c6 = arith.constant 6 : index
    %c0_63 = arith.constant 0 : index
    %58 = vector.load %arg9[%c0_62, %c6, %c0_63] : memref<2x24x256xf32, #tpu.memory_space<vmem>>, vector<2x16x256xf32>
    %59 = vector.shape_cast %58 : vector<2x16x256xf32> to vector<32x256xf32>
    %60 = arith.truncf %59 : vector<32x256xf32> to vector<32x256xbf16>
    %c0_64 = arith.constant 0 : index
    %c6_65 = arith.constant 6 : index
    %c0_66 = arith.constant 0 : index
    %c0_67 = arith.constant 0 : index
    %61 = vector.load %arg4[%c0_64, %c6_65, %c0_66, %c0_67] : memref<1x9x256x256xbf16, #tpu.memory_space<vmem>>, vector<1x1x256x256xbf16>
    %62 = vector.shape_cast %61 : vector<1x1x256x256xbf16> to vector<256x256xbf16>
    %cst_68 = arith.constant dense<0.000000e+00> : vector<32x256xf32>
    %63 = tpu.matmul %60, %62, %cst_68 {dimension_numbers = #tpu.dot_dimension_numbers<[1], [0], [0], [1], [0, 0, 1, 1], [], []>} : vector<32x256xbf16>, vector<256x256xbf16>, vector<32x256xf32> -> vector<32x256xf32>
    %64 = arith.addf %57, %63 : vector<32x256xf32>
    %c0_69 = arith.constant 0 : index
    %c7 = arith.constant 7 : index
    %c0_70 = arith.constant 0 : index
    %65 = vector.load %arg9[%c0_69, %c7, %c0_70] : memref<2x24x256xf32, #tpu.memory_space<vmem>>, vector<2x16x256xf32>
    %66 = vector.shape_cast %65 : vector<2x16x256xf32> to vector<32x256xf32>
    %67 = arith.truncf %66 : vector<32x256xf32> to vector<32x256xbf16>
    %c0_71 = arith.constant 0 : index
    %c7_72 = arith.constant 7 : index
    %c0_73 = arith.constant 0 : index
    %c0_74 = arith.constant 0 : index
    %68 = vector.load %arg4[%c0_71, %c7_72, %c0_73, %c0_74] : memref<1x9x256x256xbf16, #tpu.memory_space<vmem>>, vector<1x1x256x256xbf16>
    %69 = vector.shape_cast %68 : vector<1x1x256x256xbf16> to vector<256x256xbf16>
    %cst_75 = arith.constant dense<0.000000e+00> : vector<32x256xf32>
    %70 = tpu.matmul %67, %69, %cst_75 {dimension_numbers = #tpu.dot_dimension_numbers<[1], [0], [0], [1], [0, 0, 1, 1], [], []>} : vector<32x256xbf16>, vector<256x256xbf16>, vector<32x256xf32> -> vector<32x256xf32>
    %71 = arith.addf %64, %70 : vector<32x256xf32>
    %c0_76 = arith.constant 0 : index
    %c8 = arith.constant 8 : index
    %c0_77 = arith.constant 0 : index
    %72 = vector.load %arg9[%c0_76, %c8, %c0_77] : memref<2x24x256xf32, #tpu.memory_space<vmem>>, vector<2x16x256xf32>
    %73 = vector.shape_cast %72 : vector<2x16x256xf32> to vector<32x256xf32>
    %74 = arith.truncf %73 : vector<32x256xf32> to vector<32x256xbf16>
    %c0_78 = arith.constant 0 : index
    %c8_79 = arith.constant 8 : index
    %c0_80 = arith.constant 0 : index
    %c0_81 = arith.constant 0 : index
    %75 = vector.load %arg4[%c0_78, %c8_79, %c0_80, %c0_81] : memref<1x9x256x256xbf16, #tpu.memory_space<vmem>>, vector<1x1x256x256xbf16>
    %76 = vector.shape_cast %75 : vector<1x1x256x256xbf16> to vector<256x256xbf16>
    %cst_82 = arith.constant dense<0.000000e+00> : vector<32x256xf32>
    %77 = tpu.matmul %74, %76, %cst_82 {dimension_numbers = #tpu.dot_dimension_numbers<[1], [0], [0], [1], [0, 0, 1, 1], [], []>} : vector<32x256xbf16>, vector<256x256xbf16>, vector<32x256xf32> -> vector<32x256xf32>
    %78 = arith.addf %71, %77 : vector<32x256xf32>
    %c0_83 = arith.constant 0 : index
    %c0_84 = arith.constant 0 : index
    %c0_85 = arith.constant 0 : index
    %79 = vector.load %arg5[%c0_83, %c0_84, %c0_85] : memref<1x1x256xf32, #tpu.memory_space<vmem>>, vector<1x1x256xf32>
    %80 = vector.shape_cast %79 : vector<1x1x256xf32> to vector<1x256xf32>
    %81 = vector.broadcast %80 : vector<1x256xf32> to vector<32x256xf32>
    %82 = arith.addf %78, %81 : vector<32x256xf32>
    %83 = vector.shape_cast %82 : vector<32x256xf32> to vector<2x16x256xf32>
    %cst_86 = arith.constant dense<0.000000e+00> : vector<2x256xf32>
    %84 = vector.multi_reduction <add>, %83, %cst_86 [1] : vector<2x16x256xf32> to vector<2x256xf32>
    %cst_87 = arith.constant 0.000000e+00 : f32
    %85 = vector.broadcast %cst_87 : f32 to vector<2x16xf32>
    %86 = vector.extract_strided_slice %84 {offsets = [0, 0], sizes = [2, 16], strides = [1, 1]} : vector<2x256xf32> to vector<2x16xf32>
    %87 = arith.addf %85, %86 : vector<2x16xf32>
    %88 = vector.extract_strided_slice %84 {offsets = [0, 16], sizes = [2, 16], strides = [1, 1]} : vector<2x256xf32> to vector<2x16xf32>
    %89 = arith.addf %87, %88 : vector<2x16xf32>
    %90 = vector.extract_strided_slice %84 {offsets = [0, 32], sizes = [2, 16], strides = [1, 1]} : vector<2x256xf32> to vector<2x16xf32>
    %91 = arith.addf %89, %90 : vector<2x16xf32>
    %92 = vector.extract_strided_slice %84 {offsets = [0, 48], sizes = [2, 16], strides = [1, 1]} : vector<2x256xf32> to vector<2x16xf32>
    %93 = arith.addf %91, %92 : vector<2x16xf32>
    %94 = vector.extract_strided_slice %84 {offsets = [0, 64], sizes = [2, 16], strides = [1, 1]} : vector<2x256xf32> to vector<2x16xf32>
    %95 = arith.addf %93, %94 : vector<2x16xf32>
    %96 = vector.extract_strided_slice %84 {offsets = [0, 80], sizes = [2, 16], strides = [1, 1]} : vector<2x256xf32> to vector<2x16xf32>
    %97 = arith.addf %95, %96 : vector<2x16xf32>
    %98 = vector.extract_strided_slice %84 {offsets = [0, 96], sizes = [2, 16], strides = [1, 1]} : vector<2x256xf32> to vector<2x16xf32>
    %99 = arith.addf %97, %98 : vector<2x16xf32>
    %100 = vector.extract_strided_slice %84 {offsets = [0, 112], sizes = [2, 16], strides = [1, 1]} : vector<2x256xf32> to vector<2x16xf32>
    %101 = arith.addf %99, %100 : vector<2x16xf32>
    %102 = vector.extract_strided_slice %84 {offsets = [0, 128], sizes = [2, 16], strides = [1, 1]} : vector<2x256xf32> to vector<2x16xf32>
    %103 = arith.addf %101, %102 : vector<2x16xf32>
    %104 = vector.extract_strided_slice %84 {offsets = [0, 144], sizes = [2, 16], strides = [1, 1]} : vector<2x256xf32> to vector<2x16xf32>
    %105 = arith.addf %103, %104 : vector<2x16xf32>
    %106 = vector.extract_strided_slice %84 {offsets = [0, 160], sizes = [2, 16], strides = [1, 1]} : vector<2x256xf32> to vector<2x16xf32>
    %107 = arith.addf %105, %106 : vector<2x16xf32>
    %108 = vector.extract_strided_slice %84 {offsets = [0, 176], sizes = [2, 16], strides = [1, 1]} : vector<2x256xf32> to vector<2x16xf32>
    %109 = arith.addf %107, %108 : vector<2x16xf32>
    %110 = vector.extract_strided_slice %84 {offsets = [0, 192], sizes = [2, 16], strides = [1, 1]} : vector<2x256xf32> to vector<2x16xf32>
    %111 = arith.addf %109, %110 : vector<2x16xf32>
    %112 = vector.extract_strided_slice %84 {offsets = [0, 208], sizes = [2, 16], strides = [1, 1]} : vector<2x256xf32> to vector<2x16xf32>
    %113 = arith.addf %111, %112 : vector<2x16xf32>
    %114 = vector.extract_strided_slice %84 {offsets = [0, 224], sizes = [2, 16], strides = [1, 1]} : vector<2x256xf32> to vector<2x16xf32>
    %115 = arith.addf %113, %114 : vector<2x16xf32>
    %116 = vector.extract_strided_slice %84 {offsets = [0, 240], sizes = [2, 16], strides = [1, 1]} : vector<2x256xf32> to vector<2x16xf32>
    %117 = arith.addf %115, %116 : vector<2x16xf32>
    %cst_88 = arith.constant 3.906250e-03 : f32
    %118 = vector.broadcast %cst_88 : f32 to vector<2x16xf32>
    %119 = arith.mulf %117, %118 : vector<2x16xf32>
    %c0_89 = arith.constant 0 : index
    %c0_90 = arith.constant 0 : index
    %c0_91 = arith.constant 0 : index
    %120 = vector.load %arg6[%c0_89, %c0_90, %c0_91] : memref<1x1x16xf32, #tpu.memory_space<vmem>>, vector<1x1x16xf32>
    %121 = vector.shape_cast %120 : vector<1x1x16xf32> to vector<1x16xf32>
    %122 = vector.broadcast %121 : vector<1x16xf32> to vector<2x16xf32>
    %123 = arith.mulf %119, %122 : vector<2x16xf32>
    %cst_92 = arith.constant dense<0.000000e+00> : vector<2xf32>
    %124 = vector.multi_reduction <add>, %123, %cst_92 [1] : vector<2x16xf32> to vector<2xf32>
    %125 = vector.shape_cast %124 : vector<2xf32> to vector<2x1xf32>
    %cst_93 = arith.constant 0.000000e+00 : f32
    %126 = vector.broadcast %cst_93 : f32 to vector<2x1xf32>
    %127 = arith.maximumf %125, %126 : vector<2x1xf32>
    %cst_94 = arith.constant 0.000000e+00 : f32
    %128 = vector.broadcast %cst_94 : f32 to vector<2x16xf32>
    %c0_95 = arith.constant 0 : index
    %c0_96 = arith.constant 0 : index
    %c0_97 = arith.constant 0 : index
    %129 = vector.load %arg7[%c0_95, %c0_96, %c0_97] : memref<1x1x16xf32, #tpu.memory_space<vmem>>, vector<1x1x16xf32>
    %130 = vector.shape_cast %129 : vector<1x1x16xf32> to vector<1x16xf32>
    %131 = vector.broadcast %127 : vector<2x1xf32> to vector<2x16xf32>
    %132 = vector.broadcast %130 : vector<1x16xf32> to vector<2x16xf32>
    %133 = arith.mulf %131, %132 : vector<2x16xf32>
    %134 = arith.addf %128, %133 : vector<2x16xf32>
    %135 = arith.negf %134 : vector<2x16xf32>
    %136 = math.exp %135 : vector<2x16xf32>
    %cst_98 = arith.constant 1.000000e+00 : f32
    %137 = vector.broadcast %cst_98 : f32 to vector<2x16xf32>
    %138 = arith.addf %137, %136 : vector<2x16xf32>
    %139 = arith.divf %137, %138 : vector<2x16xf32>
    %140 = tpu.concatenate %139, %139, %139, %139, %139, %139, %139, %139, %139, %139, %139, %139, %139, %139, %139, %139 in 1 : vector<2x16xf32>, vector<2x16xf32>, vector<2x16xf32>, vector<2x16xf32>, vector<2x16xf32>, vector<2x16xf32>, vector<2x16xf32>, vector<2x16xf32>, vector<2x16xf32>, vector<2x16xf32>, vector<2x16xf32>, vector<2x16xf32>, vector<2x16xf32>, vector<2x16xf32>, vector<2x16xf32>, vector<2x16xf32> -> vector<2x256xf32>
    %141 = vector.shape_cast %8 : vector<32x256xf32> to vector<2x16x256xf32>
    %142 = vector.shape_cast %82 : vector<32x256xf32> to vector<2x16x256xf32>
    %143 = vector.shape_cast %140 : vector<2x256xf32> to vector<2x1x256xf32>
    %144 = vector.broadcast %143 : vector<2x1x256xf32> to vector<2x16x256xf32>
    %145 = arith.mulf %142, %144 : vector<2x16x256xf32>
    %146 = arith.mulf %141, %145 : vector<2x16x256xf32>
    %147 = vector.shape_cast %146 : vector<2x16x256xf32> to vector<32x256xf32>
    %c0_99 = arith.constant 0 : index
    %c0_100 = arith.constant 0 : index
    %c0_101 = arith.constant 0 : index
    %148 = vector.load %arg8[%c0_99, %c0_100, %c0_101] : memref<1x32x256xf32, #tpu.memory_space<vmem>>, vector<1x32x256xf32>
    %149 = vector.shape_cast %148 : vector<1x32x256xf32> to vector<32x256xf32>
    %150 = vector.shape_cast %147 : vector<32x256xf32> to vector<1x32x256xf32>
    tpu.vector_store %arg8[%c0_99, %c0_100, %c0_101], %150 {strides = array<i32>} : memref<1x32x256xf32, #tpu.memory_space<vmem>>, vector<1x32x256xf32>,
    return
  }
  func.func @transform_0(%arg0: i32) -> (i32, i32, i32) {
    %c0_i32 = arith.constant 0 : i32
    %c0_i32_0 = arith.constant 0 : i32
    %c0_i32_1 = arith.constant 0 : i32
    return %arg0, %c0_i32, %c0_i32_0 : i32, i32, i32
  }
  func.func @transform_1(%arg0: i32) -> (i32, i32, i32) {
    %c0_i32 = arith.constant 0 : i32
    %c0_i32_0 = arith.constant 0 : i32
    %c0_i32_1 = arith.constant 0 : i32
    return %arg0, %c0_i32, %c0_i32_0 : i32, i32, i32
  }
  func.func @transform_2(%arg0: i32) -> (i32, i32, i32) {
    %c0_i32 = arith.constant 0 : i32
    %c0_i32_0 = arith.constant 0 : i32
    %c0_i32_1 = arith.constant 0 : i32
    return %arg0, %c0_i32, %c0_i32_0 : i32, i32, i32
  }
  func.func @transform_3(%arg0: i32) -> (i32, i32, i32, i32) {
    %c0_i32 = arith.constant 0 : i32
    %c0_i32_0 = arith.constant 0 : i32
    %c0_i32_1 = arith.constant 0 : i32
    %c0_i32_2 = arith.constant 0 : i32
    return %arg0, %c0_i32, %c0_i32_0, %c0_i32_1 : i32, i32, i32, i32
  }
  func.func @transform_4(%arg0: i32) -> (i32, i32, i32) {
    %c0_i32 = arith.constant 0 : i32
    %c0_i32_0 = arith.constant 0 : i32
    %c0_i32_1 = arith.constant 0 : i32
    return %arg0, %c0_i32, %c0_i32_0 : i32, i32, i32
  }
  func.func @transform_5(%arg0: i32) -> (i32, i32, i32) {
    %c0_i32 = arith.constant 0 : i32
    %c0_i32_0 = arith.constant 0 : i32
    %c0_i32_1 = arith.constant 0 : i32
    return %arg0, %c0_i32, %c0_i32_0 : i32, i32, i32
  }
  func.func @transform_6(%arg0: i32) -> (i32, i32, i32) {
    %c0_i32 = arith.constant 0 : i32
    %c0_i32_0 = arith.constant 0 : i32
    %c0_i32_1 = arith.constant 0 : i32
    return %arg0, %c0_i32, %c0_i32_0 : i32, i32, i32
  }
  func.func @transform_7(%arg0: i32) -> (i32, i32, i32) {
    %c0_i32 = arith.constant 0 : i32
    %c0_i32_0 = arith.constant 0 : i32
    %c0_i32_1 = arith.constant 0 : i32
    return %arg0, %c0_i32, %c0_i32_0 : i32, i32, i32
  }
}

</mosaic_0001>

<llo_original>
// kernel: psa_block.1
$region0: #{psa_block.1}
  #allocation0 [shape = 'u32[]', space=smem, size = 0x4, offset = 0x4, fixed_abs, tag = 'smem constant byte address 0x4 - core index']
  #allocation1 [shape = 'u32[144,128]{1,0:T(1,128)}', space=vmem, size = 0x12000, scoped, tag = 'internal scratch']
  #allocation2 [shape = 'f32[2,24,256]{2,1,0:T(8,128)}', space=vmem, size = 0xc000, scoped, tag = 'scratch operand']
  %s0 = inlined_call_operand.vmem [shape: bf16[4,32,256], index: 0, kind: input, shape index: {}]
  %s1 = inlined_call_operand.vmem [shape: bf16[4,256,256], index: 1, kind: input, shape index: {}]
  %s2 = inlined_call_operand.vmem [shape: f32[4,1,256], index: 2, kind: input, shape index: {}]
  %s3 = inlined_call_operand.vmem [shape: bf16[4,9,256,256], index: 3, kind: input, shape index: {}]
  %s4 = inlined_call_operand.vmem [shape: f32[4,1,256], index: 4, kind: input, shape index: {}]
  %s5 = inlined_call_operand.vmem [shape: f32[4,1,16], index: 5, kind: input, shape index: {}]
  %s6 = inlined_call_operand.vmem [shape: f32[4,1,16], index: 6, kind: input, shape index: {}]
  %s7 = inlined_call_operand.vmem [shape: f32[4,32,256], index: 7, kind: output, shape index: {}]
  %s8 = sld [smem:[#allocation0]]
  $region61: #{psa_block.1} parent=0
    _
  %s10 = ssub.s32 1, %s8
  %s11 = scalar_select 0, %s10, %s8
  loop: start=0, step=1, limit=6
  $region2: #{psa_block.1} parent=0 // loop_pre_header
    _
  $region3: #{psa_block.1} parent=0 // loop_header
    %s13 = sphi 0, %s17
    %p14 = scmp.ge.s32.totalorder %s13, 6
    %s23 = sphi 0, %s25
    %s26 = sphi 0, %s23
    %s27 = sphi 0, %s26
    %s43 = sphi 0, %s27
    %s49 = sphi 0, %s51
    %s52 = sphi 0, %s49
    %s53 = sphi 0, %s52
    %s69 = sphi 0, %s53
    %s75 = sphi 0, %s77
    %s78 = sphi 0, %s75
    %s79 = sphi 0, %s78
    %s95 = sphi 0, %s79
    %s101 = sphi 0, %s103
    %s104 = sphi 0, %s101
    %s105 = sphi 0, %s104
    %s121 = sphi 0, %s105
    %s127 = sphi 0, %s129
    %s130 = sphi 0, %s127
    %s131 = sphi 0, %s130
    %s147 = sphi 0, %s131
    %s153 = sphi 0, %s155
    %s156 = sphi 0, %s153
    %s157 = sphi 0, %s156
    %s173 = sphi 0, %s157
    %s179 = sphi 0, %s181
    %s182 = sphi 0, %s179
    %s183 = sphi 0, %s182
    %s199 = sphi 0, %s183
    %s205 = sphi 0, %s207
    %s208 = sphi 0, %s205
    %s209 = sphi 0, %s208
    %s225 = sphi 0, %s209
  $region4: #{psa_block.1} parent=0 // loop_header_branch
    %16 = sbr.rel (%p14) target = $region8
  $region5: #{psa_block.1} parent=0 // loop_body
    %s18 = ssub.s32 %s13, 1
    %s19 = ssub.s32 %s13, 2
    %s20 = sadd.s32 %s13, 1
    %s21 = ssub.s32 %s13, %s20
    %p22 = scmp.eq.s32.totalorder %s21, 0
    %s24 = sadd.s32 %s23, 1
    %s25 = scalar_select %p22, %s23, %s24
    %p28 = pneg %p22
    %p29 = scmp.eq.s32.totalorder %s13, 3
    %p30 = por %p28, %p29
    %p31 = scmp.ne.s32.totalorder %s23, %s26
    %p32 = scmp.eq.s32.totalorder %s13, 0
    %p33 = por %p31, %p32
    %p34 = scmp.ne.s32.totalorder %s23, %s26
    %p35 = scmp.eq.s32.totalorder %s18, 3
    %p36 = por %p34, %p35
    %p37 = scmp.ne.s32.totalorder %s26, %s27
    %p38 = scmp.eq.s32.totalorder %s18, 0
    %p39 = por %p37, %p38
    %p40 = scmp.ne.s32.totalorder %s26, %s27
    %p41 = scmp.eq.s32.totalorder %s19, 3
    %p42 = por %p40, %p41
    %p44 = scmp.ne.s32.totalorder %s27, %s43
    %p45 = scmp.eq.s32.totalorder %s19, 0
    %p46 = por %p44, %p45
    %s47 = ssub.s32 %s13, %s20
    %p48 = scmp.eq.s32.totalorder %s47, 0
    %s50 = sadd.s32 %s49, 1
    %s51 = scalar_select %p48, %s49, %s50
    %p54 = pneg %p48
    %p55 = scmp.eq.s32.totalorder %s13, 3
    %p56 = por %p54, %p55
    %p57 = scmp.ne.s32.totalorder %s49, %s52
    %p58 = scmp.eq.s32.totalorder %s13, 0
    %p59 = por %p57, %p58
    %p60 = scmp.ne.s32.totalorder %s49, %s52
    %p61 = scmp.eq.s32.totalorder %s18, 3
    %p62 = por %p60, %p61
    %p63 = scmp.ne.s32.totalorder %s52, %s53
    %p64 = scmp.eq.s32.totalorder %s18, 0
    %p65 = por %p63, %p64
    %p66 = scmp.ne.s32.totalorder %s52, %s53
    %p67 = scmp.eq.s32.totalorder %s19, 3
    %p68 = por %p66, %p67
    %p70 = scmp.ne.s32.totalorder %s53, %s69
    %p71 = scmp.eq.s32.totalorder %s19, 0
    %p72 = por %p70, %p71
    %s73 = ssub.s32 %s13, %s20
    %p74 = scmp.eq.s32.totalorder %s73, 0
    %s76 = sadd.s32 %s75, 1
    %s77 = scalar_select %p74, %s75, %s76
    %p80 = pneg %p74
    %p81 = scmp.eq.s32.totalorder %s13, 3
    %p82 = por %p80, %p81
    %p83 = scmp.ne.s32.totalorder %s75, %s78
    %p84 = scmp.eq.s32.totalorder %s13, 0
    %p85 = por %p83, %p84
    %p86 = scmp.ne.s32.totalorder %s75, %s78
    %p87 = scmp.eq.s32.totalorder %s18, 3
    %p88 = por %p86, %p87
    %p89 = scmp.ne.s32.totalorder %s78, %s79
    %p90 = scmp.eq.s32.totalorder %s18, 0
    %p91 = por %p89, %p90
    %p92 = scmp.ne.s32.totalorder %s78, %s79
    %p93 = scmp.eq.s32.totalorder %s19, 3
    %p94 = por %p92, %p93
    %p96 = scmp.ne.s32.totalorder %s79, %s95
    %p97 = scmp.eq.s32.totalorder %s19, 0
    %p98 = por %p96, %p97
    %s99 = ssub.s32 %s13, %s20
    %p100 = scmp.eq.s32.totalorder %s99, 0
    %s102 = sadd.s32 %s101, 1
    %s103 = scalar_select %p100, %s101, %s102
    %p106 = pneg %p100
    %p107 = scmp.eq.s32.totalorder %s13, 3
    %p108 = por %p106, %p107
    %p109 = scmp.ne.s32.totalorder %s101, %s104
    %p110 = scmp.eq.s32.totalorder %s13, 0
    %p111 = por %p109, %p110
    %p112 = scmp.ne.s32.totalorder %s101, %s104
    %p113 = scmp.eq.s32.totalorder %s18, 3
    %p114 = por %p112, %p113
    %p115 = scmp.ne.s32.totalorder %s104, %s105
    %p116 = scmp.eq.s32.totalorder %s18, 0
    %p117 = por %p115, %p116
    %p118 = scmp.ne.s32.totalorder %s104, %s105
    %p119 = scmp.eq.s32.totalorder %s19, 3
    %p120 = por %p118, %p119
    %p122 = scmp.ne.s32.totalorder %s105, %s121
    %p123 = scmp.eq.s32.totalorder %s19, 0
    %p124 = por %p122, %p123
    %s125 = ssub.s32 %s13, %s20
    %p126 = scmp.eq.s32.totalorder %s125, 0
    %s128 = sadd.s32 %s127, 1
    %s129 = scalar_select %p126, %s127, %s128
    %p132 = pneg %p126
    %p133 = scmp.eq.s32.totalorder %s13, 3
    %p134 = por %p132, %p133
    %p135 = scmp.ne.s32.totalorder %s127, %s130
    %p136 = scmp.eq.s32.totalorder %s13, 0
    %p137 = por %p135, %p136
    %p138 = scmp.ne.s32.totalorder %s127, %s130
    %p139 = scmp.eq.s32.totalorder %s18, 3
    %p140 = por %p138, %p139
    %p141 = scmp.ne.s32.totalorder %s130, %s131
    %p142 = scmp.eq.s32.totalorder %s18, 0
    %p143 = por %p141, %p142
    %p144 = scmp.ne.s32.totalorder %s130, %s131
    %p145 = scmp.eq.s32.totalorder %s19, 3
    %p146 = por %p144, %p145
    %p148 = scmp.ne.s32.totalorder %s131, %s147
    %p149 = scmp.eq.s32.totalorder %s19, 0
    %p150 = por %p148, %p149
    %s151 = ssub.s32 %s13, %s20
    %p152 = scmp.eq.s32.totalorder %s151, 0
    %s154 = sadd.s32 %s153, 1
    %s155 = scalar_select %p152, %s153, %s154
    %p158 = pneg %p152
    %p159 = scmp.eq.s32.totalorder %s13, 3
    %p160 = por %p158, %p159
    %p161 = scmp.ne.s32.totalorder %s153, %s156
    %p162 = scmp.eq.s32.totalorder %s13, 0
    %p163 = por %p161, %p162
    %p164 = scmp.ne.s32.totalorder %s153, %s156
    %p165 = scmp.eq.s32.totalorder %s18, 3
    %p166 = por %p164, %p165
    %p167 = scmp.ne.s32.totalorder %s156, %s157
    %p168 = scmp.eq.s32.totalorder %s18, 0
    %p169 = por %p167, %p168
    %p170 = scmp.ne.s32.totalorder %s156, %s157
    %p171 = scmp.eq.s32.totalorder %s19, 3
    %p172 = por %p170, %p171
    %p174 = scmp.ne.s32.totalorder %s157, %s173
    %p175 = scmp.eq.s32.totalorder %s19, 0
    %p176 = por %p174, %p175
    %s177 = ssub.s32 %s13, %s20
    %p178 = scmp.eq.s32.totalorder %s177, 0
    %s180 = sadd.s32 %s179, 1
    %s181 = scalar_select %p178, %s179, %s180
    %p184 = pneg %p178
    %p185 = scmp.eq.s32.totalorder %s13, 3
    %p186 = por %p184, %p185
    %p187 = scmp.ne.s32.totalorder %s179, %s182
    %p188 = scmp.eq.s32.totalorder %s13, 0
    %p189 = por %p187, %p188
    %p190 = scmp.ne.s32.totalorder %s179, %s182
    %p191 = scmp.eq.s32.totalorder %s18, 3
    %p192 = por %p190, %p191
    %p193 = scmp.ne.s32.totalorder %s182, %s183
    %p194 = scmp.eq.s32.totalorder %s18, 0
    %p195 = por %p193, %p194
    %p196 = scmp.ne.s32.totalorder %s182, %s183
    %p197 = scmp.eq.s32.totalorder %s19, 3
    %p198 = por %p196, %p197
    %p200 = scmp.ne.s32.totalorder %s183, %s199
    %p201 = scmp.eq.s32.totalorder %s19, 0
    %p202 = por %p200, %p201
    %s203 = ssub.s32 %s13, %s20
    %p204 = scmp.eq.s32.totalorder %s203, 0
    %s206 = sadd.s32 %s205, 1
    %s207 = scalar_select %p204, %s205, %s206
    %p210 = pneg %p204
    %p211 = scmp.eq.s32.totalorder %s13, 3
    %p212 = por %p210, %p211
    %p213 = scmp.ne.s32.totalorder %s205, %s208
    %p214 = scmp.eq.s32.totalorder %s13, 0
    %p215 = por %p213, %p214
    %p216 = scmp.ne.s32.totalorder %s205, %s208
    %p217 = scmp.eq.s32.totalorder %s18, 3
    %p218 = por %p216, %p217
    %p219 = scmp.ne.s32.totalorder %s208, %s209
    %p220 = scmp.eq.s32.totalorder %s18, 0
    %p221 = por %p219, %p220
    %p222 = scmp.ne.s32.totalorder %s208, %s209
    %p223 = scmp.eq.s32.totalorder %s19, 3
    %p224 = por %p222, %p223
    %p226 = scmp.ne.s32.totalorder %s209, %s225
    %p227 = scmp.eq.s32.totalorder %s19, 0
    %p228 = por %p226, %p227
    %p229 = scmp.le.s32.totalorder 1, %s13
    %p230 = scmp.lt.s32.totalorder %s13, 5
    %p231 = pnand %p229, %p230
    %p232 = pneg %p231
    // Predicated region
    $region9: #{psa_block.1} parent=5 // pred_check
      _
    $region10: #{psa_block.1} parent=5 // pred_check_branch
      %234 = sbr.rel (%p231) target = $region12
    $region11: #{psa_block.1} parent=5 // pred_region
      %s235 = ssub.s32 %s13, 1
    $region12: #{psa_block.1} parent=5 // pred_fallthru
      _
    %p236 = scmp.lt.s32.totalorder %s13, 4
    // Predicated region
    $region13: #{psa_block.1} parent=5 // pred_check
      %p237 = pneg %p236
    $region14: #{psa_block.1} parent=5 // pred_check_branch
      %239 = sbr.rel (%p237) target = $region16
    $region15: #{psa_block.1} parent=5 // pred_region
      // Predicated region
      $region17: #{psa_block.1} parent=15 // pred_check
        %p240 = pneg %p33
      $region18: #{psa_block.1} parent=15 // pred_check_branch
        %242 = sbr.rel (%p240) target = $region20
      $region19: #{psa_block.1} parent=15 // pred_region
        %p243 = scmp.lt.s32.totalorder %s13, 3
        %s244 = scalar_select %p243, %s13, 3
        %s245 = smul.addr %s244, 8
        %s246 = smul.addr %s245, 4
        %s247 = scalar_lea.vmem %s0, %s246
      $region20: #{psa_block.1} parent=15 // pred_fallthru
        _
      // Predicated region
      $region21: #{psa_block.1} parent=15 // pred_check
        %p248 = pneg %p59
      $region22: #{psa_block.1} parent=15 // pred_check_branch
        %250 = sbr.rel (%p248) target = $region24
      $region23: #{psa_block.1} parent=15 // pred_region
        %p251 = scmp.lt.s32.totalorder %s13, 3
        %s252 = scalar_select %p251, %s13, 3
        %s253 = smul.addr %s252, 64
        %s254 = smul.addr %s253, 4
        %s255 = scalar_lea.vmem %s1, %s254
      $region24: #{psa_block.1} parent=15 // pred_fallthru
        _
      // Predicated region
      $region25: #{psa_block.1} parent=15 // pred_check
        %p256 = pneg %p85
      $region26: #{psa_block.1} parent=15 // pred_check_branch
        %258 = sbr.rel (%p256) target = $region28
      $region27: #{psa_block.1} parent=15 // pred_region
        %p259 = scmp.lt.s32.totalorder %s13, 3
        %s260 = scalar_select %p259, %s13, 3
        %s261 = smul.addr %s260, 2
        %s262 = scalar_lea.vmem %s2, %s261
      $region28: #{psa_block.1} parent=15 // pred_fallthru
        _
      // Predicated region
      $region29: #{psa_block.1} parent=15 // pred_check
        %p263 = pneg %p111
      $region30: #{psa_block.1} parent=15 // pred_check_branch
        %265 = sbr.rel (%p263) target = $region32
      $region31: #{psa_block.1} parent=15 // pred_region
        %p266 = scmp.lt.s32.totalorder %s13, 3
        %s267 = scalar_select %p266, %s13, 3
        %s268 = smul.addr %s267, 576
        %s269 = smul.addr %s268, 4
        %s270 = scalar_lea.vmem %s3, %s269
      $region32: #{psa_block.1} parent=15 // pred_fallthru
        _
      // Predicated region
      $region33: #{psa_block.1} parent=15 // pred_check
        %p271 = pneg %p137
      $region34: #{psa_block.1} parent=15 // pred_check_branch
        %273 = sbr.rel (%p271) target = $region36
      $region35: #{psa_block.1} parent=15 // pred_region
        %p274 = scmp.lt.s32.totalorder %s13, 3
        %s275 = scalar_select %p274, %s13, 3
        %s276 = smul.addr %s275, 2
        %s277 = scalar_lea.vmem %s4, %s276
      $region36: #{psa_block.1} parent=15 // pred_fallthru
        _
      // Predicated region
      $region37: #{psa_block.1} parent=15 // pred_check
        %p278 = pneg %p163
      $region38: #{psa_block.1} parent=15 // pred_check_branch
        %280 = sbr.rel (%p278) target = $region40
      $region39: #{psa_block.1} parent=15 // pred_region
        %p281 = scmp.lt.s32.totalorder %s13, 3
        %s282 = scalar_select %p281, %s13, 3
        %s283 = scalar_lea.vmem %s5, %s282
      $region40: #{psa_block.1} parent=15 // pred_fallthru
        _
      // Predicated region
      $region41: #{psa_block.1} parent=15 // pred_check
        %p284 = pneg %p189
      $region42: #{psa_block.1} parent=15 // pred_check_branch
        %286 = sbr.rel (%p284) target = $region44
      $region43: #{psa_block.1} parent=15 // pred_region
        %p287 = scmp.lt.s32.totalorder %s13, 3
        %s288 = scalar_select %p287, %s13, 3
        %s289 = scalar_lea.vmem %s6, %s288
      $region44: #{psa_block.1} parent=15 // pred_fallthru
        _
    $region16: #{psa_block.1} parent=5 // pred_fallthru
      _
    %p290 = scmp.le.s32.totalorder 1, %s13
    %p291 = scmp.lt.s32.totalorder %s13, 5
    %p292 = pnand %p290, %p291
    %p293 = pneg %p292
    // Predicated region
    $region45: #{psa_block.1} parent=5 // pred_check
      _
    $region46: #{psa_block.1} parent=5 // pred_check_branch
      %295 = sbr.rel (%p292) target = $region48
    $region47: #{psa_block.1} parent=5 // pred_region
      %s296 = ssub.s32 %s13, 1
      %p297 = scmp.lt.s32.totalorder %s18, 3
      %s298 = scalar_select %p297, %s18, 3
      %s299 = smul.addr %s298, 8
      %s300 = smul.addr %s299, 4
      %s301 = scalar_lea.vmem %s0, %s300
      %p302 = pneg %p39
      %p303 = pneg %p36
      %p304 = scmp.lt.s32.totalorder %s18, 3
      %s305 = scalar_select %p304, %s18, 3
      %s306 = smul.addr %s305, 64
      %s307 = smul.addr %s306, 4
      %s308 = scalar_lea.vmem %s1, %s307
      %p309 = pneg %p65
      %p310 = pneg %p62
      %p311 = scmp.lt.s32.totalorder %s18, 3
      %s312 = scalar_select %p311, %s18, 3
      %s313 = smul.addr %s312, 2
      %s314 = scalar_lea.vmem %s2, %s313
      %p315 = pneg %p91
      %p316 = pneg %p88
      %p317 = scmp.lt.s32.totalorder %s18, 3
      %s318 = scalar_select %p317, %s18, 3
      %s319 = smul.addr %s318, 576
      %s320 = smul.addr %s319, 4
      %s321 = scalar_lea.vmem %s3, %s320
      %p322 = pneg %p117
      %p323 = pneg %p114
      %p324 = scmp.lt.s32.totalorder %s18, 3
      %s325 = scalar_select %p324, %s18, 3
      %s326 = smul.addr %s325, 2
      %s327 = scalar_lea.vmem %s4, %s326
      %p328 = pneg %p143
      %p329 = pneg %p140
      %p330 = scmp.lt.s32.totalorder %s18, 3
      %s331 = scalar_select %p330, %s18, 3
      %s332 = scalar_lea.vmem %s5, %s331
      %p333 = pneg %p169
      %p334 = pneg %p166
      %p335 = scmp.lt.s32.totalorder %s18, 3
      %s336 = scalar_select %p335, %s18, 3
      %s337 = scalar_lea.vmem %s6, %s336
      %p338 = pneg %p195
      %p339 = pneg %p192
      %p340 = pneg %p221
      %p341 = pneg %p218
      %p342 = scmp.lt.s32.totalorder %s18, 3
      %s343 = scalar_select %p342, %s18, 3
      %s344 = smul.addr %s343, 8
      %s345 = smul.addr %s344, 8
      %s346 = scalar_lea.vmem %s7, %s345
      %p347 = scmp.lt.s32.totalorder %s18, 3
      %s348 = scalar_select %p347, %s18, 3
      %s349 = smul.addr %s348, 8
      %s350 = smul.addr %s349, 4
      %s351 = scalar_lea.vmem %s0, %s350
      %p352 = scmp.lt.s32.totalorder %s18, 3
      %s353 = scalar_select %p352, %s18, 3
      %s354 = smul.addr %s353, 64
      %s355 = smul.addr %s354, 4
      %s356 = scalar_lea.vmem %s1, %s355
      %p357 = scmp.lt.s32.totalorder %s18, 3
      %s358 = scalar_select %p357, %s18, 3
      %s359 = smul.addr %s358, 2
      %s360 = scalar_lea.vmem %s2, %s359
      %p361 = scmp.lt.s32.totalorder %s18, 3
      %s362 = scalar_select %p361, %s18, 3
      %s363 = smul.addr %s362, 576
      %s364 = smul.addr %s363, 4
      %s365 = scalar_lea.vmem %s3, %s364
      %p366 = scmp.lt.s32.totalorder %s18, 3
      %s367 = scalar_select %p366, %s18, 3
      %s368 = smul.addr %s367, 2
      %s369 = scalar_lea.vmem %s4, %s368
      %p370 = scmp.lt.s32.totalorder %s18, 3
      %s371 = scalar_select %p370, %s18, 3
      %s372 = scalar_lea.vmem %s5, %s371
      %p373 = scmp.lt.s32.totalorder %s18, 3
      %s374 = scalar_select %p373, %s18, 3
      %s375 = scalar_lea.vmem %s6, %s374
      %p376 = scmp.lt.s32.totalorder %s18, 3
      %s377 = scalar_select %p376, %s18, 3
      %s378 = smul.addr %s377, 8
      %s379 = smul.addr %s378, 8
      %s380 = scalar_lea.vmem %s7, %s379
      %v381 = vld [vmem:[%s351] sm:$0xff]
      %v382 = vld [vmem:[%s351 + $0x8] sm:$0xff]
      %v383 = vld [vmem:[%s351 + $0x10] sm:$0xff]
      %v384 = vld [vmem:[%s351 + $0x18] sm:$0xff]
      %v385 = vld [vmem:[%s356] sm:$0xff]
      %v386 = vld [vmem:[%s356 + $0x8] sm:$0xff]
      %v387 = vld [vmem:[%s356 + $0x10] sm:$0xff]
      %v388 = vld [vmem:[%s356 + $0x18] sm:$0xff]
      %v389 = vld [vmem:[%s356 + $0x20] sm:$0xff]
      %v390 = vld [vmem:[%s356 + $0x28] sm:$0xff]
      %v391 = vld [vmem:[%s356 + $0x30] sm:$0xff]
      %v392 = vld [vmem:[%s356 + $0x38] sm:$0xff]
      %v393 = vld [vmem:[%s356 + $0x40] sm:$0xff]
      %v394 = vld [vmem:[%s356 + $0x48] sm:$0xff]
      %v395 = vld [vmem:[%s356 + $0x50] sm:$0xff]
      %v396 = vld [vmem:[%s356 + $0x58] sm:$0xff]
      %v397 = vld [vmem:[%s356 + $0x60] sm:$0xff]
      %v398 = vld [vmem:[%s356 + $0x68] sm:$0xff]
      %v399 = vld [vmem:[%s356 + $0x70] sm:$0xff]
      %v400 = vld [vmem:[%s356 + $0x78] sm:$0xff]
      %v401 = vld [vmem:[%s356 + $0x80] sm:$0xff]
      %v402 = vld [vmem:[%s356 + $0x88] sm:$0xff]
      %v403 = vld [vmem:[%s356 + $0x90] sm:$0xff]
      %v404 = vld [vmem:[%s356 + $0x98] sm:$0xff]
      %v405 = vld [vmem:[%s356 + $0xa0] sm:$0xff]
      %v406 = vld [vmem:[%s356 + $0xa8] sm:$0xff]
      %v407 = vld [vmem:[%s356 + $0xb0] sm:$0xff]
      %v408 = vld [vmem:[%s356 + $0xb8] sm:$0xff]
      %v409 = vld [vmem:[%s356 + $0xc0] sm:$0xff]
      %v410 = vld [vmem:[%s356 + $0xc8] sm:$0xff]
      %v411 = vld [vmem:[%s356 + $0xd0] sm:$0xff]
      %v412 = vld [vmem:[%s356 + $0xd8] sm:$0xff]
      %v413 = vld [vmem:[%s356 + $0xe0] sm:$0xff]
      %v414 = vld [vmem:[%s356 + $0xe8] sm:$0xff]
      %v415 = vld [vmem:[%s356 + $0xf0] sm:$0xff]
      %v416 = vld [vmem:[%s356 + $0xf8] sm:$0xff]
      %v417 = vld [vmem:[%s360] sm:$0x3]
      %v419 = vlaneseq
      %v420 = vshrl.u32 %v419, 7
      %v421 = vsub.s32 0, %v420
      %v422 = vrot.slane %v417, %v421
      %v423 = vlaneseq
      %v424 = vshrl.u32 %v423, 7
      %v425 = vsub.s32 1, %v424
      %v426 = vrot.slane %v417, %v425
      %v433 = vunpack.c.l.b16 %v381
      %v434 = vunpack.c.h.b16 %v381
      %v435 = vunpack.c.l.b16 %v382
      %v436 = vunpack.c.h.b16 %v382
      %v437 = vunpack.c.l.b16 %v383
      %v438 = vunpack.c.h.b16 %v383
      %v439 = vunpack.c.l.b16 %v384
      %v440 = vunpack.c.h.b16 %v384
      %v441 = vpack.c.b16 %v435, %v433
      %v442 = vpack.c.b16 %v436, %v434
      %v443 = vpack.c.b16 %v439, %v437
      %v444 = vpack.c.b16 %v440, %v438
      %v481 = vunpack.c.l.b16 %v385
      %v482 = vunpack.c.h.b16 %v385
      %v483 = vunpack.c.l.b16 %v386
      %v484 = vunpack.c.h.b16 %v386
      %v485 = vunpack.c.l.b16 %v387
      %v486 = vunpack.c.h.b16 %v387
      %v487 = vunpack.c.l.b16 %v388
      %v488 = vunpack.c.h.b16 %v388
      %v489 = vunpack.c.l.b16 %v389
      %v490 = vunpack.c.h.b16 %v389
      %v491 = vunpack.c.l.b16 %v390
      %v492 = vunpack.c.h.b16 %v390
      %v493 = vunpack.c.l.b16 %v391
      %v494 = vunpack.c.h.b16 %v391
      %v495 = vunpack.c.l.b16 %v392
      %v496 = vunpack.c.h.b16 %v392
      %v497 = vunpack.c.l.b16 %v393
      %v498 = vunpack.c.h.b16 %v393
      %v499 = vunpack.c.l.b16 %v394
      %v500 = vunpack.c.h.b16 %v394
      %v501 = vunpack.c.l.b16 %v395
      %v502 = vunpack.c.h.b16 %v395
      %v503 = vunpack.c.l.b16 %v396
      %v504 = vunpack.c.h.b16 %v396
      %v505 = vunpack.c.l.b16 %v397
      %v506 = vunpack.c.h.b16 %v397
      %v507 = vunpack.c.l.b16 %v398
      %v508 = vunpack.c.h.b16 %v398
      %v509 = vunpack.c.l.b16 %v399
      %v510 = vunpack.c.h.b16 %v399
      %v511 = vunpack.c.l.b16 %v400
      %v512 = vunpack.c.h.b16 %v400
      %v513 = vunpack.c.l.b16 %v401
      %v514 = vunpack.c.h.b16 %v401
      %v515 = vunpack.c.l.b16 %v402
      %v516 = vunpack.c.h.b16 %v402
      %v517 = vunpack.c.l.b16 %v403
      %v518 = vunpack.c.h.b16 %v403
      %v519 = vunpack.c.l.b16 %v404
      %v520 = vunpack.c.h.b16 %v404
      %v521 = vunpack.c.l.b16 %v405
      %v522 = vunpack.c.h.b16 %v405
      %v523 = vunpack.c.l.b16 %v406
      %v524 = vunpack.c.h.b16 %v406
      %v525 = vunpack.c.l.b16 %v407
      %v526 = vunpack.c.h.b16 %v407
      %v527 = vunpack.c.l.b16 %v408
      %v528 = vunpack.c.h.b16 %v408
      %v529 = vunpack.c.l.b16 %v409
      %v530 = vunpack.c.h.b16 %v409
      %v531 = vunpack.c.l.b16 %v410
      %v532 = vunpack.c.h.b16 %v410
      %v533 = vunpack.c.l.b16 %v411
      %v534 = vunpack.c.h.b16 %v411
      %v535 = vunpack.c.l.b16 %v412
      %v536 = vunpack.c.h.b16 %v412
      %v537 = vunpack.c.l.b16 %v413
      %v538 = vunpack.c.h.b16 %v413
      %v539 = vunpack.c.l.b16 %v414
      %v540 = vunpack.c.h.b16 %v414
      %v541 = vunpack.c.l.b16 %v415
      %v542 = vunpack.c.h.b16 %v415
      %v543 = vunpack.c.l.b16 %v416
      %v544 = vunpack.c.h.b16 %v416
      %v545 = vpack.c.b16 %v483, %v481
      %v546 = vpack.c.b16 %v484, %v482
      %v547 = vpack.c.b16 %v487, %v485
      %v548 = vpack.c.b16 %v488, %v486
      %v549 = vpack.c.b16 %v491, %v489
      %v550 = vpack.c.b16 %v492, %v490
      %v551 = vpack.c.b16 %v495, %v493
      %v552 = vpack.c.b16 %v496, %v494
      %v553 = vpack.c.b16 %v499, %v497
      %v554 = vpack.c.b16 %v500, %v498
      %v555 = vpack.c.b16 %v503, %v501
      %v556 = vpack.c.b16 %v504, %v502
      %v557 = vpack.c.b16 %v507, %v505
      %v558 = vpack.c.b16 %v508, %v506
      %v559 = vpack.c.b16 %v511, %v509
      %v560 = vpack.c.b16 %v512, %v510
      %v561 = vpack.c.b16 %v515, %v513
      %v562 = vpack.c.b16 %v516, %v514
      %v563 = vpack.c.b16 %v519, %v517
      %v564 = vpack.c.b16 %v520, %v518
      %v565 = vpack.c.b16 %v523, %v521
      %v566 = vpack.c.b16 %v524, %v522
      %v567 = vpack.c.b16 %v527, %v525
      %v568 = vpack.c.b16 %v528, %v526
      %v569 = vpack.c.b16 %v531, %v529
      %v570 = vpack.c.b16 %v532, %v530
      %v571 = vpack.c.b16 %v535, %v533
      %v572 = vpack.c.b16 %v536, %v534
      %v573 = vpack.c.b16 %v539, %v537
      %v574 = vpack.c.b16 %v540, %v538
      %v575 = vpack.c.b16 %v543, %v541
      %v576 = vpack.c.b16 %v544, %v542
      %609 = vmatprep.subr.bf16.mxu0 %v546
      %610 = vmatpush1.bf16.msra.mxu0 %v545
      %611 = vmatprep.subr.bf16.mxu0 %v548
      %612 = vmatpush1.bf16.msra.mxu0 %v547
      %613 = vmatprep.subr.bf16.mxu0 %v550
      %614 = vmatpush1.bf16.msra.mxu0 %v549
      %615 = vmatprep.subr.bf16.mxu0 %v552
      %616 = vmatpush1.bf16.msra.mxu0 %v551
      %617 = vmatprep.subr.bf16.mxu0 %v554
      %618 = vmatpush1.bf16.msra.mxu0 %v553
      %619 = vmatprep.subr.bf16.mxu0 %v556
      %620 = vmatpush1.bf16.msra.mxu0 %v555
      %621 = vmatprep.subr.bf16.mxu0 %v558
      %622 = vmatpush1.bf16.msra.mxu0 %v557
      %623 = vmatprep.subr.bf16.mxu0 %v560
      %624 = vmatpush1.bf16.msra.mxu0 %v559
      %625 = vmatprep.subr.bf16.mxu0 %v562
      %626 = vmatpush1.bf16.msra.mxu0 %v561
      %627 = vmatprep.subr.bf16.mxu0 %v564
      %628 = vmatpush1.bf16.msra.mxu0 %v563
      %629 = vmatprep.subr.bf16.mxu0 %v566
      %630 = vmatpush1.bf16.msra.mxu0 %v565
      %631 = vmatprep.subr.bf16.mxu0 %v568
      %632 = vmatpush1.bf16.msra.mxu0 %v567
      %633 = vmatprep.subr.bf16.mxu0 %v570
      %634 = vmatpush1.bf16.msra.mxu0 %v569
      %635 = vmatprep.subr.bf16.mxu0 %v572
      %636 = vmatpush1.bf16.msra.mxu0 %v571
      %637 = vmatprep.subr.bf16.mxu0 %v574
      %638 = vmatpush1.bf16.msra.mxu0 %v573
      %639 = vmatprep.subr.bf16.mxu0 %v576
      %640 = vmatpush1.bf16.msra.mxu0 %v575
      %641 = vmatprep.mubr.bf16.mxu0 %v442
      %642 = vmatmul.mubr.bf16.gmra.mrb[0].mxu0 %v441
      %v643 = vpop.f32.mrb[0].mxu0
      %v644 = vadd.f32 %v422, %v643
      %v645 = vpop.f32.mrb[0].mxu0
      %v646 = vadd.f32 %v426, %v645
      %v647 = vpop.f32.mrb[0].mxu0
      %v648 = vadd.f32 %v422, %v647
      %v649 = vpop.f32.mrb[0].mxu0
      %v650 = vadd.f32 %v426, %v649
      %651 = vmatprep.mubr.bf16.mxu0 %v444
      %652 = vmatmul.mubr.bf16.gmra.mrb[0].mxu0 %v443
      %v653 = vpop.f32.mrb[0].mxu0
      %v654 = vadd.f32 %v422, %v653
      %v655 = vpop.f32.mrb[0].mxu0
      %v656 = vadd.f32 %v426, %v655
      %v657 = vpop.f32.mrb[0].mxu0
      %v658 = vadd.f32 %v422, %v657
      %v659 = vpop.f32.mrb[0].mxu0
      %v660 = vadd.f32 %v426, %v659
      %661 = vdwg.mxu0
      %662 = vst [vmem:[#allocation2] sm:$0xf] 0.0
      %663 = vst [vmem:[#allocation2 + $0x8] sm:$0xf] 0.0
      %664 = vst [vmem:[#allocation2 + $0x30] sm:$0xf] 0.0
      %665 = vst [vmem:[#allocation2 + $0x38] sm:$0xf] 0.0
      %666 = vst [vmem:[#allocation2 + $0x20] sm:$0xf0] 0.0
      %667 = vst [vmem:[#allocation2 + $0x28] sm:$0xf0] 0.0
      %668 = vst [vmem:[#allocation2 + $0x50] sm:$0xf0] 0.0
      %669 = vst [vmem:[#allocation2 + $0x58] sm:$0xf0] 0.0
      %vm678 = vcmask 1043456
      %v679 = vrot.slane %v644, 4
      %v680 = vrot.slane %v646, 4
      %v681 = vrot.slane %v648, 4
      %v682 = vsel %vm678, %v679, %v681
      %v683 = vrot.slane %v650, 4
      %v684 = vsel %vm678, %v680, %v683
      %v685 = vrot.slane %v654, 4
      %v686 = vrot.slane %v656, 4
      %v687 = vrot.slane %v658, 4
      %v688 = vsel %vm678, %v685, %v687
      %v689 = vrot.slane %v660, 4
      %v690 = vsel %vm678, %v686, %v689
      %703 = vst [vmem:[#allocation2] sm:$0xf0] %v679
      %704 = vst [vmem:[#allocation2 + $0x8] sm:$0xf0] %v680
      %705 = vst [vmem:[#allocation2 + $0x10] sm:$0xff] %v682
      %706 = vst [vmem:[#allocation2 + $0x18] sm:$0xff] %v684
      %707 = vst [vmem:[#allocation2 + $0x20] sm:$0xf] %v681
      %708 = vst [vmem:[#allocation2 + $0x28] sm:$0xf] %v683
      %709 = vst [vmem:[#allocation2 + $0x30] sm:$0xf0] %v685
      %710 = vst [vmem:[#allocation2 + $0x38] sm:$0xf0] %v686
      %711 = vst [vmem:[#allocation2 + $0x40] sm:$0xff] %v688
      %712 = vst [vmem:[#allocation2 + $0x48] sm:$0xff] %v690
      %713 = vst [vmem:[#allocation2 + $0x50] sm:$0xf] %v687
      %714 = vst [vmem:[#allocation2 + $0x58] sm:$0xf] %v689
      %v715 = vld [vmem:[#allocation2] sm:$0xff]
      %v716 = vld [vmem:[#allocation2 + $0x8] sm:$0xff]
      %v717 = vld [vmem:[#allocation2 + $0x10] sm:$0xff]
      %v718 = vld [vmem:[#allocation2 + $0x18] sm:$0xff]
      %v719 = vld [vmem:[#allocation2 + $0x30] sm:$0xff]
      %v720 = vld [vmem:[#allocation2 + $0x38] sm:$0xff]
      %v721 = vld [vmem:[#allocation2 + $0x40] sm:$0xff]
      %v722 = vld [vmem:[#allocation2 + $0x48] sm:$0xff]
      %v723 = vpack.c.bf16 %v717, %v715
      %v724 = vpack.c.bf16 %v718, %v716
      %v725 = vpack.c.bf16 %v721, %v719
      %v726 = vpack.c.bf16 %v722, %v720
      %v727 = vld [vmem:[%s365] sm:$0xff]
      %v728 = vld [vmem:[%s365 + $0x8] sm:$0xff]
      %v729 = vld [vmem:[%s365 + $0x10] sm:$0xff]
      %v730 = vld [vmem:[%s365 + $0x18] sm:$0xff]
      %v731 = vld [vmem:[%s365 + $0x20] sm:$0xff]
      %v732 = vld [vmem:[%s365 + $0x28] sm:$0xff]
      %v733 = vld [vmem:[%s365 + $0x30] sm:$0xff]
      %v734 = vld [vmem:[%s365 + $0x38] sm:$0xff]
      %v735 = vld [vmem:[%s365 + $0x40] sm:$0xff]
      %v736 = vld [vmem:[%s365 + $0x48] sm:$0xff]
      %v737 = vld [vmem:[%s365 + $0x50] sm:$0xff]
      %v738 = vld [vmem:[%s365 + $0x58] sm:$0xff]
      %v739 = vld [vmem:[%s365 + $0x60] sm:$0xff]
      %v740 = vld [vmem:[%s365 + $0x68] sm:$0xff]
      %v741 = vld [vmem:[%s365 + $0x70] sm:$0xff]
      %v742 = vld [vmem:[%s365 + $0x78] sm:$0xff]
      %v743 = vld [vmem:[%s365 + $0x80] sm:$0xff]
      %v744 = vld [vmem:[%s365 + $0x88] sm:$0xff]
      %v745 = vld [vmem:[%s365 + $0x90] sm:$0xff]
      %v746 = vld [vmem:[%s365 + $0x98] sm:$0xff]
      %v747 = vld [vmem:[%s365 + $0xa0] sm:$0xff]
      %v748 = vld [vmem:[%s365 + $0xa8] sm:$0xff]
      %v749 = vld [vmem:[%s365 + $0xb0] sm:$0xff]
      %v750 = vld [vmem:[%s365 + $0xb8] sm:$0xff]
      %v751 = vld [vmem:[%s365 + $0xc0] sm:$0xff]
      %v752 = vld [vmem:[%s365 + $0xc8] sm:$0xff]
      %v753 = vld [vmem:[%s365 + $0xd0] sm:$0xff]
      %v754 = vld [vmem:[%s365 + $0xd8] sm:$0xff]
      %v755 = vld [vmem:[%s365 + $0xe0] sm:$0xff]
      %v756 = vld [vmem:[%s365 + $0xe8] sm:$0xff]
      %v757 = vld [vmem:[%s365 + $0xf0] sm:$0xff]
      %v758 = vld [vmem:[%s365 + $0xf8] sm:$0xff]
      %v759 = vld [vmem:[#allocation2] sm:$0xfe]
      %v760 = vld [vmem:[#allocation2 + $0x8] sm:$0xfe]
      %v761 = vld [vmem:[#allocation2 + $0x10] sm:$0xff]
      %v762 = vld [vmem:[#allocation2 + $0x18] sm:$0xff]
      %v763 = vld [vmem:[#allocation2 + $0x20] sm:$0x1]
      %v764 = vld [vmem:[#allocation2 + $0x28] sm:$0x1]
      %v765 = vld [vmem:[#allocation2 + $0x30] sm:$0xfe]
      %v766 = vld [vmem:[#allocation2 + $0x38] sm:$0xfe]
      %v767 = vld [vmem:[#allocation2 + $0x40] sm:$0xff]
      %v768 = vld [vmem:[#allocation2 + $0x48] sm:$0xff]
      %v769 = vld [vmem:[#allocation2 + $0x50] sm:$0x1]
      %v770 = vld [vmem:[#allocation2 + $0x58] sm:$0x1]
      %vm783 = vcmask 1046528
      %v784 = vrot.slane %v759, 1
      %v785 = vrot.slane %v761, 1
      %v786 = vsel %vm783, %v784, %v785
      %v787 = vrot.slane %v760, 1
      %v788 = vrot.slane %v762, 1
      %v789 = vsel %vm783, %v787, %v788
      %v790 = vrot.slane %v763, 1
      %v791 = vsel %vm783, %v785, %v790
      %v792 = vrot.slane %v764, 1
      %v793 = vsel %vm783, %v788, %v792
      %v794 = vrot.slane %v765, 1
      %v795 = vrot.slane %v767, 1
      %v796 = vsel %vm783, %v794, %v795
      %v797 = vrot.slane %v766, 1
      %v798 = vrot.slane %v768, 1
      %v799 = vsel %vm783, %v797, %v798
      %v800 = vrot.slane %v769, 1
      %v801 = vsel %vm783, %v795, %v800
      %v802 = vrot.slane %v770, 1
      %v803 = vsel %vm783, %v798, %v802
      %v812 = vpack.c.bf16 %v791, %v786
      %v813 = vpack.c.bf16 %v793, %v789
      %v814 = vpack.c.bf16 %v801, %v796
      %v815 = vpack.c.bf16 %v803, %v799
      %s816 = scalar_lea.vmem %s365, 256
      %v817 = vld [vmem:[%s816] sm:$0xff]
      %v818 = vld [vmem:[%s816 + $0x8] sm:$0xff]
      %v819 = vld [vmem:[%s816 + $0x10] sm:$0xff]
      %v820 = vld [vmem:[%s816 + $0x18] sm:$0xff]
      %v821 = vld [vmem:[%s816 + $0x20] sm:$0xff]
      %v822 = vld [vmem:[%s816 + $0x28] sm:$0xff]
      %v823 = vld [vmem:[%s816 + $0x30] sm:$0xff]
      %v824 = vld [vmem:[%s816 + $0x38] sm:$0xff]
      %v825 = vld [vmem:[%s816 + $0x40] sm:$0xff]
      %v826 = vld [vmem:[%s816 + $0x48] sm:$0xff]
      %v827 = vld [vmem:[%s816 + $0x50] sm:$0xff]
      %v828 = vld [vmem:[%s816 + $0x58] sm:$0xff]
      %v829 = vld [vmem:[%s816 + $0x60] sm:$0xff]
      %v830 = vld [vmem:[%s816 + $0x68] sm:$0xff]
      %v831 = vld [vmem:[%s816 + $0x70] sm:$0xff]
      %v832 = vld [vmem:[%s816 + $0x78] sm:$0xff]
      %v833 = vld [vmem:[%s816 + $0x80] sm:$0xff]
      %v834 = vld [vmem:[%s816 + $0x88] sm:$0xff]
      %v835 = vld [vmem:[%s816 + $0x90] sm:$0xff]
      %v836 = vld [vmem:[%s816 + $0x98] sm:$0xff]
      %v837 = vld [vmem:[%s816 + $0xa0] sm:$0xff]
      %v838 = vld [vmem:[%s816 + $0xa8] sm:$0xff]
      %v839 = vld [vmem:[%s816 + $0xb0] sm:$0xff]
      %v840 = vld [vmem:[%s816 + $0xb8] sm:$0xff]
      %v841 = vld [vmem:[%s816 + $0xc0] sm:$0xff]
      %v842 = vld [vmem:[%s816 + $0xc8] sm:$0xff]
      %v843 = vld [vmem:[%s816 + $0xd0] sm:$0xff]
      %v844 = vld [vmem:[%s816 + $0xd8] sm:$0xff]
      %v845 = vld [vmem:[%s816 + $0xe0] sm:$0xff]
      %v846 = vld [vmem:[%s816 + $0xe8] sm:$0xff]
      %v847 = vld [vmem:[%s816 + $0xf0] sm:$0xff]
      %v848 = vld [vmem:[%s816 + $0xf8] sm:$0xff]
      %v881 = vunpack.c.l.b16 %v817
      %v882 = vunpack.c.h.b16 %v817
      %v883 = vunpack.c.l.b16 %v818
      %v884 = vunpack.c.h.b16 %v818
      %v885 = vunpack.c.l.b16 %v819
      %v886 = vunpack.c.h.b16 %v819
      %v887 = vunpack.c.l.b16 %v820
      %v888 = vunpack.c.h.b16 %v820
      %v889 = vunpack.c.l.b16 %v821
      %v890 = vunpack.c.h.b16 %v821
      %v891 = vunpack.c.l.b16 %v822
      %v892 = vunpack.c.h.b16 %v822
      %v893 = vunpack.c.l.b16 %v823
      %v894 = vunpack.c.h.b16 %v823
      %v895 = vunpack.c.l.b16 %v824
      %v896 = vunpack.c.h.b16 %v824
      %v897 = vunpack.c.l.b16 %v825
      %v898 = vunpack.c.h.b16 %v825
      %v899 = vunpack.c.l.b16 %v826
      %v900 = vunpack.c.h.b16 %v826
      %v901 = vunpack.c.l.b16 %v827
      %v902 = vunpack.c.h.b16 %v827
      %v903 = vunpack.c.l.b16 %v828
      %v904 = vunpack.c.h.b16 %v828
      %v905 = vunpack.c.l.b16 %v829
      %v906 = vunpack.c.h.b16 %v829
      %v907 = vunpack.c.l.b16 %v830
      %v908 = vunpack.c.h.b16 %v830
      %v909 = vunpack.c.l.b16 %v831
      %v910 = vunpack.c.h.b16 %v831
      %v911 = vunpack.c.l.b16 %v832
      %v912 = vunpack.c.h.b16 %v832
      %v913 = vunpack.c.l.b16 %v833
      %v914 = vunpack.c.h.b16 %v833
      %v915 = vunpack.c.l.b16 %v834
      %v916 = vunpack.c.h.b16 %v834
      %v917 = vunpack.c.l.b16 %v835
      %v918 = vunpack.c.h.b16 %v835
      %v919 = vunpack.c.l.b16 %v836
      %v920 = vunpack.c.h.b16 %v836
      %v921 = vunpack.c.l.b16 %v837
      %v922 = vunpack.c.h.b16 %v837
      %v923 = vunpack.c.l.b16 %v838
      %v924 = vunpack.c.h.b16 %v838
      %v925 = vunpack.c.l.b16 %v839
      %v926 = vunpack.c.h.b16 %v839
      %v927 = vunpack.c.l.b16 %v840
      %v928 = vunpack.c.h.b16 %v840
      %v929 = vunpack.c.l.b16 %v841
      %v930 = vunpack.c.h.b16 %v841
      %v931 = vunpack.c.l.b16 %v842
      %v932 = vunpack.c.h.b16 %v842
      %v933 = vunpack.c.l.b16 %v843
      %v934 = vunpack.c.h.b16 %v843
      %v935 = vunpack.c.l.b16 %v844
      %v936 = vunpack.c.h.b16 %v844
      %v937 = vunpack.c.l.b16 %v845
      %v938 = vunpack.c.h.b16 %v845
      %v939 = vunpack.c.l.b16 %v846
      %v940 = vunpack.c.h.b16 %v846
      %v941 = vunpack.c.l.b16 %v847
      %v942 = vunpack.c.h.b16 %v847
      %v943 = vunpack.c.l.b16 %v848
      %v944 = vunpack.c.h.b16 %v848
      %v945 = vpack.c.b16 %v883, %v881
      %v946 = vpack.c.b16 %v884, %v882
      %v947 = vpack.c.b16 %v887, %v885
      %v948 = vpack.c.b16 %v888, %v886
      %v949 = vpack.c.b16 %v891, %v889
      %v950 = vpack.c.b16 %v892, %v890
      %v951 = vpack.c.b16 %v895, %v893
      %v952 = vpack.c.b16 %v896, %v894
      %v953 = vpack.c.b16 %v899, %v897
      %v954 = vpack.c.b16 %v900, %v898
      %v955 = vpack.c.b16 %v903, %v901
      %v956 = vpack.c.b16 %v904, %v902
      %v957 = vpack.c.b16 %v907, %v905
      %v958 = vpack.c.b16 %v908, %v906
      %v959 = vpack.c.b16 %v911, %v909
      %v960 = vpack.c.b16 %v912, %v910
      %v961 = vpack.c.b16 %v915, %v913
      %v962 = vpack.c.b16 %v916, %v914
      %v963 = vpack.c.b16 %v919, %v917
      %v964 = vpack.c.b16 %v920, %v918
      %v965 = vpack.c.b16 %v923, %v921
      %v966 = vpack.c.b16 %v924, %v922
      %v967 = vpack.c.b16 %v927, %v925
      %v968 = vpack.c.b16 %v928, %v926
      %v969 = vpack.c.b16 %v931, %v929
      %v970 = vpack.c.b16 %v932, %v930
      %v971 = vpack.c.b16 %v935, %v933
      %v972 = vpack.c.b16 %v936, %v934
      %v973 = vpack.c.b16 %v939, %v937
      %v974 = vpack.c.b16 %v940, %v938
      %v975 = vpack.c.b16 %v943, %v941
      %v976 = vpack.c.b16 %v944, %v942
      %1009 = vmatprep.subr.bf16.mxu0 %v946
      %1010 = vmatpush1.bf16.msra.mxu0 %v945
      %1011 = vmatprep.subr.bf16.mxu0 %v948
      %1012 = vmatpush1.bf16.msra.mxu0 %v947
      %1013 = vmatprep.subr.bf16.mxu0 %v950
      %1014 = vmatpush1.bf16.msra.mxu0 %v949
      %1015 = vmatprep.subr.bf16.mxu0 %v952
      %1016 = vmatpush1.bf16.msra.mxu0 %v951
      %1017 = vmatprep.subr.bf16.mxu0 %v954
      %1018 = vmatpush1.bf16.msra.mxu0 %v953
      %1019 = vmatprep.subr.bf16.mxu0 %v956
      %1020 = vmatpush1.bf16.msra.mxu0 %v955
      %1021 = vmatprep.subr.bf16.mxu0 %v958
      %1022 = vmatpush1.bf16.msra.mxu0 %v957
      %1023 = vmatprep.subr.bf16.mxu0 %v960
      %1024 = vmatpush1.bf16.msra.mxu0 %v959
      %1025 = vmatprep.subr.bf16.mxu0 %v962
      %1026 = vmatpush1.bf16.msra.mxu0 %v961
      %1027 = vmatprep.subr.bf16.mxu0 %v964
      %1028 = vmatpush1.bf16.msra.mxu0 %v963
      %1029 = vmatprep.subr.bf16.mxu0 %v966
      %1030 = vmatpush1.bf16.msra.mxu0 %v965
      %1031 = vmatprep.subr.bf16.mxu0 %v968
      %1032 = vmatpush1.bf16.msra.mxu0 %v967
      %1033 = vmatprep.subr.bf16.mxu0 %v970
      %1034 = vmatpush1.bf16.msra.mxu0 %v969
      %1035 = vmatprep.subr.bf16.mxu0 %v972
      %1036 = vmatpush1.bf16.msra.mxu0 %v971
      %1037 = vmatprep.subr.bf16.mxu0 %v974
      %1038 = vmatpush1.bf16.msra.mxu0 %v973
      %1039 = vmatprep.subr.bf16.mxu0 %v976
      %1040 = vmatpush1.bf16.msra.mxu0 %v975
      %1041 = vmatprep.mubr.bf16.mxu0 %v813
      %1042 = vmatmul.mubr.bf16.gmra.mrb[0].mxu0 %v812
      %v1043 = vpop.f32.mrb[0].mxu0
      %v1044 = vadd.f32 0.0, %v1043
      %v1045 = vpop.f32.mrb[0].mxu0
      %v1046 = vadd.f32 0.0, %v1045
      %v1047 = vpop.f32.mrb[0].mxu0
      %v1048 = vadd.f32 0.0, %v1047
      %v1049 = vpop.f32.mrb[0].mxu0
      %v1050 = vadd.f32 0.0, %v1049
      %1051 = vmatprep.mubr.bf16.mxu0 %v815
      %1052 = vmatmul.mubr.bf16.gmra.mrb[0].mxu0 %v814
      %v1053 = vpop.f32.mrb[0].mxu0
      %v1054 = vadd.f32 0.0, %v1053
      %v1055 = vpop.f32.mrb[0].mxu0
      %v1056 = vadd.f32 0.0, %v1055
      %v1057 = vpop.f32.mrb[0].mxu0
      %v1058 = vadd.f32 0.0, %v1057
      %v1059 = vpop.f32.mrb[0].mxu0
      %v1060 = vadd.f32 0.0, %v1059
      %1061 = vdwg.mxu0
      %v1094 = vunpack.c.l.b16 %v727
      %v1095 = vunpack.c.h.b16 %v727
      %v1096 = vunpack.c.l.b16 %v728
      %v1097 = vunpack.c.h.b16 %v728
      %v1098 = vunpack.c.l.b16 %v729
      %v1099 = vunpack.c.h.b16 %v729
      %v1100 = vunpack.c.l.b16 %v730
      %v1101 = vunpack.c.h.b16 %v730
      %v1102 = vunpack.c.l.b16 %v731
      %v1103 = vunpack.c.h.b16 %v731
      %v1104 = vunpack.c.l.b16 %v732
      %v1105 = vunpack.c.h.b16 %v732
      %v1106 = vunpack.c.l.b16 %v733
      %v1107 = vunpack.c.h.b16 %v733
      %v1108 = vunpack.c.l.b16 %v734
      %v1109 = vunpack.c.h.b16 %v734
      %v1110 = vunpack.c.l.b16 %v735
      %v1111 = vunpack.c.h.b16 %v735
      %v1112 = vunpack.c.l.b16 %v736
      %v1113 = vunpack.c.h.b16 %v736
      %v1114 = vunpack.c.l.b16 %v737
      %v1115 = vunpack.c.h.b16 %v737
      %v1116 = vunpack.c.l.b16 %v738
      %v1117 = vunpack.c.h.b16 %v738
      %v1118 = vunpack.c.l.b16 %v739
      %v1119 = vunpack.c.h.b16 %v739
      %v1120 = vunpack.c.l.b16 %v740
      %v1121 = vunpack.c.h.b16 %v740
      %v1122 = vunpack.c.l.b16 %v741
      %v1123 = vunpack.c.h.b16 %v741
      %v1124 = vunpack.c.l.b16 %v742
      %v1125 = vunpack.c.h.b16 %v742
      %v1126 = vunpack.c.l.b16 %v743
      %v1127 = vunpack.c.h.b16 %v743
      %v1128 = vunpack.c.l.b16 %v744
      %v1129 = vunpack.c.h.b16 %v744
      %v1130 = vunpack.c.l.b16 %v745
      %v1131 = vunpack.c.h.b16 %v745
      %v1132 = vunpack.c.l.b16 %v746
      %v1133 = vunpack.c.h.b16 %v746
      %v1134 = vunpack.c.l.b16 %v747
      %v1135 = vunpack.c.h.b16 %v747
      %v1136 = vunpack.c.l.b16 %v748
      %v1137 = vunpack.c.h.b16 %v748
      %v1138 = vunpack.c.l.b16 %v749
      %v1139 = vunpack.c.h.b16 %v749
      %v1140 = vunpack.c.l.b16 %v750
      %v1141 = vunpack.c.h.b16 %v750
      %v1142 = vunpack.c.l.b16 %v751
      %v1143 = vunpack.c.h.b16 %v751
      %v1144 = vunpack.c.l.b16 %v752
      %v1145 = vunpack.c.h.b16 %v752
      %v1146 = vunpack.c.l.b16 %v753
      %v1147 = vunpack.c.h.b16 %v753
      %v1148 = vunpack.c.l.b16 %v754
      %v1149 = vunpack.c.h.b16 %v754
      %v1150 = vunpack.c.l.b16 %v755
      %v1151 = vunpack.c.h.b16 %v755
      %v1152 = vunpack.c.l.b16 %v756
      %v1153 = vunpack.c.h.b16 %v756
      %v1154 = vunpack.c.l.b16 %v757
      %v1155 = vunpack.c.h.b16 %v757
      %v1156 = vunpack.c.l.b16 %v758
      %v1157 = vunpack.c.h.b16 %v758
      %v1158 = vpack.c.b16 %v1096, %v1094
      %v1159 = vpack.c.b16 %v1097, %v1095
      %v1160 = vpack.c.b16 %v1100, %v1098
      %v1161 = vpack.c.b16 %v1101, %v1099
      %v1162 = vpack.c.b16 %v1104, %v1102
      %v1163 = vpack.c.b16 %v1105, %v1103
      %v1164 = vpack.c.b16 %v1108, %v1106
      %v1165 = vpack.c.b16 %v1109, %v1107
      %v1166 = vpack.c.b16 %v1112, %v1110
      %v1167 = vpack.c.b16 %v1113, %v1111
      %v1168 = vpack.c.b16 %v1116, %v1114
      %v1169 = vpack.c.b16 %v1117, %v1115
      %v1170 = vpack.c.b16 %v1120, %v1118
      %v1171 = vpack.c.b16 %v1121, %v1119
      %v1172 = vpack.c.b16 %v1124, %v1122
      %v1173 = vpack.c.b16 %v1125, %v1123
      %v1174 = vpack.c.b16 %v1128, %v1126
      %v1175 = vpack.c.b16 %v1129, %v1127
      %v1176 = vpack.c.b16 %v1132, %v1130
      %v1177 = vpack.c.b16 %v1133, %v1131
      %v1178 = vpack.c.b16 %v1136, %v1134
      %v1179 = vpack.c.b16 %v1137, %v1135
      %v1180 = vpack.c.b16 %v1140, %v1138
      %v1181 = vpack.c.b16 %v1141, %v1139
      %v1182 = vpack.c.b16 %v1144, %v1142
      %v1183 = vpack.c.b16 %v1145, %v1143
      %v1184 = vpack.c.b16 %v1148, %v1146
      %v1185 = vpack.c.b16 %v1149, %v1147
      %v1186 = vpack.c.b16 %v1152, %v1150
      %v1187 = vpack.c.b16 %v1153, %v1151
      %v1188 = vpack.c.b16 %v1156, %v1154
      %v1189 = vpack.c.b16 %v1157, %v1155
      %1222 = vmatprep.subr.bf16.mxu0 %v1159
      %1223 = vmatpush1.bf16.msra.mxu0 %v1158
      %1224 = vmatprep.subr.bf16.mxu0 %v1161
      %1225 = vmatpush1.bf16.msra.mxu0 %v1160
      %1226 = vmatprep.subr.bf16.mxu0 %v1163
      %1227 = vmatpush1.bf16.msra.mxu0 %v1162
      %1228 = vmatprep.subr.bf16.mxu0 %v1165
      %1229 = vmatpush1.bf16.msra.mxu0 %v1164
      %1230 = vmatprep.subr.bf16.mxu0 %v1167
      %1231 = vmatpush1.bf16.msra.mxu0 %v1166
      %1232 = vmatprep.subr.bf16.mxu0 %v1169
      %1233 = vmatpush1.bf16.msra.mxu0 %v1168
      %1234 = vmatprep.subr.bf16.mxu0 %v1171
      %1235 = vmatpush1.bf16.msra.mxu0 %v1170
      %1236 = vmatprep.subr.bf16.mxu0 %v1173
      %1237 = vmatpush1.bf16.msra.mxu0 %v1172
      %1238 = vmatprep.subr.bf16.mxu0 %v1175
      %1239 = vmatpush1.bf16.msra.mxu0 %v1174
      %1240 = vmatprep.subr.bf16.mxu0 %v1177
      %1241 = vmatpush1.bf16.msra.mxu0 %v1176
      %1242 = vmatprep.subr.bf16.mxu0 %v1179
      %1243 = vmatpush1.bf16.msra.mxu0 %v1178
      %1244 = vmatprep.subr.bf16.mxu0 %v1181
      %1245 = vmatpush1.bf16.msra.mxu0 %v1180
      %1246 = vmatprep.subr.bf16.mxu0 %v1183
      %1247 = vmatpush1.bf16.msra.mxu0 %v1182
      %1248 = vmatprep.subr.bf16.mxu0 %v1185
      %1249 = vmatpush1.bf16.msra.mxu0 %v1184
      %1250 = vmatprep.subr.bf16.mxu0 %v1187
      %1251 = vmatpush1.bf16.msra.mxu0 %v1186
      %1252 = vmatprep.subr.bf16.mxu0 %v1189
      %1253 = vmatpush1.bf16.msra.mxu0 %v1188
      %1254 = vmatprep.mubr.bf16.mxu0 %v724
      %1255 = vmatmul.mubr.bf16.gmra.mrb[0].mxu0 %v723
      %v1256 = vpop.f32.mrb[0].mxu0
      %v1257 = vadd.f32 %v1044, %v1256
      %v1258 = vpop.f32.mrb[0].mxu0
      %v1259 = vadd.f32 %v1046, %v1258
      %v1260 = vpop.f32.mrb[0].mxu0
      %v1261 = vadd.f32 %v1048, %v1260
      %v1262 = vpop.f32.mrb[0].mxu0
      %v1263 = vadd.f32 %v1050, %v1262
      %1264 = vmatprep.mubr.bf16.mxu0 %v726
      %1265 = vmatmul.mubr.bf16.gmra.mrb[0].mxu0 %v725
      %v1266 = vpop.f32.mrb[0].mxu0
      %v1267 = vadd.f32 %v1054, %v1266
      %v1268 = vpop.f32.mrb[0].mxu0
      %v1269 = vadd.f32 %v1056, %v1268
      %v1270 = vpop.f32.mrb[0].mxu0
      %v1271 = vadd.f32 %v1058, %v1270
      %v1272 = vpop.f32.mrb[0].mxu0
      %v1273 = vadd.f32 %v1060, %v1272
      %1274 = vdwg.mxu0
      %v1275 = vld [vmem:[#allocation2] sm:$0xfc]
      %v1276 = vld [vmem:[#allocation2 + $0x8] sm:$0xfc]
      %v1277 = vld [vmem:[#allocation2 + $0x20] sm:$0x3]
      %v1278 = vld [vmem:[#allocation2 + $0x28] sm:$0x3]
      %v1279 = vld [vmem:[#allocation2 + $0x30] sm:$0xfc]
      %v1280 = vld [vmem:[#allocation2 + $0x38] sm:$0xfc]
      %v1281 = vld [vmem:[#allocation2 + $0x50] sm:$0x3]
      %v1282 = vld [vmem:[#allocation2 + $0x58] sm:$0x3]
      %vm1291 = vcmask 1045504
      %v1292 = vrot.slane %v1275, 2
      %v1293 = vrot.slane %v761, 2
      %v1294 = vsel %vm1291, %v1292, %v1293
      %v1295 = vrot.slane %v1276, 2
      %v1296 = vrot.slane %v762, 2
      %v1297 = vsel %vm1291, %v1295, %v1296
      %v1298 = vrot.slane %v1277, 2
      %v1299 = vsel %vm1291, %v1293, %v1298
      %v1300 = vrot.slane %v1278, 2
      %v1301 = vsel %vm1291, %v1296, %v1300
      %v1302 = vrot.slane %v1279, 2
      %v1303 = vrot.slane %v767, 2
      %v1304 = vsel %vm1291, %v1302, %v1303
      %v1305 = vrot.slane %v1280, 2
      %v1306 = vrot.slane %v768, 2
      %v1307 = vsel %vm1291, %v1305, %v1306
      %v1308 = vrot.slane %v1281, 2
      %v1309 = vsel %vm1291, %v1303, %v1308
      %v1310 = vrot.slane %v1282, 2
      %v1311 = vsel %vm1291, %v1306, %v1310
      %v1320 = vpack.c.bf16 %v1299, %v1294
      %v1321 = vpack.c.bf16 %v1301, %v1297
      %v1322 = vpack.c.bf16 %v1309, %v1304
      %v1323 = vpack.c.bf16 %v1311, %v1307
      %s1324 = scalar_lea.vmem %s365, 512
      %v1325 = vld [vmem:[%s1324] sm:$0xff]
      %v1326 = vld [vmem:[%s1324 + $0x8] sm:$0xff]
      %v1327 = vld [vmem:[%s1324 + $0x10] sm:$0xff]
      %v1328 = vld [vmem:[%s1324 + $0x18] sm:$0xff]
      %v1329 = vld [vmem:[%s1324 + $0x20] sm:$0xff]
      %v1330 = vld [vmem:[%s1324 + $0x28] sm:$0xff]
      %v1331 = vld [vmem:[%s1324 + $0x30] sm:$0xff]
      %v1332 = vld [vmem:[%s1324 + $0x38] sm:$0xff]
      %v1333 = vld [vmem:[%s1324 + $0x40] sm:$0xff]
      %v1334 = vld [vmem:[%s1324 + $0x48] sm:$0xff]
      %v1335 = vld [vmem:[%s1324 + $0x50] sm:$0xff]
      %v1336 = vld [vmem:[%s1324 + $0x58] sm:$0xff]
      %v1337 = vld [vmem:[%s1324 + $0x60] sm:$0xff]
      %v1338 = vld [vmem:[%s1324 + $0x68] sm:$0xff]
      %v1339 = vld [vmem:[%s1324 + $0x70] sm:$0xff]
      %v1340 = vld [vmem:[%s1324 + $0x78] sm:$0xff]
      %v1341 = vld [vmem:[%s1324 + $0x80] sm:$0xff]
      %v1342 = vld [vmem:[%s1324 + $0x88] sm:$0xff]
      %v1343 = vld [vmem:[%s1324 + $0x90] sm:$0xff]
      %v1344 = vld [vmem:[%s1324 + $0x98] sm:$0xff]
      %v1345 = vld [vmem:[%s1324 + $0xa0] sm:$0xff]
      %v1346 = vld [vmem:[%s1324 + $0xa8] sm:$0xff]
      %v1347 = vld [vmem:[%s1324 + $0xb0] sm:$0xff]
      %v1348 = vld [vmem:[%s1324 + $0xb8] sm:$0xff]
      %v1349 = vld [vmem:[%s1324 + $0xc0] sm:$0xff]
      %v1350 = vld [vmem:[%s1324 + $0xc8] sm:$0xff]
      %v1351 = vld [vmem:[%s1324 + $0xd0] sm:$0xff]
      %v1352 = vld [vmem:[%s1324 + $0xd8] sm:$0xff]
      %v1353 = vld [vmem:[%s1324 + $0xe0] sm:$0xff]
      %v1354 = vld [vmem:[%s1324 + $0xe8] sm:$0xff]
      %v1355 = vld [vmem:[%s1324 + $0xf0] sm:$0xff]
      %v1356 = vld [vmem:[%s1324 + $0xf8] sm:$0xff]
      %v1389 = vunpack.c.l.b16 %v1325
      %v1390 = vunpack.c.h.b16 %v1325
      %v1391 = vunpack.c.l.b16 %v1326
      %v1392 = vunpack.c.h.b16 %v1326
      %v1393 = vunpack.c.l.b16 %v1327
      %v1394 = vunpack.c.h.b16 %v1327
      %v1395 = vunpack.c.l.b16 %v1328
      %v1396 = vunpack.c.h.b16 %v1328
      %v1397 = vunpack.c.l.b16 %v1329
      %v1398 = vunpack.c.h.b16 %v1329
      %v1399 = vunpack.c.l.b16 %v1330
      %v1400 = vunpack.c.h.b16 %v1330
      %v1401 = vunpack.c.l.b16 %v1331
      %v1402 = vunpack.c.h.b16 %v1331
      %v1403 = vunpack.c.l.b16 %v1332
      %v1404 = vunpack.c.h.b16 %v1332
      %v1405 = vunpack.c.l.b16 %v1333
      %v1406 = vunpack.c.h.b16 %v1333
      %v1407 = vunpack.c.l.b16 %v1334
      %v1408 = vunpack.c.h.b16 %v1334
      %v1409 = vunpack.c.l.b16 %v1335
      %v1410 = vunpack.c.h.b16 %v1335
      %v1411 = vunpack.c.l.b16 %v1336
      %v1412 = vunpack.c.h.b16 %v1336
      %v1413 = vunpack.c.l.b16 %v1337
      %v1414 = vunpack.c.h.b16 %v1337
      %v1415 = vunpack.c.l.b16 %v1338
      %v1416 = vunpack.c.h.b16 %v1338
      %v1417 = vunpack.c.l.b16 %v1339
      %v1418 = vunpack.c.h.b16 %v1339
      %v1419 = vunpack.c.l.b16 %v1340
      %v1420 = vunpack.c.h.b16 %v1340
      %v1421 = vunpack.c.l.b16 %v1341
      %v1422 = vunpack.c.h.b16 %v1341
      %v1423 = vunpack.c.l.b16 %v1342
      %v1424 = vunpack.c.h.b16 %v1342
      %v1425 = vunpack.c.l.b16 %v1343
      %v1426 = vunpack.c.h.b16 %v1343
      %v1427 = vunpack.c.l.b16 %v1344
      %v1428 = vunpack.c.h.b16 %v1344
      %v1429 = vunpack.c.l.b16 %v1345
      %v1430 = vunpack.c.h.b16 %v1345
      %v1431 = vunpack.c.l.b16 %v1346
      %v1432 = vunpack.c.h.b16 %v1346
      %v1433 = vunpack.c.l.b16 %v1347
      %v1434 = vunpack.c.h.b16 %v1347
      %v1435 = vunpack.c.l.b16 %v1348
      %v1436 = vunpack.c.h.b16 %v1348
      %v1437 = vunpack.c.l.b16 %v1349
      %v1438 = vunpack.c.h.b16 %v1349
      %v1439 = vunpack.c.l.b16 %v1350
      %v1440 = vunpack.c.h.b16 %v1350
      %v1441 = vunpack.c.l.b16 %v1351
      %v1442 = vunpack.c.h.b16 %v1351
      %v1443 = vunpack.c.l.b16 %v1352
      %v1444 = vunpack.c.h.b16 %v1352
      %v1445 = vunpack.c.l.b16 %v1353
      %v1446 = vunpack.c.h.b16 %v1353
      %v1447 = vunpack.c.l.b16 %v1354
      %v1448 = vunpack.c.h.b16 %v1354
      %v1449 = vunpack.c.l.b16 %v1355
      %v1450 = vunpack.c.h.b16 %v1355
      %v1451 = vunpack.c.l.b16 %v1356
      %v1452 = vunpack.c.h.b16 %v1356
      %v1453 = vpack.c.b16 %v1391, %v1389
      %v1454 = vpack.c.b16 %v1392, %v1390
      %v1455 = vpack.c.b16 %v1395, %v1393
      %v1456 = vpack.c.b16 %v1396, %v1394
      %v1457 = vpack.c.b16 %v1399, %v1397
      %v1458 = vpack.c.b16 %v1400, %v1398
      %v1459 = vpack.c.b16 %v1403, %v1401
      %v1460 = vpack.c.b16 %v1404, %v1402
      %v1461 = vpack.c.b16 %v1407, %v1405
      %v1462 = vpack.c.b16 %v1408, %v1406
      %v1463 = vpack.c.b16 %v1411, %v1409
      %v1464 = vpack.c.b16 %v1412, %v1410
      %v1465 = vpack.c.b16 %v1415, %v1413
      %v1466 = vpack.c.b16 %v1416, %v1414
      %v1467 = vpack.c.b16 %v1419, %v1417
      %v1468 = vpack.c.b16 %v1420, %v1418
      %v1469 = vpack.c.b16 %v1423, %v1421
      %v1470 = vpack.c.b16 %v1424, %v1422
      %v1471 = vpack.c.b16 %v1427, %v1425
      %v1472 = vpack.c.b16 %v1428, %v1426
      %v1473 = vpack.c.b16 %v1431, %v1429
      %v1474 = vpack.c.b16 %v1432, %v1430
      %v1475 = vpack.c.b16 %v1435, %v1433
      %v1476 = vpack.c.b16 %v1436, %v1434
      %v1477 = vpack.c.b16 %v1439, %v1437
      %v1478 = vpack.c.b16 %v1440, %v1438
      %v1479 = vpack.c.b16 %v1443, %v1441
      %v1480 = vpack.c.b16 %v1444, %v1442
      %v1481 = vpack.c.b16 %v1447, %v1445
      %v1482 = vpack.c.b16 %v1448, %v1446
      %v1483 = vpack.c.b16 %v1451, %v1449
      %v1484 = vpack.c.b16 %v1452, %v1450
      %1517 = vmatprep.subr.bf16.mxu0 %v1454
      %1518 = vmatpush1.bf16.msra.mxu0 %v1453
      %1519 = vmatprep.subr.bf16.mxu0 %v1456
      %1520 = vmatpush1.bf16.msra.mxu0 %v1455
      %1521 = vmatprep.subr.bf16.mxu0 %v1458
      %1522 = vmatpush1.bf16.msra.mxu0 %v1457
      %1523 = vmatprep.subr.bf16.mxu0 %v1460
      %1524 = vmatpush1.bf16.msra.mxu0 %v1459
      %1525 = vmatprep.subr.bf16.mxu0 %v1462
      %1526 = vmatpush1.bf16.msra.mxu0 %v1461
      %1527 = vmatprep.subr.bf16.mxu0 %v1464
      %1528 = vmatpush1.bf16.msra.mxu0 %v1463
      %1529 = vmatprep.subr.bf16.mxu0 %v1466
      %1530 = vmatpush1.bf16.msra.mxu0 %v1465
      %1531 = vmatprep.subr.bf16.mxu0 %v1468
      %1532 = vmatpush1.bf16.msra.mxu0 %v1467
      %1533 = vmatprep.subr.bf16.mxu0 %v1470
      %1534 = vmatpush1.bf16.msra.mxu0 %v1469
      %1535 = vmatprep.subr.bf16.mxu0 %v1472
      %1536 = vmatpush1.bf16.msra.mxu0 %v1471
      %1537 = vmatprep.subr.bf16.mxu0 %v1474
      %1538 = vmatpush1.bf16.msra.mxu0 %v1473
      %1539 = vmatprep.subr.bf16.mxu0 %v1476
      %1540 = vmatpush1.bf16.msra.mxu0 %v1475
      %1541 = vmatprep.subr.bf16.mxu0 %v1478
      %1542 = vmatpush1.bf16.msra.mxu0 %v1477
      %1543 = vmatprep.subr.bf16.mxu0 %v1480
      %1544 = vmatpush1.bf16.msra.mxu0 %v1479
      %1545 = vmatprep.subr.bf16.mxu0 %v1482
      %1546 = vmatpush1.bf16.msra.mxu0 %v1481
      %1547 = vmatprep.subr.bf16.mxu0 %v1484
      %1548 = vmatpush1.bf16.msra.mxu0 %v1483
      %1549 = vmatprep.mubr.bf16.mxu0 %v1321
      %1550 = vmatmul.mubr.bf16.gmra.mrb[0].mxu0 %v1320
      %v1551 = vpop.f32.mrb[0].mxu0
      %v1552 = vadd.f32 0.0, %v1551
      %v1553 = vpop.f32.mrb[0].mxu0
      %v1554 = vadd.f32 0.0, %v1553
      %v1555 = vpop.f32.mrb[0].mxu0
      %v1556 = vadd.f32 0.0, %v1555
      %v1557 = vpop.f32.mrb[0].mxu0
      %v1558 = vadd.f32 0.0, %v1557
      %1559 = vmatprep.mubr.bf16.mxu0 %v1323
      %1560 = vmatmul.mubr.bf16.gmra.mrb[0].mxu0 %v1322
      %v1561 = vpop.f32.mrb[0].mxu0
      %v1562 = vadd.f32 0.0, %v1561
      %v1563 = vpop.f32.mrb[0].mxu0
      %v1564 = vadd.f32 0.0, %v1563
      %v1565 = vpop.f32.mrb[0].mxu0
      %v1566 = vadd.f32 0.0, %v1565
      %v1567 = vpop.f32.mrb[0].mxu0
      %v1568 = vadd.f32 0.0, %v1567
      %1569 = vdwg.mxu0
      %v1570 = vadd.f32 %v1257, %v1552
      %v1571 = vadd.f32 %v1259, %v1554
      %v1572 = vadd.f32 %v1261, %v1556
      %v1573 = vadd.f32 %v1263, %v1558
      %v1574 = vadd.f32 %v1267, %v1562
      %v1575 = vadd.f32 %v1269, %v1564
      %v1576 = vadd.f32 %v1271, %v1566
      %v1577 = vadd.f32 %v1273, %v1568
      %v1578 = vld [vmem:[#allocation2] sm:$0xf8]
      %v1579 = vld [vmem:[#allocation2 + $0x8] sm:$0xf8]
      %v1580 = vld [vmem:[#allocation2 + $0x20] sm:$0x7]
      %v1581 = vld [vmem:[#allocation2 + $0x28] sm:$0x7]
      %v1582 = vld [vmem:[#allocation2 + $0x30] sm:$0xf8]
      %v1583 = vld [vmem:[#allocation2 + $0x38] sm:$0xf8]
      %v1584 = vld [vmem:[#allocation2 + $0x50] sm:$0x7]
      %v1585 = vld [vmem:[#allocation2 + $0x58] sm:$0x7]
      %vm1594 = vcmask 1044480
      %v1595 = vrot.slane %v1578, 3
      %v1596 = vrot.slane %v761, 3
      %v1597 = vsel %vm1594, %v1595, %v1596
      %v1598 = vrot.slane %v1579, 3
      %v1599 = vrot.slane %v762, 3
      %v1600 = vsel %vm1594, %v1598, %v1599
      %v1601 = vrot.slane %v1580, 3
      %v1602 = vsel %vm1594, %v1596, %v1601
      %v1603 = vrot.slane %v1581, 3
      %v1604 = vsel %vm1594, %v1599, %v1603
      %v1605 = vrot.slane %v1582, 3
      %v1606 = vrot.slane %v767, 3
      %v1607 = vsel %vm1594, %v1605, %v1606
      %v1608 = vrot.slane %v1583, 3
      %v1609 = vrot.slane %v768, 3
      %v1610 = vsel %vm1594, %v1608, %v1609
      %v1611 = vrot.slane %v1584, 3
      %v1612 = vsel %vm1594, %v1606, %v1611
      %v1613 = vrot.slane %v1585, 3
      %v1614 = vsel %vm1594, %v1609, %v1613
      %v1623 = vpack.c.bf16 %v1602, %v1597
      %v1624 = vpack.c.bf16 %v1604, %v1600
      %v1625 = vpack.c.bf16 %v1612, %v1607
      %v1626 = vpack.c.bf16 %v1614, %v1610
      %s1627 = scalar_lea.vmem %s365, 768
      %v1628 = vld [vmem:[%s1627] sm:$0xff]
      %v1629 = vld [vmem:[%s1627 + $0x8] sm:$0xff]
      %v1630 = vld [vmem:[%s1627 + $0x10] sm:$0xff]
      %v1631 = vld [vmem:[%s1627 + $0x18] sm:$0xff]
      %v1632 = vld [vmem:[%s1627 + $0x20] sm:$0xff]
      %v1633 = vld [vmem:[%s1627 + $0x28] sm:$0xff]
      %v1634 = vld [vmem:[%s1627 + $0x30] sm:$0xff]
      %v1635 = vld [vmem:[%s1627 + $0x38] sm:$0xff]
      %v1636 = vld [vmem:[%s1627 + $0x40] sm:$0xff]
      %v1637 = vld [vmem:[%s1627 + $0x48] sm:$0xff]
      %v1638 = vld [vmem:[%s1627 + $0x50] sm:$0xff]
      %v1639 = vld [vmem:[%s1627 + $0x58] sm:$0xff]
      %v1640 = vld [vmem:[%s1627 + $0x60] sm:$0xff]
      %v1641 = vld [vmem:[%s1627 + $0x68] sm:$0xff]
      %v1642 = vld [vmem:[%s1627 + $0x70] sm:$0xff]
      %v1643 = vld [vmem:[%s1627 + $0x78] sm:$0xff]
      %v1644 = vld [vmem:[%s1627 + $0x80] sm:$0xff]
      %v1645 = vld [vmem:[%s1627 + $0x88] sm:$0xff]
      %v1646 = vld [vmem:[%s1627 + $0x90] sm:$0xff]
      %v1647 = vld [vmem:[%s1627 + $0x98] sm:$0xff]
      %v1648 = vld [vmem:[%s1627 + $0xa0] sm:$0xff]
      %v1649 = vld [vmem:[%s1627 + $0xa8] sm:$0xff]
      %v1650 = vld [vmem:[%s1627 + $0xb0] sm:$0xff]
      %v1651 = vld [vmem:[%s1627 + $0xb8] sm:$0xff]
      %v1652 = vld [vmem:[%s1627 + $0xc0] sm:$0xff]
      %v1653 = vld [vmem:[%s1627 + $0xc8] sm:$0xff]
      %v1654 = vld [vmem:[%s1627 + $0xd0] sm:$0xff]
      %v1655 = vld [vmem:[%s1627 + $0xd8] sm:$0xff]
      %v1656 = vld [vmem:[%s1627 + $0xe0] sm:$0xff]
      %v1657 = vld [vmem:[%s1627 + $0xe8] sm:$0xff]
      %v1658 = vld [vmem:[%s1627 + $0xf0] sm:$0xff]
      %v1659 = vld [vmem:[%s1627 + $0xf8] sm:$0xff]
      %v1692 = vunpack.c.l.b16 %v1628
      %v1693 = vunpack.c.h.b16 %v1628
      %v1694 = vunpack.c.l.b16 %v1629
      %v1695 = vunpack.c.h.b16 %v1629
      %v1696 = vunpack.c.l.b16 %v1630
      %v1697 = vunpack.c.h.b16 %v1630
      %v1698 = vunpack.c.l.b16 %v1631
      %v1699 = vunpack.c.h.b16 %v1631
      %v1700 = vunpack.c.l.b16 %v1632
      %v1701 = vunpack.c.h.b16 %v1632
      %v1702 = vunpack.c.l.b16 %v1633
      %v1703 = vunpack.c.h.b16 %v1633
      %v1704 = vunpack.c.l.b16 %v1634
      %v1705 = vunpack.c.h.b16 %v1634
      %v1706 = vunpack.c.l.b16 %v1635
      %v1707 = vunpack.c.h.b16 %v1635
      %v1708 = vunpack.c.l.b16 %v1636
      %v1709 = vunpack.c.h.b16 %v1636
      %v1710 = vunpack.c.l.b16 %v1637
      %v1711 = vunpack.c.h.b16 %v1637
      %v1712 = vunpack.c.l.b16 %v1638
      %v1713 = vunpack.c.h.b16 %v1638
      %v1714 = vunpack.c.l.b16 %v1639
      %v1715 = vunpack.c.h.b16 %v1639
      %v1716 = vunpack.c.l.b16 %v1640
      %v1717 = vunpack.c.h.b16 %v1640
      %v1718 = vunpack.c.l.b16 %v1641
      %v1719 = vunpack.c.h.b16 %v1641
      %v1720 = vunpack.c.l.b16 %v1642
      %v1721 = vunpack.c.h.b16 %v1642
      %v1722 = vunpack.c.l.b16 %v1643
      %v1723 = vunpack.c.h.b16 %v1643
      %v1724 = vunpack.c.l.b16 %v1644
      %v1725 = vunpack.c.h.b16 %v1644
      %v1726 = vunpack.c.l.b16 %v1645
      %v1727 = vunpack.c.h.b16 %v1645
      %v1728 = vunpack.c.l.b16 %v1646
      %v1729 = vunpack.c.h.b16 %v1646
      %v1730 = vunpack.c.l.b16 %v1647
      %v1731 = vunpack.c.h.b16 %v1647
      %v1732 = vunpack.c.l.b16 %v1648
      %v1733 = vunpack.c.h.b16 %v1648
      %v1734 = vunpack.c.l.b16 %v1649
      %v1735 = vunpack.c.h.b16 %v1649
      %v1736 = vunpack.c.l.b16 %v1650
      %v1737 = vunpack.c.h.b16 %v1650
      %v1738 = vunpack.c.l.b16 %v1651
      %v1739 = vunpack.c.h.b16 %v1651
      %v1740 = vunpack.c.l.b16 %v1652
      %v1741 = vunpack.c.h.b16 %v1652
      %v1742 = vunpack.c.l.b16 %v1653
      %v1743 = vunpack.c.h.b16 %v1653
      %v1744 = vunpack.c.l.b16 %v1654
      %v1745 = vunpack.c.h.b16 %v1654
      %v1746 = vunpack.c.l.b16 %v1655
      %v1747 = vunpack.c.h.b16 %v1655
      %v1748 = vunpack.c.l.b16 %v1656
      %v1749 = vunpack.c.h.b16 %v1656
      %v1750 = vunpack.c.l.b16 %v1657
      %v1751 = vunpack.c.h.b16 %v1657
      %v1752 = vunpack.c.l.b16 %v1658
      %v1753 = vunpack.c.h.b16 %v1658
      %v1754 = vunpack.c.l.b16 %v1659
      %v1755 = vunpack.c.h.b16 %v1659
      %v1756 = vpack.c.b16 %v1694, %v1692
      %v1757 = vpack.c.b16 %v1695, %v1693
      %v1758 = vpack.c.b16 %v1698, %v1696
      %v1759 = vpack.c.b16 %v1699, %v1697
      %v1760 = vpack.c.b16 %v1702, %v1700
      %v1761 = vpack.c.b16 %v1703, %v1701
      %v1762 = vpack.c.b16 %v1706, %v1704
      %v1763 = vpack.c.b16 %v1707, %v1705
      %v1764 = vpack.c.b16 %v1710, %v1708
      %v1765 = vpack.c.b16 %v1711, %v1709
      %v1766 = vpack.c.b16 %v1714, %v1712
      %v1767 = vpack.c.b16 %v1715, %v1713
      %v1768 = vpack.c.b16 %v1718, %v1716
      %v1769 = vpack.c.b16 %v1719, %v1717
      %v1770 = vpack.c.b16 %v1722, %v1720
      %v1771 = vpack.c.b16 %v1723, %v1721
      %v1772 = vpack.c.b16 %v1726, %v1724
      %v1773 = vpack.c.b16 %v1727, %v1725
      %v1774 = vpack.c.b16 %v1730, %v1728
      %v1775 = vpack.c.b16 %v1731, %v1729
      %v1776 = vpack.c.b16 %v1734, %v1732
      %v1777 = vpack.c.b16 %v1735, %v1733
      %v1778 = vpack.c.b16 %v1738, %v1736
      %v1779 = vpack.c.b16 %v1739, %v1737
      %v1780 = vpack.c.b16 %v1742, %v1740
      %v1781 = vpack.c.b16 %v1743, %v1741
      %v1782 = vpack.c.b16 %v1746, %v1744
      %v1783 = vpack.c.b16 %v1747, %v1745
      %v1784 = vpack.c.b16 %v1750, %v1748
      %v1785 = vpack.c.b16 %v1751, %v1749
      %v1786 = vpack.c.b16 %v1754, %v1752
      %v1787 = vpack.c.b16 %v1755, %v1753
      %1820 = vmatprep.subr.bf16.mxu0 %v1757
      %1821 = vmatpush1.bf16.msra.mxu0 %v1756
      %1822 = vmatprep.subr.bf16.mxu0 %v1759
      %1823 = vmatpush1.bf16.msra.mxu0 %v1758
      %1824 = vmatprep.subr.bf16.mxu0 %v1761
      %1825 = vmatpush1.bf16.msra.mxu0 %v1760
      %1826 = vmatprep.subr.bf16.mxu0 %v1763
      %1827 = vmatpush1.bf16.msra.mxu0 %v1762
      %1828 = vmatprep.subr.bf16.mxu0 %v1765
      %1829 = vmatpush1.bf16.msra.mxu0 %v1764
      %1830 = vmatprep.subr.bf16.mxu0 %v1767
      %1831 = vmatpush1.bf16.msra.mxu0 %v1766
      %1832 = vmatprep.subr.bf16.mxu0 %v1769
      %1833 = vmatpush1.bf16.msra.mxu0 %v1768
      %1834 = vmatprep.subr.bf16.mxu0 %v1771
      %1835 = vmatpush1.bf16.msra.mxu0 %v1770
      %1836 = vmatprep.subr.bf16.mxu0 %v1773
      %1837 = vmatpush1.bf16.msra.mxu0 %v1772
      %1838 = vmatprep.subr.bf16.mxu0 %v1775
      %1839 = vmatpush1.bf16.msra.mxu0 %v1774
      %1840 = vmatprep.subr.bf16.mxu0 %v1777
      %1841 = vmatpush1.bf16.msra.mxu0 %v1776
      %1842 = vmatprep.subr.bf16.mxu0 %v1779
      %1843 = vmatpush1.bf16.msra.mxu0 %v1778
      %1844 = vmatprep.subr.bf16.mxu0 %v1781
      %1845 = vmatpush1.bf16.msra.mxu0 %v1780
      %1846 = vmatprep.subr.bf16.mxu0 %v1783
      %1847 = vmatpush1.bf16.msra.mxu0 %v1782
      %1848 = vmatprep.subr.bf16.mxu0 %v1785
      %1849 = vmatpush1.bf16.msra.mxu0 %v1784
      %1850 = vmatprep.subr.bf16.mxu0 %v1787
      %1851 = vmatpush1.bf16.msra.mxu0 %v1786
      %1852 = vmatprep.mubr.bf16.mxu0 %v1624
      %1853 = vmatmul.mubr.bf16.gmra.mrb[0].mxu0 %v1623
      %v1854 = vpop.f32.mrb[0].mxu0
      %v1855 = vadd.f32 0.0, %v1854
      %v1856 = vpop.f32.mrb[0].mxu0
      %v1857 = vadd.f32 0.0, %v1856
      %v1858 = vpop.f32.mrb[0].mxu0
      %v1859 = vadd.f32 0.0, %v1858
      %v1860 = vpop.f32.mrb[0].mxu0
      %v1861 = vadd.f32 0.0, %v1860
      %1862 = vmatprep.mubr.bf16.mxu0 %v1626
      %1863 = vmatmul.mubr.bf16.gmra.mrb[0].mxu0 %v1625
      %v1864 = vpop.f32.mrb[0].mxu0
      %v1865 = vadd.f32 0.0, %v1864
      %v1866 = vpop.f32.mrb[0].mxu0
      %v1867 = vadd.f32 0.0, %v1866
      %v1868 = vpop.f32.mrb[0].mxu0
      %v1869 = vadd.f32 0.0, %v1868
      %v1870 = vpop.f32.mrb[0].mxu0
      %v1871 = vadd.f32 0.0, %v1870
      %1872 = vdwg.mxu0
      %v1873 = vadd.f32 %v1570, %v1855
      %v1874 = vadd.f32 %v1571, %v1857
      %v1875 = vadd.f32 %v1572, %v1859
      %v1876 = vadd.f32 %v1573, %v1861
      %v1877 = vadd.f32 %v1574, %v1865
      %v1878 = vadd.f32 %v1575, %v1867
      %v1879 = vadd.f32 %v1576, %v1869
      %v1880 = vadd.f32 %v1577, %v1871
      %v1881 = vld [vmem:[#allocation2] sm:$0xf0]
      %v1882 = vld [vmem:[#allocation2 + $0x8] sm:$0xf0]
      %v1883 = vld [vmem:[#allocation2 + $0x20] sm:$0xf]
      %v1884 = vld [vmem:[#allocation2 + $0x28] sm:$0xf]
      %v1885 = vld [vmem:[#allocation2 + $0x30] sm:$0xf0]
      %v1886 = vld [vmem:[#allocation2 + $0x38] sm:$0xf0]
      %v1887 = vld [vmem:[#allocation2 + $0x50] sm:$0xf]
      %v1888 = vld [vmem:[#allocation2 + $0x58] sm:$0xf]
      %v1897 = vrot.slane %v1881, 4
      %v1898 = vrot.slane %v761, 4
      %v1899 = vsel %vm678, %v1897, %v1898
      %v1900 = vrot.slane %v1882, 4
      %v1901 = vrot.slane %v762, 4
      %v1902 = vsel %vm678, %v1900, %v1901
      %v1903 = vrot.slane %v1883, 4
      %v1904 = vsel %vm678, %v1898, %v1903
      %v1905 = vrot.slane %v1884, 4
      %v1906 = vsel %vm678, %v1901, %v1905
      %v1907 = vrot.slane %v1885, 4
      %v1908 = vrot.slane %v767, 4
      %v1909 = vsel %vm678, %v1907, %v1908
      %v1910 = vrot.slane %v1886, 4
      %v1911 = vrot.slane %v768, 4
      %v1912 = vsel %vm678, %v1910, %v1911
      %v1913 = vrot.slane %v1887, 4
      %v1914 = vsel %vm678, %v1908, %v1913
      %v1915 = vrot.slane %v1888, 4
      %v1916 = vsel %vm678, %v1911, %v1915
      %v1925 = vpack.c.bf16 %v1904, %v1899
      %v1926 = vpack.c.bf16 %v1906, %v1902
      %v1927 = vpack.c.bf16 %v1914, %v1909
      %v1928 = vpack.c.bf16 %v1916, %v1912
      %s1929 = scalar_lea.vmem %s365, 1024
      %v1930 = vld [vmem:[%s1929] sm:$0xff]
      %v1931 = vld [vmem:[%s1929 + $0x8] sm:$0xff]
      %v1932 = vld [vmem:[%s1929 + $0x10] sm:$0xff]
      %v1933 = vld [vmem:[%s1929 + $0x18] sm:$0xff]
      %v1934 = vld [vmem:[%s1929 + $0x20] sm:$0xff]
      %v1935 = vld [vmem:[%s1929 + $0x28] sm:$0xff]
      %v1936 = vld [vmem:[%s1929 + $0x30] sm:$0xff]
      %v1937 = vld [vmem:[%s1929 + $0x38] sm:$0xff]
      %v1938 = vld [vmem:[%s1929 + $0x40] sm:$0xff]
      %v1939 = vld [vmem:[%s1929 + $0x48] sm:$0xff]
      %v1940 = vld [vmem:[%s1929 + $0x50] sm:$0xff]
      %v1941 = vld [vmem:[%s1929 + $0x58] sm:$0xff]
      %v1942 = vld [vmem:[%s1929 + $0x60] sm:$0xff]
      %v1943 = vld [vmem:[%s1929 + $0x68] sm:$0xff]
      %v1944 = vld [vmem:[%s1929 + $0x70] sm:$0xff]
      %v1945 = vld [vmem:[%s1929 + $0x78] sm:$0xff]
      %v1946 = vld [vmem:[%s1929 + $0x80] sm:$0xff]
      %v1947 = vld [vmem:[%s1929 + $0x88] sm:$0xff]
      %v1948 = vld [vmem:[%s1929 + $0x90] sm:$0xff]
      %v1949 = vld [vmem:[%s1929 + $0x98] sm:$0xff]
      %v1950 = vld [vmem:[%s1929 + $0xa0] sm:$0xff]
      %v1951 = vld [vmem:[%s1929 + $0xa8] sm:$0xff]
      %v1952 = vld [vmem:[%s1929 + $0xb0] sm:$0xff]
      %v1953 = vld [vmem:[%s1929 + $0xb8] sm:$0xff]
      %v1954 = vld [vmem:[%s1929 + $0xc0] sm:$0xff]
      %v1955 = vld [vmem:[%s1929 + $0xc8] sm:$0xff]
      %v1956 = vld [vmem:[%s1929 + $0xd0] sm:$0xff]
      %v1957 = vld [vmem:[%s1929 + $0xd8] sm:$0xff]
      %v1958 = vld [vmem:[%s1929 + $0xe0] sm:$0xff]
      %v1959 = vld [vmem:[%s1929 + $0xe8] sm:$0xff]
      %v1960 = vld [vmem:[%s1929 + $0xf0] sm:$0xff]
      %v1961 = vld [vmem:[%s1929 + $0xf8] sm:$0xff]
      %v1994 = vunpack.c.l.b16 %v1930
      %v1995 = vunpack.c.h.b16 %v1930
      %v1996 = vunpack.c.l.b16 %v1931
      %v1997 = vunpack.c.h.b16 %v1931
      %v1998 = vunpack.c.l.b16 %v1932
      %v1999 = vunpack.c.h.b16 %v1932
      %v2000 = vunpack.c.l.b16 %v1933
      %v2001 = vunpack.c.h.b16 %v1933
      %v2002 = vunpack.c.l.b16 %v1934
      %v2003 = vunpack.c.h.b16 %v1934
      %v2004 = vunpack.c.l.b16 %v1935
      %v2005 = vunpack.c.h.b16 %v1935
      %v2006 = vunpack.c.l.b16 %v1936
      %v2007 = vunpack.c.h.b16 %v1936
      %v2008 = vunpack.c.l.b16 %v1937
      %v2009 = vunpack.c.h.b16 %v1937
      %v2010 = vunpack.c.l.b16 %v1938
      %v2011 = vunpack.c.h.b16 %v1938
      %v2012 = vunpack.c.l.b16 %v1939
      %v2013 = vunpack.c.h.b16 %v1939
      %v2014 = vunpack.c.l.b16 %v1940
      %v2015 = vunpack.c.h.b16 %v1940
      %v2016 = vunpack.c.l.b16 %v1941
      %v2017 = vunpack.c.h.b16 %v1941
      %v2018 = vunpack.c.l.b16 %v1942
      %v2019 = vunpack.c.h.b16 %v1942
      %v2020 = vunpack.c.l.b16 %v1943
      %v2021 = vunpack.c.h.b16 %v1943
      %v2022 = vunpack.c.l.b16 %v1944
      %v2023 = vunpack.c.h.b16 %v1944
      %v2024 = vunpack.c.l.b16 %v1945
      %v2025 = vunpack.c.h.b16 %v1945
      %v2026 = vunpack.c.l.b16 %v1946
      %v2027 = vunpack.c.h.b16 %v1946
      %v2028 = vunpack.c.l.b16 %v1947
      %v2029 = vunpack.c.h.b16 %v1947
      %v2030 = vunpack.c.l.b16 %v1948
      %v2031 = vunpack.c.h.b16 %v1948
      %v2032 = vunpack.c.l.b16 %v1949
      %v2033 = vunpack.c.h.b16 %v1949
      %v2034 = vunpack.c.l.b16 %v1950
      %v2035 = vunpack.c.h.b16 %v1950
      %v2036 = vunpack.c.l.b16 %v1951
      %v2037 = vunpack.c.h.b16 %v1951
      %v2038 = vunpack.c.l.b16 %v1952
      %v2039 = vunpack.c.h.b16 %v1952
      %v2040 = vunpack.c.l.b16 %v1953
      %v2041 = vunpack.c.h.b16 %v1953
      %v2042 = vunpack.c.l.b16 %v1954
      %v2043 = vunpack.c.h.b16 %v1954
      %v2044 = vunpack.c.l.b16 %v1955
      %v2045 = vunpack.c.h.b16 %v1955
      %v2046 = vunpack.c.l.b16 %v1956
      %v2047 = vunpack.c.h.b16 %v1956
      %v2048 = vunpack.c.l.b16 %v1957
      %v2049 = vunpack.c.h.b16 %v1957
      %v2050 = vunpack.c.l.b16 %v1958
      %v2051 = vunpack.c.h.b16 %v1958
      %v2052 = vunpack.c.l.b16 %v1959
      %v2053 = vunpack.c.h.b16 %v1959
      %v2054 = vunpack.c.l.b16 %v1960
      %v2055 = vunpack.c.h.b16 %v1960
      %v2056 = vunpack.c.l.b16 %v1961
      %v2057 = vunpack.c.h.b16 %v1961
      %v2058 = vpack.c.b16 %v1996, %v1994
      %v2059 = vpack.c.b16 %v1997, %v1995
      %v2060 = vpack.c.b16 %v2000, %v1998
      %v2061 = vpack.c.b16 %v2001, %v1999
      %v2062 = vpack.c.b16 %v2004, %v2002
      %v2063 = vpack.c.b16 %v2005, %v2003
      %v2064 = vpack.c.b16 %v2008, %v2006
      %v2065 = vpack.c.b16 %v2009, %v2007
      %v2066 = vpack.c.b16 %v2012, %v2010
      %v2067 = vpack.c.b16 %v2013, %v2011
      %v2068 = vpack.c.b16 %v2016, %v2014
      %v2069 = vpack.c.b16 %v2017, %v2015
      %v2070 = vpack.c.b16 %v2020, %v2018
      %v2071 = vpack.c.b16 %v2021, %v2019
      %v2072 = vpack.c.b16 %v2024, %v2022
      %v2073 = vpack.c.b16 %v2025, %v2023
      %v2074 = vpack.c.b16 %v2028, %v2026
      %v2075 = vpack.c.b16 %v2029, %v2027
      %v2076 = vpack.c.b16 %v2032, %v2030
      %v2077 = vpack.c.b16 %v2033, %v2031
      %v2078 = vpack.c.b16 %v2036, %v2034
      %v2079 = vpack.c.b16 %v2037, %v2035
      %v2080 = vpack.c.b16 %v2040, %v2038
      %v2081 = vpack.c.b16 %v2041, %v2039
      %v2082 = vpack.c.b16 %v2044, %v2042
      %v2083 = vpack.c.b16 %v2045, %v2043
      %v2084 = vpack.c.b16 %v2048, %v2046
      %v2085 = vpack.c.b16 %v2049, %v2047
      %v2086 = vpack.c.b16 %v2052, %v2050
      %v2087 = vpack.c.b16 %v2053, %v2051
      %v2088 = vpack.c.b16 %v2056, %v2054
      %v2089 = vpack.c.b16 %v2057, %v2055
      %2122 = vmatprep.subr.bf16.mxu0 %v2059
      %2123 = vmatpush1.bf16.msra.mxu0 %v2058
      %2124 = vmatprep.subr.bf16.mxu0 %v2061
      %2125 = vmatpush1.bf16.msra.mxu0 %v2060
      %2126 = vmatprep.subr.bf16.mxu0 %v2063
      %2127 = vmatpush1.bf16.msra.mxu0 %v2062
      %2128 = vmatprep.subr.bf16.mxu0 %v2065
      %2129 = vmatpush1.bf16.msra.mxu0 %v2064
      %2130 = vmatprep.subr.bf16.mxu0 %v2067
      %2131 = vmatpush1.bf16.msra.mxu0 %v2066
      %2132 = vmatprep.subr.bf16.mxu0 %v2069
      %2133 = vmatpush1.bf16.msra.mxu0 %v2068
      %2134 = vmatprep.subr.bf16.mxu0 %v2071
      %2135 = vmatpush1.bf16.msra.mxu0 %v2070
      %2136 = vmatprep.subr.bf16.mxu0 %v2073
      %2137 = vmatpush1.bf16.msra.mxu0 %v2072
      %2138 = vmatprep.subr.bf16.mxu0 %v2075
      %2139 = vmatpush1.bf16.msra.mxu0 %v2074
      %2140 = vmatprep.subr.bf16.mxu0 %v2077
      %2141 = vmatpush1.bf16.msra.mxu0 %v2076
      %2142 = vmatprep.subr.bf16.mxu0 %v2079
      %2143 = vmatpush1.bf16.msra.mxu0 %v2078
      %2144 = vmatprep.subr.bf16.mxu0 %v2081
      %2145 = vmatpush1.bf16.msra.mxu0 %v2080
      %2146 = vmatprep.subr.bf16.mxu0 %v2083
      %2147 = vmatpush1.bf16.msra.mxu0 %v2082
      %2148 = vmatprep.subr.bf16.mxu0 %v2085
      %2149 = vmatpush1.bf16.msra.mxu0 %v2084
      %2150 = vmatprep.subr.bf16.mxu0 %v2087
      %2151 = vmatpush1.bf16.msra.mxu0 %v2086
      %2152 = vmatprep.subr.bf16.mxu0 %v2089
      %2153 = vmatpush1.bf16.msra.mxu0 %v2088
      %2154 = vmatprep.mubr.bf16.mxu0 %v1926
      %2155 = vmatmul.mubr.bf16.gmra.mrb[0].mxu0 %v1925
      %v2156 = vpop.f32.mrb[0].mxu0
      %v2157 = vadd.f32 0.0, %v2156
      %v2158 = vpop.f32.mrb[0].mxu0
      %v2159 = vadd.f32 0.0, %v2158
      %v2160 = vpop.f32.mrb[0].mxu0
      %v2161 = vadd.f32 0.0, %v2160
      %v2162 = vpop.f32.mrb[0].mxu0
      %v2163 = vadd.f32 0.0, %v2162
      %2164 = vmatprep.mubr.bf16.mxu0 %v1928
      %2165 = vmatmul.mubr.bf16.gmra.mrb[0].mxu0 %v1927
      %v2166 = vpop.f32.mrb[0].mxu0
      %v2167 = vadd.f32 0.0, %v2166
      %v2168 = vpop.f32.mrb[0].mxu0
      %v2169 = vadd.f32 0.0, %v2168
      %v2170 = vpop.f32.mrb[0].mxu0
      %v2171 = vadd.f32 0.0, %v2170
      %v2172 = vpop.f32.mrb[0].mxu0
      %v2173 = vadd.f32 0.0, %v2172
      %2174 = vdwg.mxu0
      %v2175 = vadd.f32 %v1873, %v2157
      %v2176 = vadd.f32 %v1874, %v2159
      %v2177 = vadd.f32 %v1875, %v2161
      %v2178 = vadd.f32 %v1876, %v2163
      %v2179 = vadd.f32 %v1877, %v2167
      %v2180 = vadd.f32 %v1878, %v2169
      %v2181 = vadd.f32 %v1879, %v2171
      %v2182 = vadd.f32 %v1880, %v2173
      %v2183 = vld [vmem:[#allocation2] sm:$0xe0]
      %v2184 = vld [vmem:[#allocation2 + $0x8] sm:$0xe0]
      %v2185 = vld [vmem:[#allocation2 + $0x20] sm:$0x1f]
      %v2186 = vld [vmem:[#allocation2 + $0x28] sm:$0x1f]
      %v2187 = vld [vmem:[#allocation2 + $0x30] sm:$0xe0]
      %v2188 = vld [vmem:[#allocation2 + $0x38] sm:$0xe0]
      %v2189 = vld [vmem:[#allocation2 + $0x50] sm:$0x1f]
      %v2190 = vld [vmem:[#allocation2 + $0x58] sm:$0x1f]
      %vm2199 = vcmask 1042432
      %v2200 = vrot.slane %v2183, 5
      %v2201 = vrot.slane %v761, 5
      %v2202 = vsel %vm2199, %v2200, %v2201
      %v2203 = vrot.slane %v2184, 5
      %v2204 = vrot.slane %v762, 5
      %v2205 = vsel %vm2199, %v2203, %v2204
      %v2206 = vrot.slane %v2185, 5
      %v2207 = vsel %vm2199, %v2201, %v2206
      %v2208 = vrot.slane %v2186, 5
      %v2209 = vsel %vm2199, %v2204, %v2208
      %v2210 = vrot.slane %v2187, 5
      %v2211 = vrot.slane %v767, 5
      %v2212 = vsel %vm2199, %v2210, %v2211
      %v2213 = vrot.slane %v2188, 5
      %v2214 = vrot.slane %v768, 5
      %v2215 = vsel %vm2199, %v2213, %v2214
      %v2216 = vrot.slane %v2189, 5
      %v2217 = vsel %vm2199, %v2211, %v2216
      %v2218 = vrot.slane %v2190, 5
      %v2219 = vsel %vm2199, %v2214, %v2218
      %v2228 = vpack.c.bf16 %v2207, %v2202
      %v2229 = vpack.c.bf16 %v2209, %v2205
      %v2230 = vpack.c.bf16 %v2217, %v2212
      %v2231 = vpack.c.bf16 %v2219, %v2215
      %s2232 = scalar_lea.vmem %s365, 1280
      %v2233 = vld [vmem:[%s2232] sm:$0xff]
      %v2234 = vld [vmem:[%s2232 + $0x8] sm:$0xff]
      %v2235 = vld [vmem:[%s2232 + $0x10] sm:$0xff]
      %v2236 = vld [vmem:[%s2232 + $0x18] sm:$0xff]
      %v2237 = vld [vmem:[%s2232 + $0x20] sm:$0xff]
      %v2238 = vld [vmem:[%s2232 + $0x28] sm:$0xff]
      %v2239 = vld [vmem:[%s2232 + $0x30] sm:$0xff]
      %v2240 = vld [vmem:[%s2232 + $0x38] sm:$0xff]
      %v2241 = vld [vmem:[%s2232 + $0x40] sm:$0xff]
      %v2242 = vld [vmem:[%s2232 + $0x48] sm:$0xff]
      %v2243 = vld [vmem:[%s2232 + $0x50] sm:$0xff]
      %v2244 = vld [vmem:[%s2232 + $0x58] sm:$0xff]
      %v2245 = vld [vmem:[%s2232 + $0x60] sm:$0xff]
      %v2246 = vld [vmem:[%s2232 + $0x68] sm:$0xff]
      %v2247 = vld [vmem:[%s2232 + $0x70] sm:$0xff]
      %v2248 = vld [vmem:[%s2232 + $0x78] sm:$0xff]
      %v2249 = vld [vmem:[%s2232 + $0x80] sm:$0xff]
      %v2250 = vld [vmem:[%s2232 + $0x88] sm:$0xff]
      %v2251 = vld [vmem:[%s2232 + $0x90] sm:$0xff]
      %v2252 = vld [vmem:[%s2232 + $0x98] sm:$0xff]
      %v2253 = vld [vmem:[%s2232 + $0xa0] sm:$0xff]
      %v2254 = vld [vmem:[%s2232 + $0xa8] sm:$0xff]
      %v2255 = vld [vmem:[%s2232 + $0xb0] sm:$0xff]
      %v2256 = vld [vmem:[%s2232 + $0xb8] sm:$0xff]
      %v2257 = vld [vmem:[%s2232 + $0xc0] sm:$0xff]
      %v2258 = vld [vmem:[%s2232 + $0xc8] sm:$0xff]
      %v2259 = vld [vmem:[%s2232 + $0xd0] sm:$0xff]
      %v2260 = vld [vmem:[%s2232 + $0xd8] sm:$0xff]
      %v2261 = vld [vmem:[%s2232 + $0xe0] sm:$0xff]
      %v2262 = vld [vmem:[%s2232 + $0xe8] sm:$0xff]
      %v2263 = vld [vmem:[%s2232 + $0xf0] sm:$0xff]
      %v2264 = vld [vmem:[%s2232 + $0xf8] sm:$0xff]
      %v2297 = vunpack.c.l.b16 %v2233
      %v2298 = vunpack.c.h.b16 %v2233
      %v2299 = vunpack.c.l.b16 %v2234
      %v2300 = vunpack.c.h.b16 %v2234
      %v2301 = vunpack.c.l.b16 %v2235
      %v2302 = vunpack.c.h.b16 %v2235
      %v2303 = vunpack.c.l.b16 %v2236
      %v2304 = vunpack.c.h.b16 %v2236
      %v2305 = vunpack.c.l.b16 %v2237
      %v2306 = vunpack.c.h.b16 %v2237
      %v2307 = vunpack.c.l.b16 %v2238
      %v2308 = vunpack.c.h.b16 %v2238
      %v2309 = vunpack.c.l.b16 %v2239
      %v2310 = vunpack.c.h.b16 %v2239
      %v2311 = vunpack.c.l.b16 %v2240
      %v2312 = vunpack.c.h.b16 %v2240
      %v2313 = vunpack.c.l.b16 %v2241
      %v2314 = vunpack.c.h.b16 %v2241
      %v2315 = vunpack.c.l.b16 %v2242
      %v2316 = vunpack.c.h.b16 %v2242
      %v2317 = vunpack.c.l.b16 %v2243
      %v2318 = vunpack.c.h.b16 %v2243
      %v2319 = vunpack.c.l.b16 %v2244
      %v2320 = vunpack.c.h.b16 %v2244
      %v2321 = vunpack.c.l.b16 %v2245
      %v2322 = vunpack.c.h.b16 %v2245
      %v2323 = vunpack.c.l.b16 %v2246
      %v2324 = vunpack.c.h.b16 %v2246
      %v2325 = vunpack.c.l.b16 %v2247
      %v2326 = vunpack.c.h.b16 %v2247
      %v2327 = vunpack.c.l.b16 %v2248
      %v2328 = vunpack.c.h.b16 %v2248
      %v2329 = vunpack.c.l.b16 %v2249
      %v2330 = vunpack.c.h.b16 %v2249
      %v2331 = vunpack.c.l.b16 %v2250
      %v2332 = vunpack.c.h.b16 %v2250
      %v2333 = vunpack.c.l.b16 %v2251
      %v2334 = vunpack.c.h.b16 %v2251
      %v2335 = vunpack.c.l.b16 %v2252
      %v2336 = vunpack.c.h.b16 %v2252
      %v2337 = vunpack.c.l.b16 %v2253
      %v2338 = vunpack.c.h.b16 %v2253
      %v2339 = vunpack.c.l.b16 %v2254
      %v2340 = vunpack.c.h.b16 %v2254
      %v2341 = vunpack.c.l.b16 %v2255
      %v2342 = vunpack.c.h.b16 %v2255
      %v2343 = vunpack.c.l.b16 %v2256
      %v2344 = vunpack.c.h.b16 %v2256
      %v2345 = vunpack.c.l.b16 %v2257
      %v2346 = vunpack.c.h.b16 %v2257
      %v2347 = vunpack.c.l.b16 %v2258
      %v2348 = vunpack.c.h.b16 %v2258
      %v2349 = vunpack.c.l.b16 %v2259
      %v2350 = vunpack.c.h.b16 %v2259
      %v2351 = vunpack.c.l.b16 %v2260
      %v2352 = vunpack.c.h.b16 %v2260
      %v2353 = vunpack.c.l.b16 %v2261
      %v2354 = vunpack.c.h.b16 %v2261
      %v2355 = vunpack.c.l.b16 %v2262
      %v2356 = vunpack.c.h.b16 %v2262
      %v2357 = vunpack.c.l.b16 %v2263
      %v2358 = vunpack.c.h.b16 %v2263
      %v2359 = vunpack.c.l.b16 %v2264
      %v2360 = vunpack.c.h.b16 %v2264
      %v2361 = vpack.c.b16 %v2299, %v2297
      %v2362 = vpack.c.b16 %v2300, %v2298
      %v2363 = vpack.c.b16 %v2303, %v2301
      %v2364 = vpack.c.b16 %v2304, %v2302
      %v2365 = vpack.c.b16 %v2307, %v2305
      %v2366 = vpack.c.b16 %v2308, %v2306
      %v2367 = vpack.c.b16 %v2311, %v2309
      %v2368 = vpack.c.b16 %v2312, %v2310
      %v2369 = vpack.c.b16 %v2315, %v2313
      %v2370 = vpack.c.b16 %v2316, %v2314
      %v2371 = vpack.c.b16 %v2319, %v2317
      %v2372 = vpack.c.b16 %v2320, %v2318
      %v2373 = vpack.c.b16 %v2323, %v2321
      %v2374 = vpack.c.b16 %v2324, %v2322
      %v2375 = vpack.c.b16 %v2327, %v2325
      %v2376 = vpack.c.b16 %v2328, %v2326
      %v2377 = vpack.c.b16 %v2331, %v2329
      %v2378 = vpack.c.b16 %v2332, %v2330
      %v2379 = vpack.c.b16 %v2335, %v2333
      %v2380 = vpack.c.b16 %v2336, %v2334
      %v2381 = vpack.c.b16 %v2339, %v2337
      %v2382 = vpack.c.b16 %v2340, %v2338
      %v2383 = vpack.c.b16 %v2343, %v2341
      %v2384 = vpack.c.b16 %v2344, %v2342
      %v2385 = vpack.c.b16 %v2347, %v2345
      %v2386 = vpack.c.b16 %v2348, %v2346
      %v2387 = vpack.c.b16 %v2351, %v2349
      %v2388 = vpack.c.b16 %v2352, %v2350
      %v2389 = vpack.c.b16 %v2355, %v2353
      %v2390 = vpack.c.b16 %v2356, %v2354
      %v2391 = vpack.c.b16 %v2359, %v2357
      %v2392 = vpack.c.b16 %v2360, %v2358
      %2425 = vmatprep.subr.bf16.mxu0 %v2362
      %2426 = vmatpush1.bf16.msra.mxu0 %v2361
      %2427 = vmatprep.subr.bf16.mxu0 %v2364
      %2428 = vmatpush1.bf16.msra.mxu0 %v2363
      %2429 = vmatprep.subr.bf16.mxu0 %v2366
      %2430 = vmatpush1.bf16.msra.mxu0 %v2365
      %2431 = vmatprep.subr.bf16.mxu0 %v2368
      %2432 = vmatpush1.bf16.msra.mxu0 %v2367
      %2433 = vmatprep.subr.bf16.mxu0 %v2370
      %2434 = vmatpush1.bf16.msra.mxu0 %v2369
      %2435 = vmatprep.subr.bf16.mxu0 %v2372
      %2436 = vmatpush1.bf16.msra.mxu0 %v2371
      %2437 = vmatprep.subr.bf16.mxu0 %v2374
      %2438 = vmatpush1.bf16.msra.mxu0 %v2373
      %2439 = vmatprep.subr.bf16.mxu0 %v2376
      %2440 = vmatpush1.bf16.msra.mxu0 %v2375
      %2441 = vmatprep.subr.bf16.mxu0 %v2378
      %2442 = vmatpush1.bf16.msra.mxu0 %v2377
      %2443 = vmatprep.subr.bf16.mxu0 %v2380
      %2444 = vmatpush1.bf16.msra.mxu0 %v2379
      %2445 = vmatprep.subr.bf16.mxu0 %v2382
      %2446 = vmatpush1.bf16.msra.mxu0 %v2381
      %2447 = vmatprep.subr.bf16.mxu0 %v2384
      %2448 = vmatpush1.bf16.msra.mxu0 %v2383
      %2449 = vmatprep.subr.bf16.mxu0 %v2386
      %2450 = vmatpush1.bf16.msra.mxu0 %v2385
      %2451 = vmatprep.subr.bf16.mxu0 %v2388
      %2452 = vmatpush1.bf16.msra.mxu0 %v2387
      %2453 = vmatprep.subr.bf16.mxu0 %v2390
      %2454 = vmatpush1.bf16.msra.mxu0 %v2389
      %2455 = vmatprep.subr.bf16.mxu0 %v2392
      %2456 = vmatpush1.bf16.msra.mxu0 %v2391
      %2457 = vmatprep.mubr.bf16.mxu0 %v2229
      %2458 = vmatmul.mubr.bf16.gmra.mrb[0].mxu0 %v2228
      %v2459 = vpop.f32.mrb[0].mxu0
      %v2460 = vadd.f32 0.0, %v2459
      %v2461 = vpop.f32.mrb[0].mxu0
      %v2462 = vadd.f32 0.0, %v2461
      %v2463 = vpop.f32.mrb[0].mxu0
      %v2464 = vadd.f32 0.0, %v2463
      %v2465 = vpop.f32.mrb[0].mxu0
      %v2466 = vadd.f32 0.0, %v2465
      %2467 = vmatprep.mubr.bf16.mxu0 %v2231
      %2468 = vmatmul.mubr.bf16.gmra.mrb[0].mxu0 %v2230
      %v2469 = vpop.f32.mrb[0].mxu0
      %v2470 = vadd.f32 0.0, %v2469
      %v2471 = vpop.f32.mrb[0].mxu0
      %v2472 = vadd.f32 0.0, %v2471
      %v2473 = vpop.f32.mrb[0].mxu0
      %v2474 = vadd.f32 0.0, %v2473
      %v2475 = vpop.f32.mrb[0].mxu0
      %v2476 = vadd.f32 0.0, %v2475
      %2477 = vdwg.mxu0
      %v2478 = vadd.f32 %v2175, %v2460
      %v2479 = vadd.f32 %v2176, %v2462
      %v2480 = vadd.f32 %v2177, %v2464
      %v2481 = vadd.f32 %v2178, %v2466
      %v2482 = vadd.f32 %v2179, %v2470
      %v2483 = vadd.f32 %v2180, %v2472
      %v2484 = vadd.f32 %v2181, %v2474
      %v2485 = vadd.f32 %v2182, %v2476
      %v2486 = vld [vmem:[#allocation2] sm:$0xc0]
      %v2487 = vld [vmem:[#allocation2 + $0x8] sm:$0xc0]
      %v2488 = vld [vmem:[#allocation2 + $0x20] sm:$0x3f]
      %v2489 = vld [vmem:[#allocation2 + $0x28] sm:$0x3f]
      %v2490 = vld [vmem:[#allocation2 + $0x30] sm:$0xc0]
      %v2491 = vld [vmem:[#allocation2 + $0x38] sm:$0xc0]
      %v2492 = vld [vmem:[#allocation2 + $0x50] sm:$0x3f]
      %v2493 = vld [vmem:[#allocation2 + $0x58] sm:$0x3f]
      %vm2502 = vcmask 1041408
      %v2503 = vrot.slane %v2486, 6
      %v2504 = vrot.slane %v761, 6
      %v2505 = vsel %vm2502, %v2503, %v2504
      %v2506 = vrot.slane %v2487, 6
      %v2507 = vrot.slane %v762, 6
      %v2508 = vsel %vm2502, %v2506, %v2507
      %v2509 = vrot.slane %v2488, 6
      %v2510 = vsel %vm2502, %v2504, %v2509
      %v2511 = vrot.slane %v2489, 6
      %v2512 = vsel %vm2502, %v2507, %v2511
      %v2513 = vrot.slane %v2490, 6
      %v2514 = vrot.slane %v767, 6
      %v2515 = vsel %vm2502, %v2513, %v2514
      %v2516 = vrot.slane %v2491, 6
      %v2517 = vrot.slane %v768, 6
      %v2518 = vsel %vm2502, %v2516, %v2517
      %v2519 = vrot.slane %v2492, 6
      %v2520 = vsel %vm2502, %v2514, %v2519
      %v2521 = vrot.slane %v2493, 6
      %v2522 = vsel %vm2502, %v2517, %v2521
      %v2531 = vpack.c.bf16 %v2510, %v2505
      %v2532 = vpack.c.bf16 %v2512, %v2508
      %v2533 = vpack.c.bf16 %v2520, %v2515
      %v2534 = vpack.c.bf16 %v2522, %v2518
      %s2535 = scalar_lea.vmem %s365, 1536
      %v2536 = vld [vmem:[%s2535] sm:$0xff]
      %v2537 = vld [vmem:[%s2535 + $0x8] sm:$0xff]
      %v2538 = vld [vmem:[%s2535 + $0x10] sm:$0xff]
      %v2539 = vld [vmem:[%s2535 + $0x18] sm:$0xff]
      %v2540 = vld [vmem:[%s2535 + $0x20] sm:$0xff]
      %v2541 = vld [vmem:[%s2535 + $0x28] sm:$0xff]
      %v2542 = vld [vmem:[%s2535 + $0x30] sm:$0xff]
      %v2543 = vld [vmem:[%s2535 + $0x38] sm:$0xff]
      %v2544 = vld [vmem:[%s2535 + $0x40] sm:$0xff]
      %v2545 = vld [vmem:[%s2535 + $0x48] sm:$0xff]
      %v2546 = vld [vmem:[%s2535 + $0x50] sm:$0xff]
      %v2547 = vld [vmem:[%s2535 + $0x58] sm:$0xff]
      %v2548 = vld [vmem:[%s2535 + $0x60] sm:$0xff]
      %v2549 = vld [vmem:[%s2535 + $0x68] sm:$0xff]
      %v2550 = vld [vmem:[%s2535 + $0x70] sm:$0xff]
      %v2551 = vld [vmem:[%s2535 + $0x78] sm:$0xff]
      %v2552 = vld [vmem:[%s2535 + $0x80] sm:$0xff]
      %v2553 = vld [vmem:[%s2535 + $0x88] sm:$0xff]
      %v2554 = vld [vmem:[%s2535 + $0x90] sm:$0xff]
      %v2555 = vld [vmem:[%s2535 + $0x98] sm:$0xff]
      %v2556 = vld [vmem:[%s2535 + $0xa0] sm:$0xff]
      %v2557 = vld [vmem:[%s2535 + $0xa8] sm:$0xff]
      %v2558 = vld [vmem:[%s2535 + $0xb0] sm:$0xff]
      %v2559 = vld [vmem:[%s2535 + $0xb8] sm:$0xff]
      %v2560 = vld [vmem:[%s2535 + $0xc0] sm:$0xff]
      %v2561 = vld [vmem:[%s2535 + $0xc8] sm:$0xff]
      %v2562 = vld [vmem:[%s2535 + $0xd0] sm:$0xff]
      %v2563 = vld [vmem:[%s2535 + $0xd8] sm:$0xff]
      %v2564 = vld [vmem:[%s2535 + $0xe0] sm:$0xff]
      %v2565 = vld [vmem:[%s2535 + $0xe8] sm:$0xff]
      %v2566 = vld [vmem:[%s2535 + $0xf0] sm:$0xff]
      %v2567 = vld [vmem:[%s2535 + $0xf8] sm:$0xff]
      %v2600 = vunpack.c.l.b16 %v2536
      %v2601 = vunpack.c.h.b16 %v2536
      %v2602 = vunpack.c.l.b16 %v2537
      %v2603 = vunpack.c.h.b16 %v2537
      %v2604 = vunpack.c.l.b16 %v2538
      %v2605 = vunpack.c.h.b16 %v2538
      %v2606 = vunpack.c.l.b16 %v2539
      %v2607 = vunpack.c.h.b16 %v2539
      %v2608 = vunpack.c.l.b16 %v2540
      %v2609 = vunpack.c.h.b16 %v2540
      %v2610 = vunpack.c.l.b16 %v2541
      %v2611 = vunpack.c.h.b16 %v2541
      %v2612 = vunpack.c.l.b16 %v2542
      %v2613 = vunpack.c.h.b16 %v2542
      %v2614 = vunpack.c.l.b16 %v2543
      %v2615 = vunpack.c.h.b16 %v2543
      %v2616 = vunpack.c.l.b16 %v2544
      %v2617 = vunpack.c.h.b16 %v2544
      %v2618 = vunpack.c.l.b16 %v2545
      %v2619 = vunpack.c.h.b16 %v2545
      %v2620 = vunpack.c.l.b16 %v2546
      %v2621 = vunpack.c.h.b16 %v2546
      %v2622 = vunpack.c.l.b16 %v2547
      %v2623 = vunpack.c.h.b16 %v2547
      %v2624 = vunpack.c.l.b16 %v2548
      %v2625 = vunpack.c.h.b16 %v2548
      %v2626 = vunpack.c.l.b16 %v2549
      %v2627 = vunpack.c.h.b16 %v2549
      %v2628 = vunpack.c.l.b16 %v2550
      %v2629 = vunpack.c.h.b16 %v2550
      %v2630 = vunpack.c.l.b16 %v2551
      %v2631 = vunpack.c.h.b16 %v2551
      %v2632 = vunpack.c.l.b16 %v2552
      %v2633 = vunpack.c.h.b16 %v2552
      %v2634 = vunpack.c.l.b16 %v2553
      %v2635 = vunpack.c.h.b16 %v2553
      %v2636 = vunpack.c.l.b16 %v2554
      %v2637 = vunpack.c.h.b16 %v2554
      %v2638 = vunpack.c.l.b16 %v2555
      %v2639 = vunpack.c.h.b16 %v2555
      %v2640 = vunpack.c.l.b16 %v2556
      %v2641 = vunpack.c.h.b16 %v2556
      %v2642 = vunpack.c.l.b16 %v2557
      %v2643 = vunpack.c.h.b16 %v2557
      %v2644 = vunpack.c.l.b16 %v2558
      %v2645 = vunpack.c.h.b16 %v2558
      %v2646 = vunpack.c.l.b16 %v2559
      %v2647 = vunpack.c.h.b16 %v2559
      %v2648 = vunpack.c.l.b16 %v2560
      %v2649 = vunpack.c.h.b16 %v2560
      %v2650 = vunpack.c.l.b16 %v2561
      %v2651 = vunpack.c.h.b16 %v2561
      %v2652 = vunpack.c.l.b16 %v2562
      %v2653 = vunpack.c.h.b16 %v2562
      %v2654 = vunpack.c.l.b16 %v2563
      %v2655 = vunpack.c.h.b16 %v2563
      %v2656 = vunpack.c.l.b16 %v2564
      %v2657 = vunpack.c.h.b16 %v2564
      %v2658 = vunpack.c.l.b16 %v2565
      %v2659 = vunpack.c.h.b16 %v2565
      %v2660 = vunpack.c.l.b16 %v2566
      %v2661 = vunpack.c.h.b16 %v2566
      %v2662 = vunpack.c.l.b16 %v2567
      %v2663 = vunpack.c.h.b16 %v2567
      %v2664 = vpack.c.b16 %v2602, %v2600
      %v2665 = vpack.c.b16 %v2603, %v2601
      %v2666 = vpack.c.b16 %v2606, %v2604
      %v2667 = vpack.c.b16 %v2607, %v2605
      %v2668 = vpack.c.b16 %v2610, %v2608
      %v2669 = vpack.c.b16 %v2611, %v2609
      %v2670 = vpack.c.b16 %v2614, %v2612
      %v2671 = vpack.c.b16 %v2615, %v2613
      %v2672 = vpack.c.b16 %v2618, %v2616
      %v2673 = vpack.c.b16 %v2619, %v2617
      %v2674 = vpack.c.b16 %v2622, %v2620
      %v2675 = vpack.c.b16 %v2623, %v2621
      %v2676 = vpack.c.b16 %v2626, %v2624
      %v2677 = vpack.c.b16 %v2627, %v2625
      %v2678 = vpack.c.b16 %v2630, %v2628
      %v2679 = vpack.c.b16 %v2631, %v2629
      %v2680 = vpack.c.b16 %v2634, %v2632
      %v2681 = vpack.c.b16 %v2635, %v2633
      %v2682 = vpack.c.b16 %v2638, %v2636
      %v2683 = vpack.c.b16 %v2639, %v2637
      %v2684 = vpack.c.b16 %v2642, %v2640
      %v2685 = vpack.c.b16 %v2643, %v2641
      %v2686 = vpack.c.b16 %v2646, %v2644
      %v2687 = vpack.c.b16 %v2647, %v2645
      %v2688 = vpack.c.b16 %v2650, %v2648
      %v2689 = vpack.c.b16 %v2651, %v2649
      %v2690 = vpack.c.b16 %v2654, %v2652
      %v2691 = vpack.c.b16 %v2655, %v2653
      %v2692 = vpack.c.b16 %v2658, %v2656
      %v2693 = vpack.c.b16 %v2659, %v2657
      %v2694 = vpack.c.b16 %v2662, %v2660
      %v2695 = vpack.c.b16 %v2663, %v2661
      %2728 = vmatprep.subr.bf16.mxu0 %v2665
      %2729 = vmatpush1.bf16.msra.mxu0 %v2664
      %2730 = vmatprep.subr.bf16.mxu0 %v2667
      %2731 = vmatpush1.bf16.msra.mxu0 %v2666
      %2732 = vmatprep.subr.bf16.mxu0 %v2669
      %2733 = vmatpush1.bf16.msra.mxu0 %v2668
      %2734 = vmatprep.subr.bf16.mxu0 %v2671
      %2735 = vmatpush1.bf16.msra.mxu0 %v2670
      %2736 = vmatprep.subr.bf16.mxu0 %v2673
      %2737 = vmatpush1.bf16.msra.mxu0 %v2672
      %2738 = vmatprep.subr.bf16.mxu0 %v2675
      %2739 = vmatpush1.bf16.msra.mxu0 %v2674
      %2740 = vmatprep.subr.bf16.mxu0 %v2677
      %2741 = vmatpush1.bf16.msra.mxu0 %v2676
      %2742 = vmatprep.subr.bf16.mxu0 %v2679
      %2743 = vmatpush1.bf16.msra.mxu0 %v2678
      %2744 = vmatprep.subr.bf16.mxu0 %v2681
      %2745 = vmatpush1.bf16.msra.mxu0 %v2680
      %2746 = vmatprep.subr.bf16.mxu0 %v2683
      %2747 = vmatpush1.bf16.msra.mxu0 %v2682
      %2748 = vmatprep.subr.bf16.mxu0 %v2685
      %2749 = vmatpush1.bf16.msra.mxu0 %v2684
      %2750 = vmatprep.subr.bf16.mxu0 %v2687
      %2751 = vmatpush1.bf16.msra.mxu0 %v2686
      %2752 = vmatprep.subr.bf16.mxu0 %v2689
      %2753 = vmatpush1.bf16.msra.mxu0 %v2688
      %2754 = vmatprep.subr.bf16.mxu0 %v2691
      %2755 = vmatpush1.bf16.msra.mxu0 %v2690
      %2756 = vmatprep.subr.bf16.mxu0 %v2693
      %2757 = vmatpush1.bf16.msra.mxu0 %v2692
      %2758 = vmatprep.subr.bf16.mxu0 %v2695
      %2759 = vmatpush1.bf16.msra.mxu0 %v2694
      %2760 = vmatprep.mubr.bf16.mxu0 %v2532
      %2761 = vmatmul.mubr.bf16.gmra.mrb[0].mxu0 %v2531
      %v2762 = vpop.f32.mrb[0].mxu0
      %v2763 = vadd.f32 0.0, %v2762
      %v2764 = vpop.f32.mrb[0].mxu0
      %v2765 = vadd.f32 0.0, %v2764
      %v2766 = vpop.f32.mrb[0].mxu0
      %v2767 = vadd.f32 0.0, %v2766
      %v2768 = vpop.f32.mrb[0].mxu0
      %v2769 = vadd.f32 0.0, %v2768
      %2770 = vmatprep.mubr.bf16.mxu0 %v2534
      %2771 = vmatmul.mubr.bf16.gmra.mrb[0].mxu0 %v2533
      %v2772 = vpop.f32.mrb[0].mxu0
      %v2773 = vadd.f32 0.0, %v2772
      %v2774 = vpop.f32.mrb[0].mxu0
      %v2775 = vadd.f32 0.0, %v2774
      %v2776 = vpop.f32.mrb[0].mxu0
      %v2777 = vadd.f32 0.0, %v2776
      %v2778 = vpop.f32.mrb[0].mxu0
      %v2779 = vadd.f32 0.0, %v2778
      %2780 = vdwg.mxu0
      %v2781 = vadd.f32 %v2478, %v2763
      %v2782 = vadd.f32 %v2479, %v2765
      %v2783 = vadd.f32 %v2480, %v2767
      %v2784 = vadd.f32 %v2481, %v2769
      %v2785 = vadd.f32 %v2482, %v2773
      %v2786 = vadd.f32 %v2483, %v2775
      %v2787 = vadd.f32 %v2484, %v2777
      %v2788 = vadd.f32 %v2485, %v2779
      %v2789 = vld [vmem:[#allocation2] sm:$0x80]
      %v2790 = vld [vmem:[#allocation2 + $0x8] sm:$0x80]
      %v2791 = vld [vmem:[#allocation2 + $0x20] sm:$0x7f]
      %v2792 = vld [vmem:[#allocation2 + $0x28] sm:$0x7f]
      %v2793 = vld [vmem:[#allocation2 + $0x30] sm:$0x80]
      %v2794 = vld [vmem:[#allocation2 + $0x38] sm:$0x80]
      %v2795 = vld [vmem:[#allocation2 + $0x50] sm:$0x7f]
      %v2796 = vld [vmem:[#allocation2 + $0x58] sm:$0x7f]
      %vm2805 = vcmask 1040384
      %v2806 = vrot.slane %v2789, 7
      %v2807 = vrot.slane %v761, 7
      %v2808 = vsel %vm2805, %v2806, %v2807
      %v2809 = vrot.slane %v2790, 7
      %v2810 = vrot.slane %v762, 7
      %v2811 = vsel %vm2805, %v2809, %v2810
      %v2812 = vrot.slane %v2791, 7
      %v2813 = vsel %vm2805, %v2807, %v2812
      %v2814 = vrot.slane %v2792, 7
      %v2815 = vsel %vm2805, %v2810, %v2814
      %v2816 = vrot.slane %v2793, 7
      %v2817 = vrot.slane %v767, 7
      %v2818 = vsel %vm2805, %v2816, %v2817
      %v2819 = vrot.slane %v2794, 7
      %v2820 = vrot.slane %v768, 7
      %v2821 = vsel %vm2805, %v2819, %v2820
      %v2822 = vrot.slane %v2795, 7
      %v2823 = vsel %vm2805, %v2817, %v2822
      %v2824 = vrot.slane %v2796, 7
      %v2825 = vsel %vm2805, %v2820, %v2824
      %v2834 = vpack.c.bf16 %v2813, %v2808
      %v2835 = vpack.c.bf16 %v2815, %v2811
      %v2836 = vpack.c.bf16 %v2823, %v2818
      %v2837 = vpack.c.bf16 %v2825, %v2821
      %s2838 = scalar_lea.vmem %s365, 1792
      %v2839 = vld [vmem:[%s2838] sm:$0xff]
      %v2840 = vld [vmem:[%s2838 + $0x8] sm:$0xff]
      %v2841 = vld [vmem:[%s2838 + $0x10] sm:$0xff]
      %v2842 = vld [vmem:[%s2838 + $0x18] sm:$0xff]
      %v2843 = vld [vmem:[%s2838 + $0x20] sm:$0xff]
      %v2844 = vld [vmem:[%s2838 + $0x28] sm:$0xff]
      %v2845 = vld [vmem:[%s2838 + $0x30] sm:$0xff]
      %v2846 = vld [vmem:[%s2838 + $0x38] sm:$0xff]
      %v2847 = vld [vmem:[%s2838 + $0x40] sm:$0xff]
      %v2848 = vld [vmem:[%s2838 + $0x48] sm:$0xff]
      %v2849 = vld [vmem:[%s2838 + $0x50] sm:$0xff]
      %v2850 = vld [vmem:[%s2838 + $0x58] sm:$0xff]
      %v2851 = vld [vmem:[%s2838 + $0x60] sm:$0xff]
      %v2852 = vld [vmem:[%s2838 + $0x68] sm:$0xff]
      %v2853 = vld [vmem:[%s2838 + $0x70] sm:$0xff]
      %v2854 = vld [vmem:[%s2838 + $0x78] sm:$0xff]
      %v2855 = vld [vmem:[%s2838 + $0x80] sm:$0xff]
      %v2856 = vld [vmem:[%s2838 + $0x88] sm:$0xff]
      %v2857 = vld [vmem:[%s2838 + $0x90] sm:$0xff]
      %v2858 = vld [vmem:[%s2838 + $0x98] sm:$0xff]
      %v2859 = vld [vmem:[%s2838 + $0xa0] sm:$0xff]
      %v2860 = vld [vmem:[%s2838 + $0xa8] sm:$0xff]
      %v2861 = vld [vmem:[%s2838 + $0xb0] sm:$0xff]
      %v2862 = vld [vmem:[%s2838 + $0xb8] sm:$0xff]
      %v2863 = vld [vmem:[%s2838 + $0xc0] sm:$0xff]
      %v2864 = vld [vmem:[%s2838 + $0xc8] sm:$0xff]
      %v2865 = vld [vmem:[%s2838 + $0xd0] sm:$0xff]
      %v2866 = vld [vmem:[%s2838 + $0xd8] sm:$0xff]
      %v2867 = vld [vmem:[%s2838 + $0xe0] sm:$0xff]
      %v2868 = vld [vmem:[%s2838 + $0xe8] sm:$0xff]
      %v2869 = vld [vmem:[%s2838 + $0xf0] sm:$0xff]
      %v2870 = vld [vmem:[%s2838 + $0xf8] sm:$0xff]
      %v2903 = vunpack.c.l.b16 %v2839
      %v2904 = vunpack.c.h.b16 %v2839
      %v2905 = vunpack.c.l.b16 %v2840
      %v2906 = vunpack.c.h.b16 %v2840
      %v2907 = vunpack.c.l.b16 %v2841
      %v2908 = vunpack.c.h.b16 %v2841
      %v2909 = vunpack.c.l.b16 %v2842
      %v2910 = vunpack.c.h.b16 %v2842
      %v2911 = vunpack.c.l.b16 %v2843
      %v2912 = vunpack.c.h.b16 %v2843
      %v2913 = vunpack.c.l.b16 %v2844
      %v2914 = vunpack.c.h.b16 %v2844
      %v2915 = vunpack.c.l.b16 %v2845
      %v2916 = vunpack.c.h.b16 %v2845
      %v2917 = vunpack.c.l.b16 %v2846
      %v2918 = vunpack.c.h.b16 %v2846
      %v2919 = vunpack.c.l.b16 %v2847
      %v2920 = vunpack.c.h.b16 %v2847
      %v2921 = vunpack.c.l.b16 %v2848
      %v2922 = vunpack.c.h.b16 %v2848
      %v2923 = vunpack.c.l.b16 %v2849
      %v2924 = vunpack.c.h.b16 %v2849
      %v2925 = vunpack.c.l.b16 %v2850
      %v2926 = vunpack.c.h.b16 %v2850
      %v2927 = vunpack.c.l.b16 %v2851
      %v2928 = vunpack.c.h.b16 %v2851
      %v2929 = vunpack.c.l.b16 %v2852
      %v2930 = vunpack.c.h.b16 %v2852
      %v2931 = vunpack.c.l.b16 %v2853
      %v2932 = vunpack.c.h.b16 %v2853
      %v2933 = vunpack.c.l.b16 %v2854
      %v2934 = vunpack.c.h.b16 %v2854
      %v2935 = vunpack.c.l.b16 %v2855
      %v2936 = vunpack.c.h.b16 %v2855
      %v2937 = vunpack.c.l.b16 %v2856
      %v2938 = vunpack.c.h.b16 %v2856
      %v2939 = vunpack.c.l.b16 %v2857
      %v2940 = vunpack.c.h.b16 %v2857
      %v2941 = vunpack.c.l.b16 %v2858
      %v2942 = vunpack.c.h.b16 %v2858
      %v2943 = vunpack.c.l.b16 %v2859
      %v2944 = vunpack.c.h.b16 %v2859
      %v2945 = vunpack.c.l.b16 %v2860
      %v2946 = vunpack.c.h.b16 %v2860
      %v2947 = vunpack.c.l.b16 %v2861
      %v2948 = vunpack.c.h.b16 %v2861
      %v2949 = vunpack.c.l.b16 %v2862
      %v2950 = vunpack.c.h.b16 %v2862
      %v2951 = vunpack.c.l.b16 %v2863
      %v2952 = vunpack.c.h.b16 %v2863
      %v2953 = vunpack.c.l.b16 %v2864
      %v2954 = vunpack.c.h.b16 %v2864
      %v2955 = vunpack.c.l.b16 %v2865
      %v2956 = vunpack.c.h.b16 %v2865
      %v2957 = vunpack.c.l.b16 %v2866
      %v2958 = vunpack.c.h.b16 %v2866
      %v2959 = vunpack.c.l.b16 %v2867
      %v2960 = vunpack.c.h.b16 %v2867
      %v2961 = vunpack.c.l.b16 %v2868
      %v2962 = vunpack.c.h.b16 %v2868
      %v2963 = vunpack.c.l.b16 %v2869
      %v2964 = vunpack.c.h.b16 %v2869
      %v2965 = vunpack.c.l.b16 %v2870
      %v2966 = vunpack.c.h.b16 %v2870
      %v2967 = vpack.c.b16 %v2905, %v2903
      %v2968 = vpack.c.b16 %v2906, %v2904
      %v2969 = vpack.c.b16 %v2909, %v2907
      %v2970 = vpack.c.b16 %v2910, %v2908
      %v2971 = vpack.c.b16 %v2913, %v2911
      %v2972 = vpack.c.b16 %v2914, %v2912
      %v2973 = vpack.c.b16 %v2917, %v2915
      %v2974 = vpack.c.b16 %v2918, %v2916
      %v2975 = vpack.c.b16 %v2921, %v2919
      %v2976 = vpack.c.b16 %v2922, %v2920
      %v2977 = vpack.c.b16 %v2925, %v2923
      %v2978 = vpack.c.b16 %v2926, %v2924
      %v2979 = vpack.c.b16 %v2929, %v2927
      %v2980 = vpack.c.b16 %v2930, %v2928
      %v2981 = vpack.c.b16 %v2933, %v2931
      %v2982 = vpack.c.b16 %v2934, %v2932
      %v2983 = vpack.c.b16 %v2937, %v2935
      %v2984 = vpack.c.b16 %v2938, %v2936
      %v2985 = vpack.c.b16 %v2941, %v2939
      %v2986 = vpack.c.b16 %v2942, %v2940
      %v2987 = vpack.c.b16 %v2945, %v2943
      %v2988 = vpack.c.b16 %v2946, %v2944
      %v2989 = vpack.c.b16 %v2949, %v2947
      %v2990 = vpack.c.b16 %v2950, %v2948
      %v2991 = vpack.c.b16 %v2953, %v2951
      %v2992 = vpack.c.b16 %v2954, %v2952
      %v2993 = vpack.c.b16 %v2957, %v2955
      %v2994 = vpack.c.b16 %v2958, %v2956
      %v2995 = vpack.c.b16 %v2961, %v2959
      %v2996 = vpack.c.b16 %v2962, %v2960
      %v2997 = vpack.c.b16 %v2965, %v2963
      %v2998 = vpack.c.b16 %v2966, %v2964
      %3031 = vmatprep.subr.bf16.mxu0 %v2968
      %3032 = vmatpush1.bf16.msra.mxu0 %v2967
      %3033 = vmatprep.subr.bf16.mxu0 %v2970
      %3034 = vmatpush1.bf16.msra.mxu0 %v2969
      %3035 = vmatprep.subr.bf16.mxu0 %v2972
      %3036 = vmatpush1.bf16.msra.mxu0 %v2971
      %3037 = vmatprep.subr.bf16.mxu0 %v2974
      %3038 = vmatpush1.bf16.msra.mxu0 %v2973
      %3039 = vmatprep.subr.bf16.mxu0 %v2976
      %3040 = vmatpush1.bf16.msra.mxu0 %v2975
      %3041 = vmatprep.subr.bf16.mxu0 %v2978
      %3042 = vmatpush1.bf16.msra.mxu0 %v2977
      %3043 = vmatprep.subr.bf16.mxu0 %v2980
      %3044 = vmatpush1.bf16.msra.mxu0 %v2979
      %3045 = vmatprep.subr.bf16.mxu0 %v2982
      %3046 = vmatpush1.bf16.msra.mxu0 %v2981
      %3047 = vmatprep.subr.bf16.mxu0 %v2984
      %3048 = vmatpush1.bf16.msra.mxu0 %v2983
      %3049 = vmatprep.subr.bf16.mxu0 %v2986
      %3050 = vmatpush1.bf16.msra.mxu0 %v2985
      %3051 = vmatprep.subr.bf16.mxu0 %v2988
      %3052 = vmatpush1.bf16.msra.mxu0 %v2987
      %3053 = vmatprep.subr.bf16.mxu0 %v2990
      %3054 = vmatpush1.bf16.msra.mxu0 %v2989
      %3055 = vmatprep.subr.bf16.mxu0 %v2992
      %3056 = vmatpush1.bf16.msra.mxu0 %v2991
      %3057 = vmatprep.subr.bf16.mxu0 %v2994
      %3058 = vmatpush1.bf16.msra.mxu0 %v2993
      %3059 = vmatprep.subr.bf16.mxu0 %v2996
      %3060 = vmatpush1.bf16.msra.mxu0 %v2995
      %3061 = vmatprep.subr.bf16.mxu0 %v2998
      %3062 = vmatpush1.bf16.msra.mxu0 %v2997
      %3063 = vmatprep.mubr.bf16.mxu0 %v2835
      %3064 = vmatmul.mubr.bf16.gmra.mrb[0].mxu0 %v2834
      %v3065 = vpop.f32.mrb[0].mxu0
      %v3066 = vadd.f32 0.0, %v3065
      %v3067 = vpop.f32.mrb[0].mxu0
      %v3068 = vadd.f32 0.0, %v3067
      %v3069 = vpop.f32.mrb[0].mxu0
      %v3070 = vadd.f32 0.0, %v3069
      %v3071 = vpop.f32.mrb[0].mxu0
      %v3072 = vadd.f32 0.0, %v3071
      %3073 = vmatprep.mubr.bf16.mxu0 %v2837
      %3074 = vmatmul.mubr.bf16.gmra.mrb[0].mxu0 %v2836
      %v3075 = vpop.f32.mrb[0].mxu0
      %v3076 = vadd.f32 0.0, %v3075
      %v3077 = vpop.f32.mrb[0].mxu0
      %v3078 = vadd.f32 0.0, %v3077
      %v3079 = vpop.f32.mrb[0].mxu0
      %v3080 = vadd.f32 0.0, %v3079
      %v3081 = vpop.f32.mrb[0].mxu0
      %v3082 = vadd.f32 0.0, %v3081
      %3083 = vdwg.mxu0
      %v3084 = vadd.f32 %v2781, %v3066
      %v3085 = vadd.f32 %v2782, %v3068
      %v3086 = vadd.f32 %v2783, %v3070
      %v3087 = vadd.f32 %v2784, %v3072
      %v3088 = vadd.f32 %v2785, %v3076
      %v3089 = vadd.f32 %v2786, %v3078
      %v3090 = vadd.f32 %v2787, %v3080
      %v3091 = vadd.f32 %v2788, %v3082
      %v3092 = vld [vmem:[#allocation2 + $0x20] sm:$0xff]
      %v3093 = vld [vmem:[#allocation2 + $0x28] sm:$0xff]
      %v3094 = vld [vmem:[#allocation2 + $0x50] sm:$0xff]
      %v3095 = vld [vmem:[#allocation2 + $0x58] sm:$0xff]
      %v3096 = vpack.c.bf16 %v3092, %v761
      %v3097 = vpack.c.bf16 %v3093, %v762
      %v3098 = vpack.c.bf16 %v3094, %v767
      %v3099 = vpack.c.bf16 %v3095, %v768
      %s3100 = scalar_lea.vmem %s365, 2048
      %v3101 = vld [vmem:[%s3100] sm:$0xff]
      %v3102 = vld [vmem:[%s3100 + $0x8] sm:$0xff]
      %v3103 = vld [vmem:[%s3100 + $0x10] sm:$0xff]
      %v3104 = vld [vmem:[%s3100 + $0x18] sm:$0xff]
      %v3105 = vld [vmem:[%s3100 + $0x20] sm:$0xff]
      %v3106 = vld [vmem:[%s3100 + $0x28] sm:$0xff]
      %v3107 = vld [vmem:[%s3100 + $0x30] sm:$0xff]
      %v3108 = vld [vmem:[%s3100 + $0x38] sm:$0xff]
      %v3109 = vld [vmem:[%s3100 + $0x40] sm:$0xff]
      %v3110 = vld [vmem:[%s3100 + $0x48] sm:$0xff]
      %v3111 = vld [vmem:[%s3100 + $0x50] sm:$0xff]
      %v3112 = vld [vmem:[%s3100 + $0x58] sm:$0xff]
      %v3113 = vld [vmem:[%s3100 + $0x60] sm:$0xff]
      %v3114 = vld [vmem:[%s3100 + $0x68] sm:$0xff]
      %v3115 = vld [vmem:[%s3100 + $0x70] sm:$0xff]
      %v3116 = vld [vmem:[%s3100 + $0x78] sm:$0xff]
      %v3117 = vld [vmem:[%s3100 + $0x80] sm:$0xff]
      %v3118 = vld [vmem:[%s3100 + $0x88] sm:$0xff]
      %v3119 = vld [vmem:[%s3100 + $0x90] sm:$0xff]
      %v3120 = vld [vmem:[%s3100 + $0x98] sm:$0xff]
      %v3121 = vld [vmem:[%s3100 + $0xa0] sm:$0xff]
      %v3122 = vld [vmem:[%s3100 + $0xa8] sm:$0xff]
      %v3123 = vld [vmem:[%s3100 + $0xb0] sm:$0xff]
      %v3124 = vld [vmem:[%s3100 + $0xb8] sm:$0xff]
      %v3125 = vld [vmem:[%s3100 + $0xc0] sm:$0xff]
      %v3126 = vld [vmem:[%s3100 + $0xc8] sm:$0xff]
      %v3127 = vld [vmem:[%s3100 + $0xd0] sm:$0xff]
      %v3128 = vld [vmem:[%s3100 + $0xd8] sm:$0xff]
      %v3129 = vld [vmem:[%s3100 + $0xe0] sm:$0xff]
      %v3130 = vld [vmem:[%s3100 + $0xe8] sm:$0xff]
      %v3131 = vld [vmem:[%s3100 + $0xf0] sm:$0xff]
      %v3132 = vld [vmem:[%s3100 + $0xf8] sm:$0xff]
      %v3165 = vunpack.c.l.b16 %v3101
      %v3166 = vunpack.c.h.b16 %v3101
      %v3167 = vunpack.c.l.b16 %v3102
      %v3168 = vunpack.c.h.b16 %v3102
      %v3169 = vunpack.c.l.b16 %v3103
      %v3170 = vunpack.c.h.b16 %v3103
      %v3171 = vunpack.c.l.b16 %v3104
      %v3172 = vunpack.c.h.b16 %v3104
      %v3173 = vunpack.c.l.b16 %v3105
      %v3174 = vunpack.c.h.b16 %v3105
      %v3175 = vunpack.c.l.b16 %v3106
      %v3176 = vunpack.c.h.b16 %v3106
      %v3177 = vunpack.c.l.b16 %v3107
      %v3178 = vunpack.c.h.b16 %v3107
      %v3179 = vunpack.c.l.b16 %v3108
      %v3180 = vunpack.c.h.b16 %v3108
      %v3181 = vunpack.c.l.b16 %v3109
      %v3182 = vunpack.c.h.b16 %v3109
      %v3183 = vunpack.c.l.b16 %v3110
      %v3184 = vunpack.c.h.b16 %v3110
      %v3185 = vunpack.c.l.b16 %v3111
      %v3186 = vunpack.c.h.b16 %v3111
      %v3187 = vunpack.c.l.b16 %v3112
      %v3188 = vunpack.c.h.b16 %v3112
      %v3189 = vunpack.c.l.b16 %v3113
      %v3190 = vunpack.c.h.b16 %v3113
      %v3191 = vunpack.c.l.b16 %v3114
      %v3192 = vunpack.c.h.b16 %v3114
      %v3193 = vunpack.c.l.b16 %v3115
      %v3194 = vunpack.c.h.b16 %v3115
      %v3195 = vunpack.c.l.b16 %v3116
      %v3196 = vunpack.c.h.b16 %v3116
      %v3197 = vunpack.c.l.b16 %v3117
      %v3198 = vunpack.c.h.b16 %v3117
      %v3199 = vunpack.c.l.b16 %v3118
      %v3200 = vunpack.c.h.b16 %v3118
      %v3201 = vunpack.c.l.b16 %v3119
      %v3202 = vunpack.c.h.b16 %v3119
      %v3203 = vunpack.c.l.b16 %v3120
      %v3204 = vunpack.c.h.b16 %v3120
      %v3205 = vunpack.c.l.b16 %v3121
      %v3206 = vunpack.c.h.b16 %v3121
      %v3207 = vunpack.c.l.b16 %v3122
      %v3208 = vunpack.c.h.b16 %v3122
      %v3209 = vunpack.c.l.b16 %v3123
      %v3210 = vunpack.c.h.b16 %v3123
      %v3211 = vunpack.c.l.b16 %v3124
      %v3212 = vunpack.c.h.b16 %v3124
      %v3213 = vunpack.c.l.b16 %v3125
      %v3214 = vunpack.c.h.b16 %v3125
      %v3215 = vunpack.c.l.b16 %v3126
      %v3216 = vunpack.c.h.b16 %v3126
      %v3217 = vunpack.c.l.b16 %v3127
      %v3218 = vunpack.c.h.b16 %v3127
      %v3219 = vunpack.c.l.b16 %v3128
      %v3220 = vunpack.c.h.b16 %v3128
      %v3221 = vunpack.c.l.b16 %v3129
      %v3222 = vunpack.c.h.b16 %v3129
      %v3223 = vunpack.c.l.b16 %v3130
      %v3224 = vunpack.c.h.b16 %v3130
      %v3225 = vunpack.c.l.b16 %v3131
      %v3226 = vunpack.c.h.b16 %v3131
      %v3227 = vunpack.c.l.b16 %v3132
      %v3228 = vunpack.c.h.b16 %v3132
      %v3229 = vpack.c.b16 %v3167, %v3165
      %v3230 = vpack.c.b16 %v3168, %v3166
      %v3231 = vpack.c.b16 %v3171, %v3169
      %v3232 = vpack.c.b16 %v3172, %v3170
      %v3233 = vpack.c.b16 %v3175, %v3173
      %v3234 = vpack.c.b16 %v3176, %v3174
      %v3235 = vpack.c.b16 %v3179, %v3177
      %v3236 = vpack.c.b16 %v3180, %v3178
      %v3237 = vpack.c.b16 %v3183, %v3181
      %v3238 = vpack.c.b16 %v3184, %v3182
      %v3239 = vpack.c.b16 %v3187, %v3185
      %v3240 = vpack.c.b16 %v3188, %v3186
      %v3241 = vpack.c.b16 %v3191, %v3189
      %v3242 = vpack.c.b16 %v3192, %v3190
      %v3243 = vpack.c.b16 %v3195, %v3193
      %v3244 = vpack.c.b16 %v3196, %v3194
      %v3245 = vpack.c.b16 %v3199, %v3197
      %v3246 = vpack.c.b16 %v3200, %v3198
      %v3247 = vpack.c.b16 %v3203, %v3201
      %v3248 = vpack.c.b16 %v3204, %v3202
      %v3249 = vpack.c.b16 %v3207, %v3205
      %v3250 = vpack.c.b16 %v3208, %v3206
      %v3251 = vpack.c.b16 %v3211, %v3209
      %v3252 = vpack.c.b16 %v3212, %v3210
      %v3253 = vpack.c.b16 %v3215, %v3213
      %v3254 = vpack.c.b16 %v3216, %v3214
      %v3255 = vpack.c.b16 %v3219, %v3217
      %v3256 = vpack.c.b16 %v3220, %v3218
      %v3257 = vpack.c.b16 %v3223, %v3221
      %v3258 = vpack.c.b16 %v3224, %v3222
      %v3259 = vpack.c.b16 %v3227, %v3225
      %v3260 = vpack.c.b16 %v3228, %v3226
      %3293 = vmatprep.subr.bf16.mxu0 %v3230
      %3294 = vmatpush1.bf16.msra.mxu0 %v3229
      %3295 = vmatprep.subr.bf16.mxu0 %v3232
      %3296 = vmatpush1.bf16.msra.mxu0 %v3231
      %3297 = vmatprep.subr.bf16.mxu0 %v3234
      %3298 = vmatpush1.bf16.msra.mxu0 %v3233
      %3299 = vmatprep.subr.bf16.mxu0 %v3236
      %3300 = vmatpush1.bf16.msra.mxu0 %v3235
      %3301 = vmatprep.subr.bf16.mxu0 %v3238
      %3302 = vmatpush1.bf16.msra.mxu0 %v3237
      %3303 = vmatprep.subr.bf16.mxu0 %v3240
      %3304 = vmatpush1.bf16.msra.mxu0 %v3239
      %3305 = vmatprep.subr.bf16.mxu0 %v3242
      %3306 = vmatpush1.bf16.msra.mxu0 %v3241
      %3307 = vmatprep.subr.bf16.mxu0 %v3244
      %3308 = vmatpush1.bf16.msra.mxu0 %v3243
      %3309 = vmatprep.subr.bf16.mxu0 %v3246
      %3310 = vmatpush1.bf16.msra.mxu0 %v3245
      %3311 = vmatprep.subr.bf16.mxu0 %v3248
      %3312 = vmatpush1.bf16.msra.mxu0 %v3247
      %3313 = vmatprep.subr.bf16.mxu0 %v3250
      %3314 = vmatpush1.bf16.msra.mxu0 %v3249
      %3315 = vmatprep.subr.bf16.mxu0 %v3252
      %3316 = vmatpush1.bf16.msra.mxu0 %v3251
      %3317 = vmatprep.subr.bf16.mxu0 %v3254
      %3318 = vmatpush1.bf16.msra.mxu0 %v3253
      %3319 = vmatprep.subr.bf16.mxu0 %v3256
      %3320 = vmatpush1.bf16.msra.mxu0 %v3255
      %3321 = vmatprep.subr.bf16.mxu0 %v3258
      %3322 = vmatpush1.bf16.msra.mxu0 %v3257
      %3323 = vmatprep.subr.bf16.mxu0 %v3260
      %3324 = vmatpush1.bf16.msra.mxu0 %v3259
      %3325 = vmatprep.mubr.bf16.mxu0 %v3097
      %3326 = vmatmul.mubr.bf16.gmra.mrb[0].mxu0 %v3096
      %v3327 = vpop.f32.mrb[0].mxu0
      %v3328 = vadd.f32 0.0, %v3327
      %v3329 = vpop.f32.mrb[0].mxu0
      %v3330 = vadd.f32 0.0, %v3329
      %v3331 = vpop.f32.mrb[0].mxu0
      %v3332 = vadd.f32 0.0, %v3331
      %v3333 = vpop.f32.mrb[0].mxu0
      %v3334 = vadd.f32 0.0, %v3333
      %3335 = vmatprep.mubr.bf16.mxu0 %v3099
      %3336 = vmatmul.mubr.bf16.gmra.mrb[0].mxu0 %v3098
      %v3337 = vpop.f32.mrb[0].mxu0
      %v3338 = vadd.f32 0.0, %v3337
      %v3339 = vpop.f32.mrb[0].mxu0
      %v3340 = vadd.f32 0.0, %v3339
      %v3341 = vpop.f32.mrb[0].mxu0
      %v3342 = vadd.f32 0.0, %v3341
      %v3343 = vpop.f32.mrb[0].mxu0
      %v3344 = vadd.f32 0.0, %v3343
      %3345 = vdwg.mxu0
      %v3346 = vadd.f32 %v3084, %v3328
      %v3347 = vadd.f32 %v3085, %v3330
      %v3348 = vadd.f32 %v3086, %v3332
      %v3349 = vadd.f32 %v3087, %v3334
      %v3350 = vadd.f32 %v3088, %v3338
      %v3351 = vadd.f32 %v3089, %v3340
      %v3352 = vadd.f32 %v3090, %v3342
      %v3353 = vadd.f32 %v3091, %v3344
      %v3354 = vld [vmem:[%s369] sm:$0x3]
      %v3356 = vlaneseq
      %v3357 = vshrl.u32 %v3356, 7
      %v3358 = vsub.s32 0, %v3357
      %v3359 = vrot.slane %v3354, %v3358
      %v3360 = vlaneseq
      %v3361 = vshrl.u32 %v3360, 7
      %v3362 = vsub.s32 1, %v3361
      %v3363 = vrot.slane %v3354, %v3362
      %v3366 = vadd.f32 %v3346, %v3359
      %v3367 = vadd.f32 %v3347, %v3363
      %v3368 = vadd.f32 %v3348, %v3359
      %v3369 = vadd.f32 %v3349, %v3363
      %v3370 = vadd.f32 %v3350, %v3359
      %v3371 = vadd.f32 %v3351, %v3363
      %v3372 = vadd.f32 %v3352, %v3359
      %v3373 = vadd.f32 %v3353, %v3363
      %v3374 = vadd.f32 %v3366, %v3368
      %v3375 = vrot.slane %v3374, 4
      %v3376 = vadd.f32 %v3374, %v3375
      %v3377 = vrot.slane %v3376, 2
      %v3378 = vadd.f32 %v3376, %v3377
      %v3379 = vrot.slane %v3378, 1
      %v3380 = vadd.f32 %v3378, %v3379
      %v3381 = vadd.f32 %v3367, %v3369
      %v3382 = vrot.slane %v3381, 4
      %v3383 = vadd.f32 %v3381, %v3382
      %v3384 = vrot.slane %v3383, 2
      %v3385 = vadd.f32 %v3383, %v3384
      %v3386 = vrot.slane %v3385, 1
      %v3387 = vadd.f32 %v3385, %v3386
      %v3388 = vadd.f32 %v3370, %v3372
      %v3389 = vrot.slane %v3388, 4
      %v3390 = vadd.f32 %v3388, %v3389
      %v3391 = vrot.slane %v3390, 2
      %v3392 = vadd.f32 %v3390, %v3391
      %v3393 = vrot.slane %v3392, 1
      %v3394 = vadd.f32 %v3392, %v3393
      %v3395 = vadd.f32 %v3371, %v3373
      %v3396 = vrot.slane %v3395, 4
      %v3397 = vadd.f32 %v3395, %v3396
      %v3398 = vrot.slane %v3397, 2
      %v3399 = vadd.f32 %v3397, %v3398
      %v3400 = vrot.slane %v3399, 1
      %v3401 = vadd.f32 %v3399, %v3400
      %v3402 = vadd.f32 %v3380, 0.0
      %v3403 = vadd.f32 %v3394, 0.0
      %3406 = vrot.lane.b32.xlu0 %v3380, 112
      %v3407 = vpop.permute.xlu0 %3406
      %3408 = vrot.lane.b32.xlu0 %v3394, 112
      %v3409 = vpop.permute.xlu0 %3408
      %v3412 = vadd.f32 %v3402, %v3407
      %v3413 = vadd.f32 %v3403, %v3409
      %3414 = vrot.lane.b32.xlu0 %v3380, 96
      %v3415 = vpop.permute.xlu0 %3414
      %3416 = vrot.lane.b32.xlu0 %v3394, 96
      %v3417 = vpop.permute.xlu0 %3416
      %v3420 = vadd.f32 %v3412, %v3415
      %v3421 = vadd.f32 %v3413, %v3417
      %3422 = vrot.lane.b32.xlu0 %v3380, 80
      %v3423 = vpop.permute.xlu0 %3422
      %3424 = vrot.lane.b32.xlu0 %v3394, 80
      %v3425 = vpop.permute.xlu0 %3424
      %v3428 = vadd.f32 %v3420, %v3423
      %v3429 = vadd.f32 %v3421, %v3425
      %3430 = vrot.lane.b32.xlu0 %v3380, 64
      %v3431 = vpop.permute.xlu0 %3430
      %3432 = vrot.lane.b32.xlu0 %v3394, 64
      %v3433 = vpop.permute.xlu0 %3432
      %v3436 = vadd.f32 %v3428, %v3431
      %v3437 = vadd.f32 %v3429, %v3433
      %3438 = vrot.lane.b32.xlu0 %v3380, 48
      %v3439 = vpop.permute.xlu0 %3438
      %3440 = vrot.lane.b32.xlu0 %v3394, 48
      %v3441 = vpop.permute.xlu0 %3440
      %v3444 = vadd.f32 %v3436, %v3439
      %v3445 = vadd.f32 %v3437, %v3441
      %3446 = vrot.lane.b32.xlu0 %v3380, 32
      %v3447 = vpop.permute.xlu0 %3446
      %3448 = vrot.lane.b32.xlu0 %v3394, 32
      %v3449 = vpop.permute.xlu0 %3448
      %v3452 = vadd.f32 %v3444, %v3447
      %v3453 = vadd.f32 %v3445, %v3449
      %3454 = vrot.lane.b32.xlu0 %v3380, 16
      %v3455 = vpop.permute.xlu0 %3454
      %3456 = vrot.lane.b32.xlu0 %v3394, 16
      %v3457 = vpop.permute.xlu0 %3456
      %v3460 = vadd.f32 %v3452, %v3455
      %v3461 = vadd.f32 %v3453, %v3457
      %v3462 = vadd.f32 %v3460, %v3387
      %v3463 = vadd.f32 %v3461, %v3401
      %3466 = vrot.lane.b32.xlu0 %v3387, 112
      %v3467 = vpop.permute.xlu0 %3466
      %3468 = vrot.lane.b32.xlu0 %v3401, 112
      %v3469 = vpop.permute.xlu0 %3468
      %v3472 = vadd.f32 %v3462, %v3467
      %v3473 = vadd.f32 %v3463, %v3469
      %3474 = vrot.lane.b32.xlu0 %v3387, 96
      %v3475 = vpop.permute.xlu0 %3474
      %3476 = vrot.lane.b32.xlu0 %v3401, 96
      %v3477 = vpop.permute.xlu0 %3476
      %v3480 = vadd.f32 %v3472, %v3475
      %v3481 = vadd.f32 %v3473, %v3477
      %3482 = vrot.lane.b32.xlu0 %v3387, 80
      %v3483 = vpop.permute.xlu0 %3482
      %3484 = vrot.lane.b32.xlu0 %v3401, 80
      %v3485 = vpop.permute.xlu0 %3484
      %v3488 = vadd.f32 %v3480, %v3483
      %v3489 = vadd.f32 %v3481, %v3485
      %3490 = vrot.lane.b32.xlu0 %v3387, 64
      %v3491 = vpop.permute.xlu0 %3490
      %3492 = vrot.lane.b32.xlu0 %v3401, 64
      %v3493 = vpop.permute.xlu0 %3492
      %v3496 = vadd.f32 %v3488, %v3491
      %v3497 = vadd.f32 %v3489, %v3493
      %3498 = vrot.lane.b32.xlu0 %v3387, 48
      %v3499 = vpop.permute.xlu0 %3498
      %3500 = vrot.lane.b32.xlu0 %v3401, 48
      %v3501 = vpop.permute.xlu0 %3500
      %v3504 = vadd.f32 %v3496, %v3499
      %v3505 = vadd.f32 %v3497, %v3501
      %3506 = vrot.lane.b32.xlu0 %v3387, 32
      %v3507 = vpop.permute.xlu0 %3506
      %3508 = vrot.lane.b32.xlu0 %v3401, 32
      %v3509 = vpop.permute.xlu0 %3508
      %v3512 = vadd.f32 %v3504, %v3507
      %v3513 = vadd.f32 %v3505, %v3509
      %3514 = vrot.lane.b32.xlu0 %v3387, 16
      %v3515 = vpop.permute.xlu0 %3514
      %3516 = vrot.lane.b32.xlu0 %v3401, 16
      %v3517 = vpop.permute.xlu0 %3516
      %v3520 = vadd.f32 %v3512, %v3515
      %v3521 = vadd.f32 %v3513, %v3517
      %v3522 = vmul.f32 %v3520, 0.00390625
      %v3523 = vmul.f32 %v3521, 0.00390625
      %v3524 = vld [vmem:[%s372] sm:$0x1]
      %v3526 = vlaneseq
      %v3527 = vshrl.u32 %v3526, 7
      %v3528 = vsub.s32 0, %v3527
      %v3529 = vrot.slane %v3524, %v3528
      %v3531 = vmul.f32 %v3522, %v3529
      %v3532 = vmul.f32 %v3523, %v3529
      %v3535 = vrot.slane %v3532, 7
      %vm3536 = vcmask 1041409
      %v3537 = vsel %vm3536, %v3535, %v3531
      %vm3539 = vcmask 123904
      %v3540 = vsel %vm3539, %v3537, 0.0
      %3541 = vadd.xlane.f32.xlu0 %v3540
      %v3542 = vpop.xlane.xlu0 %3541
      %v3543 = vmax.f32 %v3542, 0.0
      %v3544 = vld [vmem:[%s375] sm:$0x1]
      %v3546 = vlaneseq
      %v3547 = vshrl.u32 %v3546, 7
      %v3548 = vsub.s32 0, %v3547
      %v3549 = vrot.slane %v3544, %v3548
      %v3551 = vmul.f32 %v3543, %v3549
      %v3552 = vadd.f32 %v3551, 0.0
      %v3553 = vxor.u32 %v3552, 2147483648
      %v3554 = vmul.f32 %v3553, 1.442695
      %v3555 = vpow.pop %v3554
      %v3556 = vadd.f32 %v3555, 1.0
      %v3557 = vrcp.pop %v3556
      %v3558 = vmul.f32 1.0, %v3557
      %3560 = vrot.lane.b32.xlu0 %v3558, 16
      %v3561 = vpop.permute.xlu0 %3560
      %3563 = vrot.lane.b32.xlu0 %v3558, 32
      %v3564 = vpop.permute.xlu0 %3563
      %3566 = vrot.lane.b32.xlu0 %v3558, 48
      %v3567 = vpop.permute.xlu0 %3566
      %3569 = vrot.lane.b32.xlu0 %v3558, 64
      %v3570 = vpop.permute.xlu0 %3569
      %3572 = vrot.lane.b32.xlu0 %v3558, 80
      %v3573 = vpop.permute.xlu0 %3572
      %3575 = vrot.lane.b32.xlu0 %v3558, 96
      %v3576 = vpop.permute.xlu0 %3575
      %3578 = vrot.lane.b32.xlu0 %v3558, 112
      %v3579 = vpop.permute.xlu0 %3578
      %vm3581 = vcmask 130048
      %v3582 = vsel %vm3581, %v3558, %v3561
      %vm3583 = vcmask 261120
      %v3584 = vsel %vm3583, %v3582, %v3564
      %vm3585 = vcmask 392192
      %v3586 = vsel %vm3585, %v3584, %v3567
      %vm3587 = vcmask 523264
      %v3588 = vsel %vm3587, %v3586, %v3570
      %vm3589 = vcmask 654336
      %v3590 = vsel %vm3589, %v3588, %v3573
      %vm3591 = vcmask 785408
      %v3592 = vsel %vm3591, %v3590, %v3576
      %vm3593 = vcmask 916480
      %v3594 = vsel %vm3593, %v3592, %v3579
      %v3596 = vcombine.low %v3594, %v3594
      %v3598 = vunpack.c.l.s4 1966171168
      %v3599 = vunpack.c.0.s8 %v3598
      %v3600 = vlaneseq
      %v3601 = vshrl.u32 %v3600, 7
      %v3602 = vsub.s32 %v3599, %v3601
      %v3603 = vrot.slane %v3596, %v3602
      %v3604 = vcombine.high %v3603, %v3603
      %v3606 = vunpack.c.l.s4 1966171168
      %v3607 = vunpack.c.0.s8 %v3606
      %v3608 = vlaneseq
      %v3609 = vshrl.u32 %v3608, 7
      %v3610 = vsub.s32 %v3607, %v3609
      %v3611 = vrot.slane %v3603, %v3610
      %v3613 = vunpack.c.l.s4 1966171168
      %v3614 = vunpack.c.0.s8 %v3613
      %v3615 = vlaneseq
      %v3616 = vshrl.u32 %v3615, 7
      %v3617 = vsub.s32 %v3614, %v3616
      %v3618 = vrot.slane %v3604, %v3617
      %v3619 = vlaneseq
      %v3620 = vshrl.u32 %v3619, 7
      %v3621 = vsub.s32 0, %v3620
      %v3622 = vrot.slane %v3611, %v3621
      %v3623 = vlaneseq
      %v3624 = vshrl.u32 %v3623, 7
      %v3625 = vsub.s32 1, %v3624
      %v3626 = vrot.slane %v3611, %v3625
      %v3627 = vlaneseq
      %v3628 = vshrl.u32 %v3627, 7
      %v3629 = vsub.s32 0, %v3628
      %v3630 = vrot.slane %v3618, %v3629
      %v3631 = vlaneseq
      %v3632 = vshrl.u32 %v3631, 7
      %v3633 = vsub.s32 1, %v3632
      %v3634 = vrot.slane %v3618, %v3633
      %v3639 = vmul.f32 %v3366, %v3622
      %v3640 = vmul.f32 %v3367, %v3626
      %v3641 = vmul.f32 %v3368, %v3622
      %v3642 = vmul.f32 %v3369, %v3626
      %v3643 = vmul.f32 %v3370, %v3630
      %v3644 = vmul.f32 %v3371, %v3634
      %v3645 = vmul.f32 %v3372, %v3630
      %v3646 = vmul.f32 %v3373, %v3634
      %v3647 = vmul.f32 %v644, %v3639
      %v3648 = vmul.f32 %v646, %v3640
      %v3649 = vmul.f32 %v648, %v3641
      %v3650 = vmul.f32 %v650, %v3642
      %v3651 = vmul.f32 %v654, %v3643
      %v3652 = vmul.f32 %v656, %v3644
      %v3653 = vmul.f32 %v658, %v3645
      %v3654 = vmul.f32 %v660, %v3646
      %3655 = vst [vmem:[%s380] sm:$0xff] %v3647
      %3656 = vst [vmem:[%s380 + $0x8] sm:$0xff] %v3648
      %3657 = vst [vmem:[%s380 + $0x10] sm:$0xff] %v3649
      %3658 = vst [vmem:[%s380 + $0x18] sm:$0xff] %v3650
      %3659 = vst [vmem:[%s380 + $0x20] sm:$0xff] %v3651
      %3660 = vst [vmem:[%s380 + $0x28] sm:$0xff] %v3652
      %3661 = vst [vmem:[%s380 + $0x30] sm:$0xff] %v3653
      %3662 = vst [vmem:[%s380 + $0x38] sm:$0xff] %v3654
      %p3663 = scmp.lt.s32.totalorder %s18, 3
      %s3664 = scalar_select %p3663, %s18, 3
      %s3665 = smul.addr %s3664, 8
      %s3666 = smul.addr %s3665, 8
      %s3667 = scalar_lea.vmem %s7, %s3666
      // Predicated region
      $region49: #{psa_block.1} parent=47 // pred_check
        %p3668 = pneg %p218
      $region50: #{psa_block.1} parent=47 // pred_check_branch
        %3670 = sbr.rel (%p3668) target = $region52
      $region51: #{psa_block.1} parent=47 // pred_region
        _
      $region52: #{psa_block.1} parent=47 // pred_fallthru
        _
    $region48: #{psa_block.1} parent=5 // pred_fallthru
      _
    %p3671 = scmp.le.s32.totalorder 2, %s13
    // Predicated region
    $region53: #{psa_block.1} parent=5 // pred_check
      %p3672 = pneg %p3671
    $region54: #{psa_block.1} parent=5 // pred_check_branch
      %3674 = sbr.rel (%p3672) target = $region56
    $region55: #{psa_block.1} parent=5 // pred_region
      %s3675 = ssub.s32 %s13, 2
      // Predicated region
      $region57: #{psa_block.1} parent=55 // pred_check
        %p3676 = pneg %p224
      $region58: #{psa_block.1} parent=55 // pred_check_branch
        %3678 = sbr.rel (%p3676) target = $region60
      $region59: #{psa_block.1} parent=55 // pred_region
        %p3679 = scmp.lt.s32.totalorder %s19, 3
        %s3680 = scalar_select %p3679, %s19, 3
        %s3681 = smul.addr %s3680, 8
        %s3682 = smul.addr %s3681, 8
        %s3683 = scalar_lea.vmem %s7, %s3682
      $region60: #{psa_block.1} parent=55 // pred_fallthru
        _
    $region56: #{psa_block.1} parent=5 // pred_fallthru
      _
  $region6: #{psa_block.1} parent=0 // loop_footer
    %s17 = sadd.s32 1, %s13
  $region7: #{psa_block.1} parent=0 // loop_footer_branch
    %12 = sbr.rel target = $region3
  $region8: #{psa_block.1} parent=0 // loop_exit
    _

</llo_original>
